<compile_context>
chip_gen: v7x
topology: tpu7x:2x2x1
jax: 0.10.0
libtpu: 0.0.40
codegen_flags: <defaults>
</compile_context>

<pallas_src>
import functools

import jax
import jax.numpy as jnp
from jax import lax
from jax.experimental import pallas as pl
from jax.experimental.pallas import tpu as pltpu

EPS = 1e-5


@functools.partial(jax.jit, static_argnames=("kernel_size", "padding"))
def r2plus1d_forward(x, w_s, w_t, g1, b1, g2, b2, *, kernel_size, padding):
    N, CIN, D, H, W = x.shape
    CMID = w_s.shape[0]
    COUT = w_t.shape[0]
    KT, KH, KW = kernel_size
    PT, PH, PW = padding
    HO = H + 2 * PH - (KH - 1)
    WO = W + 2 * PW - (KW - 1)
    DO = D + 2 * PT - (KT - 1)
    HWO = HO * WO
    HP, WP = H + 2 * PH, W + 2 * PW
    ND = N * D
    KS = KH * KW * CIN            # fused spatial contraction (im2col K)
    KTC = KT * CMID               # fused temporal contraction

    # ---------------- glue: layout, spatial zero pad, im2col ----------------
    x_cl = jnp.transpose(x, (0, 2, 3, 4, 1))                    # (N,D,H,W,Cin)
    x_cl = jnp.pad(x_cl, ((0, 0), (0, 0), (PH, PH), (PW, PW), (0, 0)))
    x_cl = x_cl.reshape(ND, HP, WP, CIN)
    cols = []
    for i in range(KH):
        for j in range(KW):
            sl = x_cl[:, i:i + HO, j:j + WO, :]                 # (ND,HO,WO,Cin)
            cols.append(jnp.transpose(sl, (0, 3, 1, 2)).reshape(ND, CIN, HWO))
    # patches[nd, (i*KW+j)*CIN + c, hwo] = xpad[nd, ho+i, wo+j, c]
    patches = jnp.concatenate(cols, axis=1)                     # (ND, KS, HWO)

    # 2-D weight matrices matching the channels-on-sublane layout
    # w_s2[cmid, (i*KW+j)*CIN + c] = w_s[cmid, c, 0, i, j]
    w_s2 = jnp.transpose(w_s[:, :, 0], (0, 2, 3, 1)).reshape(CMID, KS)
    # w_t2[cout, t*CMID + c] = w_t[cout, c, t, 0, 0]
    w_t2 = jnp.transpose(w_t[:, :, :, 0, 0], (0, 2, 1)).reshape(COUT, KTC)

    g1c = g1.reshape(CMID, 1)
    b1c = b1.reshape(CMID, 1)
    g2c = g2.reshape(COUT, 1)
    b2c = b2.reshape(COUT, 1)

    inv_cnt1 = 1.0 / float(ND * HWO)
    inv_cnt2 = 1.0 / float(N * DO * HWO)

    # ------------------------- fused single kernel --------------------------
    def fused_kernel(p_ref, ws_ref, wt_ref, g1_ref, b1_ref, g2_ref, b2_ref,
                     o_ref, y_ref):
        # ---- spatial 1xKHxKW conv: one im2col matmul per frame ----
        ws = ws_ref[...]                                        # (CMID, KS)
        s1 = jnp.zeros((CMID, 1), jnp.float32)
        q1 = jnp.zeros((CMID, 1), jnp.float32)
        for nd in range(ND):                                    # static unroll
            acc = jnp.dot(ws, p_ref[nd],
                          preferred_element_type=jnp.float32)   # (CMID, HWO)
            y_ref[nd] = acc                                     # lane-dense store
            s1 += jnp.sum(acc, axis=1, keepdims=True)
            q1 += jnp.sum(acc * acc, axis=1, keepdims=True)

        # ---- BN1 (training-mode, biased batch stats) + ReLU, in place ----
        mean1 = s1 * inv_cnt1
        var1 = jnp.maximum(q1 * inv_cnt1 - mean1 * mean1, 0.0)
        inv1 = g1_ref[...] * lax.rsqrt(var1 + EPS)              # (CMID, 1)
        shift1 = b1_ref[...] - mean1 * inv1
        y_ref[...] = jnp.maximum(y_ref[...] * inv1[None] + shift1[None], 0.0)

        # ---- temporal KTx1x1 conv: fused taps, valid overlap only ----
        wt = wt_ref[...]                                        # (COUT, KT*CMID)
        s2 = jnp.zeros((COUT, 1), jnp.float32)
        q2 = jnp.zeros((COUT, 1), jnp.float32)
        for n in range(N):                                      # static unroll
            for do in range(DO):
                t_lo = max(0, PT - do)
                t_hi = min(KT, D + PT - do)
                nt = t_hi - t_lo
                if nt <= 0:
                    z_do = jnp.zeros((COUT, HWO), jnp.float32)
                else:
                    lo = n * D + do - PT + t_lo
                    a_mat = y_ref[lo:lo + nt].reshape(nt * CMID, HWO)
                    z_do = jnp.dot(wt[:, t_lo * CMID:t_hi * CMID], a_mat,
                                   preferred_element_type=jnp.float32)
                o_ref[n, do] = z_do                             # lane-dense store
                s2 += jnp.sum(z_do, axis=1, keepdims=True)
                q2 += jnp.sum(z_do * z_do, axis=1, keepdims=True)

        # ---- BN2 (training-mode, biased batch stats) + ReLU, in place ----
        mean2 = s2 * inv_cnt2
        var2 = jnp.maximum(q2 * inv_cnt2 - mean2 * mean2, 0.0)
        inv2 = g2_ref[...] * lax.rsqrt(var2 + EPS)              # (COUT, 1)
        shift2 = b2_ref[...] - mean2 * inv2
        o_ref[...] = jnp.maximum(
            o_ref[...] * inv2[None, None] + shift2[None, None], 0.0)

    out4 = pl.pallas_call(
        fused_kernel,
        out_shape=jax.ShapeDtypeStruct((N, DO, COUT, HWO), jnp.float32),
        grid=(1,),
        in_specs=[
            pl.BlockSpec((ND, KS, HWO), lambda g: (0, 0, 0)),
            pl.BlockSpec((CMID, KS), lambda g: (0, 0)),
            pl.BlockSpec((COUT, KTC), lambda g: (0, 0)),
            pl.BlockSpec((CMID, 1), lambda g: (0, 0)),
            pl.BlockSpec((CMID, 1), lambda g: (0, 0)),
            pl.BlockSpec((COUT, 1), lambda g: (0, 0)),
            pl.BlockSpec((COUT, 1), lambda g: (0, 0)),
        ],
        out_specs=pl.BlockSpec((N, DO, COUT, HWO), lambda g: (0, 0, 0, 0)),
        scratch_shapes=[pltpu.VMEM((ND, CMID, HWO), jnp.float32)],
        compiler_params=pltpu.CompilerParams(
            dimension_semantics=("arbitrary",)),
    )(patches, w_s2, w_t2, g1c, b1c, g2c, b2c)

    # -------- glue: final layout change back to NCDHW (tiny transpose) -------
    out = out4.reshape(N, DO, COUT, HO, WO)
    return jnp.transpose(out, (0, 2, 1, 3, 4))                  # (N,COUT,D,H,W)


def reference_forward(x, w_s, w_t, g1, b1, g2, b2, padding):
    PT, PH, PW = padding
    dn = ("NCDHW", "OIDHW", "NCDHW")
    y = lax.conv_general_dilated(x, w_s, (1, 1, 1),
                                 [(0, 0), (PH, PH), (PW, PW)],
                                 dimension_numbers=dn,
                                 precision=lax.Precision.HIGHEST)
    m = y.mean(axis=(0, 2, 3, 4), keepdims=True)
    v = y.var(axis=(0, 2, 3, 4), keepdims=True)
    y = (y - m) / jnp.sqrt(v + EPS) * g1.reshape(1, -1, 1, 1, 1) + b1.reshape(1, -1, 1, 1, 1)
    y = jnp.maximum(y, 0.0)
    z = lax.conv_general_dilated(y, w_t, (1, 1, 1),
                                 [(PT, PT), (0, 0), (0, 0)],
                                 dimension_numbers=dn,
                                 precision=lax.Precision.HIGHEST)
    m = z.mean(axis=(0, 2, 3, 4), keepdims=True)
    v = z.var(axis=(0, 2, 3, 4), keepdims=True)
    z = (z - m) / jnp.sqrt(v + EPS) * g2.reshape(1, -1, 1, 1, 1) + b2.reshape(1, -1, 1, 1, 1)
    return jnp.maximum(z, 0.0)


if __name__ == "__main__":
    # Small shapes consistent with the module: in=4, out=8, mid=8 (ratio 1.0),
    # kernel=(3,3,3), padding=(1,1,1), stride=1.  x: (N=2, C=4, D=8, H=16, W=16)
    N, CIN, D, H, W = 2, 4, 8, 16, 16
    COUT = 8
    CMID = max(1, int(COUT * 1.0))
    kernel_size = (3, 3, 3)
    padding = (1, 1, 1)
    KT, KH, KW = kernel_size

    key = jax.random.PRNGKey(0)
    k1, k2, k3, k4, k5, k6, k7 = jax.random.split(key, 7)
    w_s = 0.1 * jax.random.normal(k1, (CMID, CIN, 1, KH, KW), jnp.float32)
    w_t = 0.1 * jax.random.normal(k2, (COUT, CMID, KT, 1, 1), jnp.float32)
    g1 = 1.0 + 0.1 * jax.random.normal(k3, (CMID,), jnp.float32)
    b1 = 0.1 * jax.random.normal(k4, (CMID,), jnp.float32)
    g2 = 1.0 + 0.1 * jax.random.normal(k5, (COUT,), jnp.float32)
    b2 = 0.1 * jax.random.normal(k6, (COUT,), jnp.float32)
    x = jax.random.normal(k7, (N, CIN, D, H, W), jnp.float32)

    out = r2plus1d_forward(x, w_s, w_t, g1, b1, g2, b2,
                           kernel_size=kernel_size, padding=padding)
    out = jax.block_until_ready(out)

    ref = jax.block_until_ready(
        reference_forward(x, w_s, w_t, g1, b1, g2, b2, padding))

    assert out.shape == ref.shape == (N, COUT, D, H, W)
    assert jnp.allclose(out, ref, rtol=1e-3, atol=1e-3), (
        float(jnp.max(jnp.abs(out - ref))))
    print("KERNEL_OK")
</pallas_src>

<mosaic_0001>
module attributes {stable_mosaic.version = 11 : i64} {
  func.func @fused_kernel(%arg0: i32, %arg1: memref<16x36x256xf32, #tpu.memory_space<vmem>>, %arg2: memref<8x36xf32, #tpu.memory_space<vmem>>, %arg3: memref<8x24xf32, #tpu.memory_space<vmem>>, %arg4: memref<8x1xf32, #tpu.memory_space<vmem>>, %arg5: memref<8x1xf32, #tpu.memory_space<vmem>>, %arg6: memref<8x1xf32, #tpu.memory_space<vmem>>, %arg7: memref<8x1xf32, #tpu.memory_space<vmem>>, %arg8: memref<2x8x8x256xf32, #tpu.memory_space<vmem>>, %arg9: memref<16x8x256xf32, #tpu.memory_space<vmem>>) attributes {dimension_semantics = [#tpu.dimension_semantics<arbitrary>], iteration_bounds = array<i64: 1>, scalar_prefetch = 0 : i64, scratch_operands = 1 : i64, tpu.core_type = #tpu.core_type<tc>, window_params = [{pipeline_mode = #tpu.pipeline_mode<synchronous>, transform_indices = @transform_0, window_bounds = array<i64: 16, 36, 256>}, {pipeline_mode = #tpu.pipeline_mode<synchronous>, transform_indices = @transform_1, window_bounds = array<i64: 8, 36>}, {pipeline_mode = #tpu.pipeline_mode<synchronous>, transform_indices = @transform_2, window_bounds = array<i64: 8, 24>}, {pipeline_mode = #tpu.pipeline_mode<synchronous>, transform_indices = @transform_3, window_bounds = array<i64: 8, 1>}, {pipeline_mode = #tpu.pipeline_mode<synchronous>, transform_indices = @transform_4, window_bounds = array<i64: 8, 1>}, {pipeline_mode = #tpu.pipeline_mode<synchronous>, transform_indices = @transform_5, window_bounds = array<i64: 8, 1>}, {pipeline_mode = #tpu.pipeline_mode<synchronous>, transform_indices = @transform_6, window_bounds = array<i64: 8, 1>}, {pipeline_mode = #tpu.pipeline_mode<synchronous>, transform_indices = @transform_7, window_bounds = array<i64: 2, 8, 8, 256>}]} {
    %c0 = arith.constant 0 : index
    %c0_0 = arith.constant 0 : index
    %0 = vector.load %arg2[%c0, %c0_0] : memref<8x36xf32, #tpu.memory_space<vmem>>, vector<8x36xf32>
    %cst = arith.constant 0.000000e+00 : f32
    %1 = vector.broadcast %cst : f32 to vector<8x1xf32>
    %cst_1 = arith.constant 0.000000e+00 : f32
    %2 = vector.broadcast %cst_1 : f32 to vector<8x1xf32>
    %c0_2 = arith.constant 0 : index
    %c0_3 = arith.constant 0 : index
    %c0_4 = arith.constant 0 : index
    %3 = vector.load %arg1[%c0_2, %c0_3, %c0_4] : memref<16x36x256xf32, #tpu.memory_space<vmem>>, vector<1x36x256xf32>
    %4 = vector.shape_cast %3 : vector<1x36x256xf32> to vector<36x256xf32>
    %cst_5 = arith.constant dense<0.000000e+00> : vector<8x256xf32>
    %5 = tpu.matmul %0, %4, %cst_5 {dimension_numbers = #tpu.dot_dimension_numbers<[1], [0], [0], [1], [0, 0, 1, 1], [], []>} : vector<8x36xf32>, vector<36x256xf32>, vector<8x256xf32> -> vector<8x256xf32>
    %c0_6 = arith.constant 0 : index
    %c0_7 = arith.constant 0 : index
    %c0_8 = arith.constant 0 : index
    %6 = vector.load %arg9[%c0_6, %c0_7, %c0_8] : memref<16x8x256xf32, #tpu.memory_space<vmem>>, vector<1x8x256xf32>
    %7 = vector.shape_cast %6 : vector<1x8x256xf32> to vector<8x256xf32>
    %8 = vector.shape_cast %5 : vector<8x256xf32> to vector<1x8x256xf32>
    tpu.vector_store %arg9[%c0_6, %c0_7, %c0_8], %8 {strides = array<i32>} : memref<16x8x256xf32, #tpu.memory_space<vmem>>, vector<1x8x256xf32>,
    %cst_9 = arith.constant dense<0.000000e+00> : vector<8xf32>
    %9 = vector.multi_reduction <add>, %5, %cst_9 [1] : vector<8x256xf32> to vector<8xf32>
    %10 = vector.shape_cast %9 : vector<8xf32> to vector<8x1xf32>
    %11 = arith.addf %1, %10 : vector<8x1xf32>
    %12 = arith.mulf %5, %5 : vector<8x256xf32>
    %cst_10 = arith.constant dense<0.000000e+00> : vector<8xf32>
    %13 = vector.multi_reduction <add>, %12, %cst_10 [1] : vector<8x256xf32> to vector<8xf32>
    %14 = vector.shape_cast %13 : vector<8xf32> to vector<8x1xf32>
    %15 = arith.addf %2, %14 : vector<8x1xf32>
    %c1 = arith.constant 1 : index
    %c0_11 = arith.constant 0 : index
    %c0_12 = arith.constant 0 : index
    %16 = vector.load %arg1[%c1, %c0_11, %c0_12] : memref<16x36x256xf32, #tpu.memory_space<vmem>>, vector<1x36x256xf32>
    %17 = vector.shape_cast %16 : vector<1x36x256xf32> to vector<36x256xf32>
    %cst_13 = arith.constant dense<0.000000e+00> : vector<8x256xf32>
    %18 = tpu.matmul %0, %17, %cst_13 {dimension_numbers = #tpu.dot_dimension_numbers<[1], [0], [0], [1], [0, 0, 1, 1], [], []>} : vector<8x36xf32>, vector<36x256xf32>, vector<8x256xf32> -> vector<8x256xf32>
    %c1_14 = arith.constant 1 : index
    %c0_15 = arith.constant 0 : index
    %c0_16 = arith.constant 0 : index
    %19 = vector.load %arg9[%c1_14, %c0_15, %c0_16] : memref<16x8x256xf32, #tpu.memory_space<vmem>>, vector<1x8x256xf32>
    %20 = vector.shape_cast %19 : vector<1x8x256xf32> to vector<8x256xf32>
    %21 = vector.shape_cast %18 : vector<8x256xf32> to vector<1x8x256xf32>
    tpu.vector_store %arg9[%c1_14, %c0_15, %c0_16], %21 {strides = array<i32>} : memref<16x8x256xf32, #tpu.memory_space<vmem>>, vector<1x8x256xf32>,
    %cst_17 = arith.constant dense<0.000000e+00> : vector<8xf32>
    %22 = vector.multi_reduction <add>, %18, %cst_17 [1] : vector<8x256xf32> to vector<8xf32>
    %23 = vector.shape_cast %22 : vector<8xf32> to vector<8x1xf32>
    %24 = arith.addf %11, %23 : vector<8x1xf32>
    %25 = arith.mulf %18, %18 : vector<8x256xf32>
    %cst_18 = arith.constant dense<0.000000e+00> : vector<8xf32>
    %26 = vector.multi_reduction <add>, %25, %cst_18 [1] : vector<8x256xf32> to vector<8xf32>
    %27 = vector.shape_cast %26 : vector<8xf32> to vector<8x1xf32>
    %28 = arith.addf %15, %27 : vector<8x1xf32>
    %c2 = arith.constant 2 : index
    %c0_19 = arith.constant 0 : index
    %c0_20 = arith.constant 0 : index
    %29 = vector.load %arg1[%c2, %c0_19, %c0_20] : memref<16x36x256xf32, #tpu.memory_space<vmem>>, vector<1x36x256xf32>
    %30 = vector.shape_cast %29 : vector<1x36x256xf32> to vector<36x256xf32>
    %cst_21 = arith.constant dense<0.000000e+00> : vector<8x256xf32>
    %31 = tpu.matmul %0, %30, %cst_21 {dimension_numbers = #tpu.dot_dimension_numbers<[1], [0], [0], [1], [0, 0, 1, 1], [], []>} : vector<8x36xf32>, vector<36x256xf32>, vector<8x256xf32> -> vector<8x256xf32>
    %c2_22 = arith.constant 2 : index
    %c0_23 = arith.constant 0 : index
    %c0_24 = arith.constant 0 : index
    %32 = vector.load %arg9[%c2_22, %c0_23, %c0_24] : memref<16x8x256xf32, #tpu.memory_space<vmem>>, vector<1x8x256xf32>
    %33 = vector.shape_cast %32 : vector<1x8x256xf32> to vector<8x256xf32>
    %34 = vector.shape_cast %31 : vector<8x256xf32> to vector<1x8x256xf32>
    tpu.vector_store %arg9[%c2_22, %c0_23, %c0_24], %34 {strides = array<i32>} : memref<16x8x256xf32, #tpu.memory_space<vmem>>, vector<1x8x256xf32>,
    %cst_25 = arith.constant dense<0.000000e+00> : vector<8xf32>
    %35 = vector.multi_reduction <add>, %31, %cst_25 [1] : vector<8x256xf32> to vector<8xf32>
    %36 = vector.shape_cast %35 : vector<8xf32> to vector<8x1xf32>
    %37 = arith.addf %24, %36 : vector<8x1xf32>
    %38 = arith.mulf %31, %31 : vector<8x256xf32>
    %cst_26 = arith.constant dense<0.000000e+00> : vector<8xf32>
    %39 = vector.multi_reduction <add>, %38, %cst_26 [1] : vector<8x256xf32> to vector<8xf32>
    %40 = vector.shape_cast %39 : vector<8xf32> to vector<8x1xf32>
    %41 = arith.addf %28, %40 : vector<8x1xf32>
    %c3 = arith.constant 3 : index
    %c0_27 = arith.constant 0 : index
    %c0_28 = arith.constant 0 : index
    %42 = vector.load %arg1[%c3, %c0_27, %c0_28] : memref<16x36x256xf32, #tpu.memory_space<vmem>>, vector<1x36x256xf32>
    %43 = vector.shape_cast %42 : vector<1x36x256xf32> to vector<36x256xf32>
    %cst_29 = arith.constant dense<0.000000e+00> : vector<8x256xf32>
    %44 = tpu.matmul %0, %43, %cst_29 {dimension_numbers = #tpu.dot_dimension_numbers<[1], [0], [0], [1], [0, 0, 1, 1], [], []>} : vector<8x36xf32>, vector<36x256xf32>, vector<8x256xf32> -> vector<8x256xf32>
    %c3_30 = arith.constant 3 : index
    %c0_31 = arith.constant 0 : index
    %c0_32 = arith.constant 0 : index
    %45 = vector.load %arg9[%c3_30, %c0_31, %c0_32] : memref<16x8x256xf32, #tpu.memory_space<vmem>>, vector<1x8x256xf32>
    %46 = vector.shape_cast %45 : vector<1x8x256xf32> to vector<8x256xf32>
    %47 = vector.shape_cast %44 : vector<8x256xf32> to vector<1x8x256xf32>
    tpu.vector_store %arg9[%c3_30, %c0_31, %c0_32], %47 {strides = array<i32>} : memref<16x8x256xf32, #tpu.memory_space<vmem>>, vector<1x8x256xf32>,
    %cst_33 = arith.constant dense<0.000000e+00> : vector<8xf32>
    %48 = vector.multi_reduction <add>, %44, %cst_33 [1] : vector<8x256xf32> to vector<8xf32>
    %49 = vector.shape_cast %48 : vector<8xf32> to vector<8x1xf32>
    %50 = arith.addf %37, %49 : vector<8x1xf32>
    %51 = arith.mulf %44, %44 : vector<8x256xf32>
    %cst_34 = arith.constant dense<0.000000e+00> : vector<8xf32>
    %52 = vector.multi_reduction <add>, %51, %cst_34 [1] : vector<8x256xf32> to vector<8xf32>
    %53 = vector.shape_cast %52 : vector<8xf32> to vector<8x1xf32>
    %54 = arith.addf %41, %53 : vector<8x1xf32>
    %c4 = arith.constant 4 : index
    %c0_35 = arith.constant 0 : index
    %c0_36 = arith.constant 0 : index
    %55 = vector.load %arg1[%c4, %c0_35, %c0_36] : memref<16x36x256xf32, #tpu.memory_space<vmem>>, vector<1x36x256xf32>
    %56 = vector.shape_cast %55 : vector<1x36x256xf32> to vector<36x256xf32>
    %cst_37 = arith.constant dense<0.000000e+00> : vector<8x256xf32>
    %57 = tpu.matmul %0, %56, %cst_37 {dimension_numbers = #tpu.dot_dimension_numbers<[1], [0], [0], [1], [0, 0, 1, 1], [], []>} : vector<8x36xf32>, vector<36x256xf32>, vector<8x256xf32> -> vector<8x256xf32>
    %c4_38 = arith.constant 4 : index
    %c0_39 = arith.constant 0 : index
    %c0_40 = arith.constant 0 : index
    %58 = vector.load %arg9[%c4_38, %c0_39, %c0_40] : memref<16x8x256xf32, #tpu.memory_space<vmem>>, vector<1x8x256xf32>
    %59 = vector.shape_cast %58 : vector<1x8x256xf32> to vector<8x256xf32>
    %60 = vector.shape_cast %57 : vector<8x256xf32> to vector<1x8x256xf32>
    tpu.vector_store %arg9[%c4_38, %c0_39, %c0_40], %60 {strides = array<i32>} : memref<16x8x256xf32, #tpu.memory_space<vmem>>, vector<1x8x256xf32>,
    %cst_41 = arith.constant dense<0.000000e+00> : vector<8xf32>
    %61 = vector.multi_reduction <add>, %57, %cst_41 [1] : vector<8x256xf32> to vector<8xf32>
    %62 = vector.shape_cast %61 : vector<8xf32> to vector<8x1xf32>
    %63 = arith.addf %50, %62 : vector<8x1xf32>
    %64 = arith.mulf %57, %57 : vector<8x256xf32>
    %cst_42 = arith.constant dense<0.000000e+00> : vector<8xf32>
    %65 = vector.multi_reduction <add>, %64, %cst_42 [1] : vector<8x256xf32> to vector<8xf32>
    %66 = vector.shape_cast %65 : vector<8xf32> to vector<8x1xf32>
    %67 = arith.addf %54, %66 : vector<8x1xf32>
    %c5 = arith.constant 5 : index
    %c0_43 = arith.constant 0 : index
    %c0_44 = arith.constant 0 : index
    %68 = vector.load %arg1[%c5, %c0_43, %c0_44] : memref<16x36x256xf32, #tpu.memory_space<vmem>>, vector<1x36x256xf32>
    %69 = vector.shape_cast %68 : vector<1x36x256xf32> to vector<36x256xf32>
    %cst_45 = arith.constant dense<0.000000e+00> : vector<8x256xf32>
    %70 = tpu.matmul %0, %69, %cst_45 {dimension_numbers = #tpu.dot_dimension_numbers<[1], [0], [0], [1], [0, 0, 1, 1], [], []>} : vector<8x36xf32>, vector<36x256xf32>, vector<8x256xf32> -> vector<8x256xf32>
    %c5_46 = arith.constant 5 : index
    %c0_47 = arith.constant 0 : index
    %c0_48 = arith.constant 0 : index
    %71 = vector.load %arg9[%c5_46, %c0_47, %c0_48] : memref<16x8x256xf32, #tpu.memory_space<vmem>>, vector<1x8x256xf32>
    %72 = vector.shape_cast %71 : vector<1x8x256xf32> to vector<8x256xf32>
    %73 = vector.shape_cast %70 : vector<8x256xf32> to vector<1x8x256xf32>
    tpu.vector_store %arg9[%c5_46, %c0_47, %c0_48], %73 {strides = array<i32>} : memref<16x8x256xf32, #tpu.memory_space<vmem>>, vector<1x8x256xf32>,
    %cst_49 = arith.constant dense<0.000000e+00> : vector<8xf32>
    %74 = vector.multi_reduction <add>, %70, %cst_49 [1] : vector<8x256xf32> to vector<8xf32>
    %75 = vector.shape_cast %74 : vector<8xf32> to vector<8x1xf32>
    %76 = arith.addf %63, %75 : vector<8x1xf32>
    %77 = arith.mulf %70, %70 : vector<8x256xf32>
    %cst_50 = arith.constant dense<0.000000e+00> : vector<8xf32>
    %78 = vector.multi_reduction <add>, %77, %cst_50 [1] : vector<8x256xf32> to vector<8xf32>
    %79 = vector.shape_cast %78 : vector<8xf32> to vector<8x1xf32>
    %80 = arith.addf %67, %79 : vector<8x1xf32>
    %c6 = arith.constant 6 : index
    %c0_51 = arith.constant 0 : index
    %c0_52 = arith.constant 0 : index
    %81 = vector.load %arg1[%c6, %c0_51, %c0_52] : memref<16x36x256xf32, #tpu.memory_space<vmem>>, vector<1x36x256xf32>
    %82 = vector.shape_cast %81 : vector<1x36x256xf32> to vector<36x256xf32>
    %cst_53 = arith.constant dense<0.000000e+00> : vector<8x256xf32>
    %83 = tpu.matmul %0, %82, %cst_53 {dimension_numbers = #tpu.dot_dimension_numbers<[1], [0], [0], [1], [0, 0, 1, 1], [], []>} : vector<8x36xf32>, vector<36x256xf32>, vector<8x256xf32> -> vector<8x256xf32>
    %c6_54 = arith.constant 6 : index
    %c0_55 = arith.constant 0 : index
    %c0_56 = arith.constant 0 : index
    %84 = vector.load %arg9[%c6_54, %c0_55, %c0_56] : memref<16x8x256xf32, #tpu.memory_space<vmem>>, vector<1x8x256xf32>
    %85 = vector.shape_cast %84 : vector<1x8x256xf32> to vector<8x256xf32>
    %86 = vector.shape_cast %83 : vector<8x256xf32> to vector<1x8x256xf32>
    tpu.vector_store %arg9[%c6_54, %c0_55, %c0_56], %86 {strides = array<i32>} : memref<16x8x256xf32, #tpu.memory_space<vmem>>, vector<1x8x256xf32>,
    %cst_57 = arith.constant dense<0.000000e+00> : vector<8xf32>
    %87 = vector.multi_reduction <add>, %83, %cst_57 [1] : vector<8x256xf32> to vector<8xf32>
    %88 = vector.shape_cast %87 : vector<8xf32> to vector<8x1xf32>
    %89 = arith.addf %76, %88 : vector<8x1xf32>
    %90 = arith.mulf %83, %83 : vector<8x256xf32>
    %cst_58 = arith.constant dense<0.000000e+00> : vector<8xf32>
    %91 = vector.multi_reduction <add>, %90, %cst_58 [1] : vector<8x256xf32> to vector<8xf32>
    %92 = vector.shape_cast %91 : vector<8xf32> to vector<8x1xf32>
    %93 = arith.addf %80, %92 : vector<8x1xf32>
    %c7 = arith.constant 7 : index
    %c0_59 = arith.constant 0 : index
    %c0_60 = arith.constant 0 : index
    %94 = vector.load %arg1[%c7, %c0_59, %c0_60] : memref<16x36x256xf32, #tpu.memory_space<vmem>>, vector<1x36x256xf32>
    %95 = vector.shape_cast %94 : vector<1x36x256xf32> to vector<36x256xf32>
    %cst_61 = arith.constant dense<0.000000e+00> : vector<8x256xf32>
    %96 = tpu.matmul %0, %95, %cst_61 {dimension_numbers = #tpu.dot_dimension_numbers<[1], [0], [0], [1], [0, 0, 1, 1], [], []>} : vector<8x36xf32>, vector<36x256xf32>, vector<8x256xf32> -> vector<8x256xf32>
    %c7_62 = arith.constant 7 : index
    %c0_63 = arith.constant 0 : index
    %c0_64 = arith.constant 0 : index
    %97 = vector.load %arg9[%c7_62, %c0_63, %c0_64] : memref<16x8x256xf32, #tpu.memory_space<vmem>>, vector<1x8x256xf32>
    %98 = vector.shape_cast %97 : vector<1x8x256xf32> to vector<8x256xf32>
    %99 = vector.shape_cast %96 : vector<8x256xf32> to vector<1x8x256xf32>
    tpu.vector_store %arg9[%c7_62, %c0_63, %c0_64], %99 {strides = array<i32>} : memref<16x8x256xf32, #tpu.memory_space<vmem>>, vector<1x8x256xf32>,
    %cst_65 = arith.constant dense<0.000000e+00> : vector<8xf32>
    %100 = vector.multi_reduction <add>, %96, %cst_65 [1] : vector<8x256xf32> to vector<8xf32>
    %101 = vector.shape_cast %100 : vector<8xf32> to vector<8x1xf32>
    %102 = arith.addf %89, %101 : vector<8x1xf32>
    %103 = arith.mulf %96, %96 : vector<8x256xf32>
    %cst_66 = arith.constant dense<0.000000e+00> : vector<8xf32>
    %104 = vector.multi_reduction <add>, %103, %cst_66 [1] : vector<8x256xf32> to vector<8xf32>
    %105 = vector.shape_cast %104 : vector<8xf32> to vector<8x1xf32>
    %106 = arith.addf %93, %105 : vector<8x1xf32>
    %c8 = arith.constant 8 : index
    %c0_67 = arith.constant 0 : index
    %c0_68 = arith.constant 0 : index
    %107 = vector.load %arg1[%c8, %c0_67, %c0_68] : memref<16x36x256xf32, #tpu.memory_space<vmem>>, vector<1x36x256xf32>
    %108 = vector.shape_cast %107 : vector<1x36x256xf32> to vector<36x256xf32>
    %cst_69 = arith.constant dense<0.000000e+00> : vector<8x256xf32>
    %109 = tpu.matmul %0, %108, %cst_69 {dimension_numbers = #tpu.dot_dimension_numbers<[1], [0], [0], [1], [0, 0, 1, 1], [], []>} : vector<8x36xf32>, vector<36x256xf32>, vector<8x256xf32> -> vector<8x256xf32>
    %c8_70 = arith.constant 8 : index
    %c0_71 = arith.constant 0 : index
    %c0_72 = arith.constant 0 : index
    %110 = vector.load %arg9[%c8_70, %c0_71, %c0_72] : memref<16x8x256xf32, #tpu.memory_space<vmem>>, vector<1x8x256xf32>
    %111 = vector.shape_cast %110 : vector<1x8x256xf32> to vector<8x256xf32>
    %112 = vector.shape_cast %109 : vector<8x256xf32> to vector<1x8x256xf32>
    tpu.vector_store %arg9[%c8_70, %c0_71, %c0_72], %112 {strides = array<i32>} : memref<16x8x256xf32, #tpu.memory_space<vmem>>, vector<1x8x256xf32>,
    %cst_73 = arith.constant dense<0.000000e+00> : vector<8xf32>
    %113 = vector.multi_reduction <add>, %109, %cst_73 [1] : vector<8x256xf32> to vector<8xf32>
    %114 = vector.shape_cast %113 : vector<8xf32> to vector<8x1xf32>
    %115 = arith.addf %102, %114 : vector<8x1xf32>
    %116 = arith.mulf %109, %109 : vector<8x256xf32>
    %cst_74 = arith.constant dense<0.000000e+00> : vector<8xf32>
    %117 = vector.multi_reduction <add>, %116, %cst_74 [1] : vector<8x256xf32> to vector<8xf32>
    %118 = vector.shape_cast %117 : vector<8xf32> to vector<8x1xf32>
    %119 = arith.addf %106, %118 : vector<8x1xf32>
    %c9 = arith.constant 9 : index
    %c0_75 = arith.constant 0 : index
    %c0_76 = arith.constant 0 : index
    %120 = vector.load %arg1[%c9, %c0_75, %c0_76] : memref<16x36x256xf32, #tpu.memory_space<vmem>>, vector<1x36x256xf32>
    %121 = vector.shape_cast %120 : vector<1x36x256xf32> to vector<36x256xf32>
    %cst_77 = arith.constant dense<0.000000e+00> : vector<8x256xf32>
    %122 = tpu.matmul %0, %121, %cst_77 {dimension_numbers = #tpu.dot_dimension_numbers<[1], [0], [0], [1], [0, 0, 1, 1], [], []>} : vector<8x36xf32>, vector<36x256xf32>, vector<8x256xf32> -> vector<8x256xf32>
    %c9_78 = arith.constant 9 : index
    %c0_79 = arith.constant 0 : index
    %c0_80 = arith.constant 0 : index
    %123 = vector.load %arg9[%c9_78, %c0_79, %c0_80] : memref<16x8x256xf32, #tpu.memory_space<vmem>>, vector<1x8x256xf32>
    %124 = vector.shape_cast %123 : vector<1x8x256xf32> to vector<8x256xf32>
    %125 = vector.shape_cast %122 : vector<8x256xf32> to vector<1x8x256xf32>
    tpu.vector_store %arg9[%c9_78, %c0_79, %c0_80], %125 {strides = array<i32>} : memref<16x8x256xf32, #tpu.memory_space<vmem>>, vector<1x8x256xf32>,
    %cst_81 = arith.constant dense<0.000000e+00> : vector<8xf32>
    %126 = vector.multi_reduction <add>, %122, %cst_81 [1] : vector<8x256xf32> to vector<8xf32>
    %127 = vector.shape_cast %126 : vector<8xf32> to vector<8x1xf32>
    %128 = arith.addf %115, %127 : vector<8x1xf32>
    %129 = arith.mulf %122, %122 : vector<8x256xf32>
    %cst_82 = arith.constant dense<0.000000e+00> : vector<8xf32>
    %130 = vector.multi_reduction <add>, %129, %cst_82 [1] : vector<8x256xf32> to vector<8xf32>
    %131 = vector.shape_cast %130 : vector<8xf32> to vector<8x1xf32>
    %132 = arith.addf %119, %131 : vector<8x1xf32>
    %c10 = arith.constant 10 : index
    %c0_83 = arith.constant 0 : index
    %c0_84 = arith.constant 0 : index
    %133 = vector.load %arg1[%c10, %c0_83, %c0_84] : memref<16x36x256xf32, #tpu.memory_space<vmem>>, vector<1x36x256xf32>
    %134 = vector.shape_cast %133 : vector<1x36x256xf32> to vector<36x256xf32>
    %cst_85 = arith.constant dense<0.000000e+00> : vector<8x256xf32>
    %135 = tpu.matmul %0, %134, %cst_85 {dimension_numbers = #tpu.dot_dimension_numbers<[1], [0], [0], [1], [0, 0, 1, 1], [], []>} : vector<8x36xf32>, vector<36x256xf32>, vector<8x256xf32> -> vector<8x256xf32>
    %c10_86 = arith.constant 10 : index
    %c0_87 = arith.constant 0 : index
    %c0_88 = arith.constant 0 : index
    %136 = vector.load %arg9[%c10_86, %c0_87, %c0_88] : memref<16x8x256xf32, #tpu.memory_space<vmem>>, vector<1x8x256xf32>
    %137 = vector.shape_cast %136 : vector<1x8x256xf32> to vector<8x256xf32>
    %138 = vector.shape_cast %135 : vector<8x256xf32> to vector<1x8x256xf32>
    tpu.vector_store %arg9[%c10_86, %c0_87, %c0_88], %138 {strides = array<i32>} : memref<16x8x256xf32, #tpu.memory_space<vmem>>, vector<1x8x256xf32>,
    %cst_89 = arith.constant dense<0.000000e+00> : vector<8xf32>
    %139 = vector.multi_reduction <add>, %135, %cst_89 [1] : vector<8x256xf32> to vector<8xf32>
    %140 = vector.shape_cast %139 : vector<8xf32> to vector<8x1xf32>
    %141 = arith.addf %128, %140 : vector<8x1xf32>
    %142 = arith.mulf %135, %135 : vector<8x256xf32>
    %cst_90 = arith.constant dense<0.000000e+00> : vector<8xf32>
    %143 = vector.multi_reduction <add>, %142, %cst_90 [1] : vector<8x256xf32> to vector<8xf32>
    %144 = vector.shape_cast %143 : vector<8xf32> to vector<8x1xf32>
    %145 = arith.addf %132, %144 : vector<8x1xf32>
    %c11 = arith.constant 11 : index
    %c0_91 = arith.constant 0 : index
    %c0_92 = arith.constant 0 : index
    %146 = vector.load %arg1[%c11, %c0_91, %c0_92] : memref<16x36x256xf32, #tpu.memory_space<vmem>>, vector<1x36x256xf32>
    %147 = vector.shape_cast %146 : vector<1x36x256xf32> to vector<36x256xf32>
    %cst_93 = arith.constant dense<0.000000e+00> : vector<8x256xf32>
    %148 = tpu.matmul %0, %147, %cst_93 {dimension_numbers = #tpu.dot_dimension_numbers<[1], [0], [0], [1], [0, 0, 1, 1], [], []>} : vector<8x36xf32>, vector<36x256xf32>, vector<8x256xf32> -> vector<8x256xf32>
    %c11_94 = arith.constant 11 : index
    %c0_95 = arith.constant 0 : index
    %c0_96 = arith.constant 0 : index
    %149 = vector.load %arg9[%c11_94, %c0_95, %c0_96] : memref<16x8x256xf32, #tpu.memory_space<vmem>>, vector<1x8x256xf32>
    %150 = vector.shape_cast %149 : vector<1x8x256xf32> to vector<8x256xf32>
    %151 = vector.shape_cast %148 : vector<8x256xf32> to vector<1x8x256xf32>
    tpu.vector_store %arg9[%c11_94, %c0_95, %c0_96], %151 {strides = array<i32>} : memref<16x8x256xf32, #tpu.memory_space<vmem>>, vector<1x8x256xf32>,
    %cst_97 = arith.constant dense<0.000000e+00> : vector<8xf32>
    %152 = vector.multi_reduction <add>, %148, %cst_97 [1] : vector<8x256xf32> to vector<8xf32>
    %153 = vector.shape_cast %152 : vector<8xf32> to vector<8x1xf32>
    %154 = arith.addf %141, %153 : vector<8x1xf32>
    %155 = arith.mulf %148, %148 : vector<8x256xf32>
    %cst_98 = arith.constant dense<0.000000e+00> : vector<8xf32>
    %156 = vector.multi_reduction <add>, %155, %cst_98 [1] : vector<8x256xf32> to vector<8xf32>
    %157 = vector.shape_cast %156 : vector<8xf32> to vector<8x1xf32>
    %158 = arith.addf %145, %157 : vector<8x1xf32>
    %c12 = arith.constant 12 : index
    %c0_99 = arith.constant 0 : index
    %c0_100 = arith.constant 0 : index
    %159 = vector.load %arg1[%c12, %c0_99, %c0_100] : memref<16x36x256xf32, #tpu.memory_space<vmem>>, vector<1x36x256xf32>
    %160 = vector.shape_cast %159 : vector<1x36x256xf32> to vector<36x256xf32>
    %cst_101 = arith.constant dense<0.000000e+00> : vector<8x256xf32>
    %161 = tpu.matmul %0, %160, %cst_101 {dimension_numbers = #tpu.dot_dimension_numbers<[1], [0], [0], [1], [0, 0, 1, 1], [], []>} : vector<8x36xf32>, vector<36x256xf32>, vector<8x256xf32> -> vector<8x256xf32>
    %c12_102 = arith.constant 12 : index
    %c0_103 = arith.constant 0 : index
    %c0_104 = arith.constant 0 : index
    %162 = vector.load %arg9[%c12_102, %c0_103, %c0_104] : memref<16x8x256xf32, #tpu.memory_space<vmem>>, vector<1x8x256xf32>
    %163 = vector.shape_cast %162 : vector<1x8x256xf32> to vector<8x256xf32>
    %164 = vector.shape_cast %161 : vector<8x256xf32> to vector<1x8x256xf32>
    tpu.vector_store %arg9[%c12_102, %c0_103, %c0_104], %164 {strides = array<i32>} : memref<16x8x256xf32, #tpu.memory_space<vmem>>, vector<1x8x256xf32>,
    %cst_105 = arith.constant dense<0.000000e+00> : vector<8xf32>
    %165 = vector.multi_reduction <add>, %161, %cst_105 [1] : vector<8x256xf32> to vector<8xf32>
    %166 = vector.shape_cast %165 : vector<8xf32> to vector<8x1xf32>
    %167 = arith.addf %154, %166 : vector<8x1xf32>
    %168 = arith.mulf %161, %161 : vector<8x256xf32>
    %cst_106 = arith.constant dense<0.000000e+00> : vector<8xf32>
    %169 = vector.multi_reduction <add>, %168, %cst_106 [1] : vector<8x256xf32> to vector<8xf32>
    %170 = vector.shape_cast %169 : vector<8xf32> to vector<8x1xf32>
    %171 = arith.addf %158, %170 : vector<8x1xf32>
    %c13 = arith.constant 13 : index
    %c0_107 = arith.constant 0 : index
    %c0_108 = arith.constant 0 : index
    %172 = vector.load %arg1[%c13, %c0_107, %c0_108] : memref<16x36x256xf32, #tpu.memory_space<vmem>>, vector<1x36x256xf32>
    %173 = vector.shape_cast %172 : vector<1x36x256xf32> to vector<36x256xf32>
    %cst_109 = arith.constant dense<0.000000e+00> : vector<8x256xf32>
    %174 = tpu.matmul %0, %173, %cst_109 {dimension_numbers = #tpu.dot_dimension_numbers<[1], [0], [0], [1], [0, 0, 1, 1], [], []>} : vector<8x36xf32>, vector<36x256xf32>, vector<8x256xf32> -> vector<8x256xf32>
    %c13_110 = arith.constant 13 : index
    %c0_111 = arith.constant 0 : index
    %c0_112 = arith.constant 0 : index
    %175 = vector.load %arg9[%c13_110, %c0_111, %c0_112] : memref<16x8x256xf32, #tpu.memory_space<vmem>>, vector<1x8x256xf32>
    %176 = vector.shape_cast %175 : vector<1x8x256xf32> to vector<8x256xf32>
    %177 = vector.shape_cast %174 : vector<8x256xf32> to vector<1x8x256xf32>
    tpu.vector_store %arg9[%c13_110, %c0_111, %c0_112], %177 {strides = array<i32>} : memref<16x8x256xf32, #tpu.memory_space<vmem>>, vector<1x8x256xf32>,
    %cst_113 = arith.constant dense<0.000000e+00> : vector<8xf32>
    %178 = vector.multi_reduction <add>, %174, %cst_113 [1] : vector<8x256xf32> to vector<8xf32>
    %179 = vector.shape_cast %178 : vector<8xf32> to vector<8x1xf32>
    %180 = arith.addf %167, %179 : vector<8x1xf32>
    %181 = arith.mulf %174, %174 : vector<8x256xf32>
    %cst_114 = arith.constant dense<0.000000e+00> : vector<8xf32>
    %182 = vector.multi_reduction <add>, %181, %cst_114 [1] : vector<8x256xf32> to vector<8xf32>
    %183 = vector.shape_cast %182 : vector<8xf32> to vector<8x1xf32>
    %184 = arith.addf %171, %183 : vector<8x1xf32>
    %c14 = arith.constant 14 : index
    %c0_115 = arith.constant 0 : index
    %c0_116 = arith.constant 0 : index
    %185 = vector.load %arg1[%c14, %c0_115, %c0_116] : memref<16x36x256xf32, #tpu.memory_space<vmem>>, vector<1x36x256xf32>
    %186 = vector.shape_cast %185 : vector<1x36x256xf32> to vector<36x256xf32>
    %cst_117 = arith.constant dense<0.000000e+00> : vector<8x256xf32>
    %187 = tpu.matmul %0, %186, %cst_117 {dimension_numbers = #tpu.dot_dimension_numbers<[1], [0], [0], [1], [0, 0, 1, 1], [], []>} : vector<8x36xf32>, vector<36x256xf32>, vector<8x256xf32> -> vector<8x256xf32>
    %c14_118 = arith.constant 14 : index
    %c0_119 = arith.constant 0 : index
    %c0_120 = arith.constant 0 : index
    %188 = vector.load %arg9[%c14_118, %c0_119, %c0_120] : memref<16x8x256xf32, #tpu.memory_space<vmem>>, vector<1x8x256xf32>
    %189 = vector.shape_cast %188 : vector<1x8x256xf32> to vector<8x256xf32>
    %190 = vector.shape_cast %187 : vector<8x256xf32> to vector<1x8x256xf32>
    tpu.vector_store %arg9[%c14_118, %c0_119, %c0_120], %190 {strides = array<i32>} : memref<16x8x256xf32, #tpu.memory_space<vmem>>, vector<1x8x256xf32>,
    %cst_121 = arith.constant dense<0.000000e+00> : vector<8xf32>
    %191 = vector.multi_reduction <add>, %187, %cst_121 [1] : vector<8x256xf32> to vector<8xf32>
    %192 = vector.shape_cast %191 : vector<8xf32> to vector<8x1xf32>
    %193 = arith.addf %180, %192 : vector<8x1xf32>
    %194 = arith.mulf %187, %187 : vector<8x256xf32>
    %cst_122 = arith.constant dense<0.000000e+00> : vector<8xf32>
    %195 = vector.multi_reduction <add>, %194, %cst_122 [1] : vector<8x256xf32> to vector<8xf32>
    %196 = vector.shape_cast %195 : vector<8xf32> to vector<8x1xf32>
    %197 = arith.addf %184, %196 : vector<8x1xf32>
    %c15 = arith.constant 15 : index
    %c0_123 = arith.constant 0 : index
    %c0_124 = arith.constant 0 : index
    %198 = vector.load %arg1[%c15, %c0_123, %c0_124] : memref<16x36x256xf32, #tpu.memory_space<vmem>>, vector<1x36x256xf32>
    %199 = vector.shape_cast %198 : vector<1x36x256xf32> to vector<36x256xf32>
    %cst_125 = arith.constant dense<0.000000e+00> : vector<8x256xf32>
    %200 = tpu.matmul %0, %199, %cst_125 {dimension_numbers = #tpu.dot_dimension_numbers<[1], [0], [0], [1], [0, 0, 1, 1], [], []>} : vector<8x36xf32>, vector<36x256xf32>, vector<8x256xf32> -> vector<8x256xf32>
    %c15_126 = arith.constant 15 : index
    %c0_127 = arith.constant 0 : index
    %c0_128 = arith.constant 0 : index
    %201 = vector.load %arg9[%c15_126, %c0_127, %c0_128] : memref<16x8x256xf32, #tpu.memory_space<vmem>>, vector<1x8x256xf32>
    %202 = vector.shape_cast %201 : vector<1x8x256xf32> to vector<8x256xf32>
    %203 = vector.shape_cast %200 : vector<8x256xf32> to vector<1x8x256xf32>
    tpu.vector_store %arg9[%c15_126, %c0_127, %c0_128], %203 {strides = array<i32>} : memref<16x8x256xf32, #tpu.memory_space<vmem>>, vector<1x8x256xf32>,
    %cst_129 = arith.constant dense<0.000000e+00> : vector<8xf32>
    %204 = vector.multi_reduction <add>, %200, %cst_129 [1] : vector<8x256xf32> to vector<8xf32>
    %205 = vector.shape_cast %204 : vector<8xf32> to vector<8x1xf32>
    %206 = arith.addf %193, %205 : vector<8x1xf32>
    %207 = arith.mulf %200, %200 : vector<8x256xf32>
    %cst_130 = arith.constant dense<0.000000e+00> : vector<8xf32>
    %208 = vector.multi_reduction <add>, %207, %cst_130 [1] : vector<8x256xf32> to vector<8xf32>
    %209 = vector.shape_cast %208 : vector<8xf32> to vector<8x1xf32>
    %210 = arith.addf %197, %209 : vector<8x1xf32>
    %cst_131 = arith.constant 2.44140625E-4 : f32
    %211 = vector.broadcast %cst_131 : f32 to vector<8x1xf32>
    %212 = arith.mulf %206, %211 : vector<8x1xf32>
    %cst_132 = arith.constant 2.44140625E-4 : f32
    %213 = vector.broadcast %cst_132 : f32 to vector<8x1xf32>
    %214 = arith.mulf %210, %213 : vector<8x1xf32>
    %215 = arith.mulf %212, %212 : vector<8x1xf32>
    %216 = arith.subf %214, %215 : vector<8x1xf32>
    %cst_133 = arith.constant 0.000000e+00 : f32
    %217 = vector.broadcast %cst_133 : f32 to vector<8x1xf32>
    %218 = arith.maximumf %216, %217 : vector<8x1xf32>
    %c0_134 = arith.constant 0 : index
    %c0_135 = arith.constant 0 : index
    %219 = vector.load %arg4[%c0_134, %c0_135] : memref<8x1xf32, #tpu.memory_space<vmem>>, vector<8x1xf32>
    %cst_136 = arith.constant 9.99999974E-6 : f32
    %220 = vector.broadcast %cst_136 : f32 to vector<8x1xf32>
    %221 = arith.addf %218, %220 : vector<8x1xf32>
    %222 = math.rsqrt %221 : vector<8x1xf32>
    %223 = arith.mulf %219, %222 : vector<8x1xf32>
    %c0_137 = arith.constant 0 : index
    %c0_138 = arith.constant 0 : index
    %224 = vector.load %arg5[%c0_137, %c0_138] : memref<8x1xf32, #tpu.memory_space<vmem>>, vector<8x1xf32>
    %225 = arith.mulf %212, %223 : vector<8x1xf32>
    %226 = arith.subf %224, %225 : vector<8x1xf32>
    %c0_139 = arith.constant 0 : index
    %c0_140 = arith.constant 0 : index
    %c0_141 = arith.constant 0 : index
    %227 = vector.load %arg9[%c0_139, %c0_140, %c0_141] : memref<16x8x256xf32, #tpu.memory_space<vmem>>, vector<16x8x256xf32>
    %228 = vector.shape_cast %223 : vector<8x1xf32> to vector<1x8x1xf32>
    %229 = vector.broadcast %228 : vector<1x8x1xf32> to vector<16x8x256xf32>
    %230 = arith.mulf %227, %229 : vector<16x8x256xf32>
    %231 = vector.shape_cast %226 : vector<8x1xf32> to vector<1x8x1xf32>
    %232 = vector.broadcast %231 : vector<1x8x1xf32> to vector<16x8x256xf32>
    %233 = arith.addf %230, %232 : vector<16x8x256xf32>
    %cst_142 = arith.constant 0.000000e+00 : f32
    %234 = vector.broadcast %cst_142 : f32 to vector<16x8x256xf32>
    %235 = arith.maximumf %233, %234 : vector<16x8x256xf32>
    %c0_143 = arith.constant 0 : index
    %c0_144 = arith.constant 0 : index
    %c0_145 = arith.constant 0 : index
    %236 = vector.load %arg9[%c0_143, %c0_144, %c0_145] : memref<16x8x256xf32, #tpu.memory_space<vmem>>, vector<16x8x256xf32>
    tpu.vector_store %arg9[%c0_143, %c0_144, %c0_145], %235 {strides = array<i32>} : memref<16x8x256xf32, #tpu.memory_space<vmem>>, vector<16x8x256xf32>,
    %c0_146 = arith.constant 0 : index
    %c0_147 = arith.constant 0 : index
    %237 = vector.load %arg3[%c0_146, %c0_147] : memref<8x24xf32, #tpu.memory_space<vmem>>, vector<8x24xf32>
    %cst_148 = arith.constant 0.000000e+00 : f32
    %238 = vector.broadcast %cst_148 : f32 to vector<8x1xf32>
    %cst_149 = arith.constant 0.000000e+00 : f32
    %239 = vector.broadcast %cst_149 : f32 to vector<8x1xf32>
    %c0_150 = arith.constant 0 : index
    %c0_151 = arith.constant 0 : index
    %c0_152 = arith.constant 0 : index
    %240 = vector.load %arg9[%c0_150, %c0_151, %c0_152] : memref<16x8x256xf32, #tpu.memory_space<vmem>>, vector<2x8x256xf32>
    %241 = vector.shape_cast %240 : vector<2x8x256xf32> to vector<16x256xf32>
    %242 = vector.extract_strided_slice %237 {offsets = [0, 8], sizes = [8, 16], strides = [1, 1]} : vector<8x24xf32> to vector<8x16xf32>
    %cst_153 = arith.constant dense<0.000000e+00> : vector<8x256xf32>
    %243 = tpu.matmul %242, %241, %cst_153 {dimension_numbers = #tpu.dot_dimension_numbers<[1], [0], [0], [1], [0, 0, 1, 1], [], []>} : vector<8x16xf32>, vector<16x256xf32>, vector<8x256xf32> -> vector<8x256xf32>
    %c0_154 = arith.constant 0 : index
    %c0_155 = arith.constant 0 : index
    %c0_156 = arith.constant 0 : index
    %c0_157 = arith.constant 0 : index
    %244 = vector.load %arg8[%c0_154, %c0_155, %c0_156, %c0_157] : memref<2x8x8x256xf32, #tpu.memory_space<vmem>>, vector<1x1x8x256xf32>
    %245 = vector.shape_cast %244 : vector<1x1x8x256xf32> to vector<8x256xf32>
    %246 = vector.shape_cast %243 : vector<8x256xf32> to vector<1x1x8x256xf32>
    tpu.vector_store %arg8[%c0_154, %c0_155, %c0_156, %c0_157], %246 {strides = array<i32>} : memref<2x8x8x256xf32, #tpu.memory_space<vmem>>, vector<1x1x8x256xf32>,
    %cst_158 = arith.constant dense<0.000000e+00> : vector<8xf32>
    %247 = vector.multi_reduction <add>, %243, %cst_158 [1] : vector<8x256xf32> to vector<8xf32>
    %248 = vector.shape_cast %247 : vector<8xf32> to vector<8x1xf32>
    %249 = arith.addf %238, %248 : vector<8x1xf32>
    %250 = arith.mulf %243, %243 : vector<8x256xf32>
    %cst_159 = arith.constant dense<0.000000e+00> : vector<8xf32>
    %251 = vector.multi_reduction <add>, %250, %cst_159 [1] : vector<8x256xf32> to vector<8xf32>
    %252 = vector.shape_cast %251 : vector<8xf32> to vector<8x1xf32>
    %253 = arith.addf %239, %252 : vector<8x1xf32>
    %c0_160 = arith.constant 0 : index
    %c0_161 = arith.constant 0 : index
    %c0_162 = arith.constant 0 : index
    %254 = vector.load %arg9[%c0_160, %c0_161, %c0_162] : memref<16x8x256xf32, #tpu.memory_space<vmem>>, vector<3x8x256xf32>
    %255 = vector.shape_cast %254 : vector<3x8x256xf32> to vector<24x256xf32>
    %cst_163 = arith.constant dense<0.000000e+00> : vector<8x256xf32>
    %256 = tpu.matmul %237, %255, %cst_163 {dimension_numbers = #tpu.dot_dimension_numbers<[1], [0], [0], [1], [0, 0, 1, 1], [], []>} : vector<8x24xf32>, vector<24x256xf32>, vector<8x256xf32> -> vector<8x256xf32>
    %c0_164 = arith.constant 0 : index
    %c1_165 = arith.constant 1 : index
    %c0_166 = arith.constant 0 : index
    %c0_167 = arith.constant 0 : index
    %257 = vector.load %arg8[%c0_164, %c1_165, %c0_166, %c0_167] : memref<2x8x8x256xf32, #tpu.memory_space<vmem>>, vector<1x1x8x256xf32>
    %258 = vector.shape_cast %257 : vector<1x1x8x256xf32> to vector<8x256xf32>
    %259 = vector.shape_cast %256 : vector<8x256xf32> to vector<1x1x8x256xf32>
    tpu.vector_store %arg8[%c0_164, %c1_165, %c0_166, %c0_167], %259 {strides = array<i32>} : memref<2x8x8x256xf32, #tpu.memory_space<vmem>>, vector<1x1x8x256xf32>,
    %cst_168 = arith.constant dense<0.000000e+00> : vector<8xf32>
    %260 = vector.multi_reduction <add>, %256, %cst_168 [1] : vector<8x256xf32> to vector<8xf32>
    %261 = vector.shape_cast %260 : vector<8xf32> to vector<8x1xf32>
    %262 = arith.addf %249, %261 : vector<8x1xf32>
    %263 = arith.mulf %256, %256 : vector<8x256xf32>
    %cst_169 = arith.constant dense<0.000000e+00> : vector<8xf32>
    %264 = vector.multi_reduction <add>, %263, %cst_169 [1] : vector<8x256xf32> to vector<8xf32>
    %265 = vector.shape_cast %264 : vector<8xf32> to vector<8x1xf32>
    %266 = arith.addf %253, %265 : vector<8x1xf32>
    %c1_170 = arith.constant 1 : index
    %c0_171 = arith.constant 0 : index
    %c0_172 = arith.constant 0 : index
    %267 = vector.load %arg9[%c1_170, %c0_171, %c0_172] : memref<16x8x256xf32, #tpu.memory_space<vmem>>, vector<3x8x256xf32>
    %268 = vector.shape_cast %267 : vector<3x8x256xf32> to vector<24x256xf32>
    %cst_173 = arith.constant dense<0.000000e+00> : vector<8x256xf32>
    %269 = tpu.matmul %237, %268, %cst_173 {dimension_numbers = #tpu.dot_dimension_numbers<[1], [0], [0], [1], [0, 0, 1, 1], [], []>} : vector<8x24xf32>, vector<24x256xf32>, vector<8x256xf32> -> vector<8x256xf32>
    %c0_174 = arith.constant 0 : index
    %c2_175 = arith.constant 2 : index
    %c0_176 = arith.constant 0 : index
    %c0_177 = arith.constant 0 : index
    %270 = vector.load %arg8[%c0_174, %c2_175, %c0_176, %c0_177] : memref<2x8x8x256xf32, #tpu.memory_space<vmem>>, vector<1x1x8x256xf32>
    %271 = vector.shape_cast %270 : vector<1x1x8x256xf32> to vector<8x256xf32>
    %272 = vector.shape_cast %269 : vector<8x256xf32> to vector<1x1x8x256xf32>
    tpu.vector_store %arg8[%c0_174, %c2_175, %c0_176, %c0_177], %272 {strides = array<i32>} : memref<2x8x8x256xf32, #tpu.memory_space<vmem>>, vector<1x1x8x256xf32>,
    %cst_178 = arith.constant dense<0.000000e+00> : vector<8xf32>
    %273 = vector.multi_reduction <add>, %269, %cst_178 [1] : vector<8x256xf32> to vector<8xf32>
    %274 = vector.shape_cast %273 : vector<8xf32> to vector<8x1xf32>
    %275 = arith.addf %262, %274 : vector<8x1xf32>
    %276 = arith.mulf %269, %269 : vector<8x256xf32>
    %cst_179 = arith.constant dense<0.000000e+00> : vector<8xf32>
    %277 = vector.multi_reduction <add>, %276, %cst_179 [1] : vector<8x256xf32> to vector<8xf32>
    %278 = vector.shape_cast %277 : vector<8xf32> to vector<8x1xf32>
    %279 = arith.addf %266, %278 : vector<8x1xf32>
    %c2_180 = arith.constant 2 : index
    %c0_181 = arith.constant 0 : index
    %c0_182 = arith.constant 0 : index
    %280 = vector.load %arg9[%c2_180, %c0_181, %c0_182] : memref<16x8x256xf32, #tpu.memory_space<vmem>>, vector<3x8x256xf32>
    %281 = vector.shape_cast %280 : vector<3x8x256xf32> to vector<24x256xf32>
    %cst_183 = arith.constant dense<0.000000e+00> : vector<8x256xf32>
    %282 = tpu.matmul %237, %281, %cst_183 {dimension_numbers = #tpu.dot_dimension_numbers<[1], [0], [0], [1], [0, 0, 1, 1], [], []>} : vector<8x24xf32>, vector<24x256xf32>, vector<8x256xf32> -> vector<8x256xf32>
    %c0_184 = arith.constant 0 : index
    %c3_185 = arith.constant 3 : index
    %c0_186 = arith.constant 0 : index
    %c0_187 = arith.constant 0 : index
    %283 = vector.load %arg8[%c0_184, %c3_185, %c0_186, %c0_187] : memref<2x8x8x256xf32, #tpu.memory_space<vmem>>, vector<1x1x8x256xf32>
    %284 = vector.shape_cast %283 : vector<1x1x8x256xf32> to vector<8x256xf32>
    %285 = vector.shape_cast %282 : vector<8x256xf32> to vector<1x1x8x256xf32>
    tpu.vector_store %arg8[%c0_184, %c3_185, %c0_186, %c0_187], %285 {strides = array<i32>} : memref<2x8x8x256xf32, #tpu.memory_space<vmem>>, vector<1x1x8x256xf32>,
    %cst_188 = arith.constant dense<0.000000e+00> : vector<8xf32>
    %286 = vector.multi_reduction <add>, %282, %cst_188 [1] : vector<8x256xf32> to vector<8xf32>
    %287 = vector.shape_cast %286 : vector<8xf32> to vector<8x1xf32>
    %288 = arith.addf %275, %287 : vector<8x1xf32>
    %289 = arith.mulf %282, %282 : vector<8x256xf32>
    %cst_189 = arith.constant dense<0.000000e+00> : vector<8xf32>
    %290 = vector.multi_reduction <add>, %289, %cst_189 [1] : vector<8x256xf32> to vector<8xf32>
    %291 = vector.shape_cast %290 : vector<8xf32> to vector<8x1xf32>
    %292 = arith.addf %279, %291 : vector<8x1xf32>
    %c3_190 = arith.constant 3 : index
    %c0_191 = arith.constant 0 : index
    %c0_192 = arith.constant 0 : index
    %293 = vector.load %arg9[%c3_190, %c0_191, %c0_192] : memref<16x8x256xf32, #tpu.memory_space<vmem>>, vector<3x8x256xf32>
    %294 = vector.shape_cast %293 : vector<3x8x256xf32> to vector<24x256xf32>
    %cst_193 = arith.constant dense<0.000000e+00> : vector<8x256xf32>
    %295 = tpu.matmul %237, %294, %cst_193 {dimension_numbers = #tpu.dot_dimension_numbers<[1], [0], [0], [1], [0, 0, 1, 1], [], []>} : vector<8x24xf32>, vector<24x256xf32>, vector<8x256xf32> -> vector<8x256xf32>
    %c0_194 = arith.constant 0 : index
    %c4_195 = arith.constant 4 : index
    %c0_196 = arith.constant 0 : index
    %c0_197 = arith.constant 0 : index
    %296 = vector.load %arg8[%c0_194, %c4_195, %c0_196, %c0_197] : memref<2x8x8x256xf32, #tpu.memory_space<vmem>>, vector<1x1x8x256xf32>
    %297 = vector.shape_cast %296 : vector<1x1x8x256xf32> to vector<8x256xf32>
    %298 = vector.shape_cast %295 : vector<8x256xf32> to vector<1x1x8x256xf32>
    tpu.vector_store %arg8[%c0_194, %c4_195, %c0_196, %c0_197], %298 {strides = array<i32>} : memref<2x8x8x256xf32, #tpu.memory_space<vmem>>, vector<1x1x8x256xf32>,
    %cst_198 = arith.constant dense<0.000000e+00> : vector<8xf32>
    %299 = vector.multi_reduction <add>, %295, %cst_198 [1] : vector<8x256xf32> to vector<8xf32>
    %300 = vector.shape_cast %299 : vector<8xf32> to vector<8x1xf32>
    %301 = arith.addf %288, %300 : vector<8x1xf32>
    %302 = arith.mulf %295, %295 : vector<8x256xf32>
    %cst_199 = arith.constant dense<0.000000e+00> : vector<8xf32>
    %303 = vector.multi_reduction <add>, %302, %cst_199 [1] : vector<8x256xf32> to vector<8xf32>
    %304 = vector.shape_cast %303 : vector<8xf32> to vector<8x1xf32>
    %305 = arith.addf %292, %304 : vector<8x1xf32>
    %c4_200 = arith.constant 4 : index
    %c0_201 = arith.constant 0 : index
    %c0_202 = arith.constant 0 : index
    %306 = vector.load %arg9[%c4_200, %c0_201, %c0_202] : memref<16x8x256xf32, #tpu.memory_space<vmem>>, vector<3x8x256xf32>
    %307 = vector.shape_cast %306 : vector<3x8x256xf32> to vector<24x256xf32>
    %cst_203 = arith.constant dense<0.000000e+00> : vector<8x256xf32>
    %308 = tpu.matmul %237, %307, %cst_203 {dimension_numbers = #tpu.dot_dimension_numbers<[1], [0], [0], [1], [0, 0, 1, 1], [], []>} : vector<8x24xf32>, vector<24x256xf32>, vector<8x256xf32> -> vector<8x256xf32>
    %c0_204 = arith.constant 0 : index
    %c5_205 = arith.constant 5 : index
    %c0_206 = arith.constant 0 : index
    %c0_207 = arith.constant 0 : index
    %309 = vector.load %arg8[%c0_204, %c5_205, %c0_206, %c0_207] : memref<2x8x8x256xf32, #tpu.memory_space<vmem>>, vector<1x1x8x256xf32>
    %310 = vector.shape_cast %309 : vector<1x1x8x256xf32> to vector<8x256xf32>
    %311 = vector.shape_cast %308 : vector<8x256xf32> to vector<1x1x8x256xf32>
    tpu.vector_store %arg8[%c0_204, %c5_205, %c0_206, %c0_207], %311 {strides = array<i32>} : memref<2x8x8x256xf32, #tpu.memory_space<vmem>>, vector<1x1x8x256xf32>,
    %cst_208 = arith.constant dense<0.000000e+00> : vector<8xf32>
    %312 = vector.multi_reduction <add>, %308, %cst_208 [1] : vector<8x256xf32> to vector<8xf32>
    %313 = vector.shape_cast %312 : vector<8xf32> to vector<8x1xf32>
    %314 = arith.addf %301, %313 : vector<8x1xf32>
    %315 = arith.mulf %308, %308 : vector<8x256xf32>
    %cst_209 = arith.constant dense<0.000000e+00> : vector<8xf32>
    %316 = vector.multi_reduction <add>, %315, %cst_209 [1] : vector<8x256xf32> to vector<8xf32>
    %317 = vector.shape_cast %316 : vector<8xf32> to vector<8x1xf32>
    %318 = arith.addf %305, %317 : vector<8x1xf32>
    %c5_210 = arith.constant 5 : index
    %c0_211 = arith.constant 0 : index
    %c0_212 = arith.constant 0 : index
    %319 = vector.load %arg9[%c5_210, %c0_211, %c0_212] : memref<16x8x256xf32, #tpu.memory_space<vmem>>, vector<3x8x256xf32>
    %320 = vector.shape_cast %319 : vector<3x8x256xf32> to vector<24x256xf32>
    %cst_213 = arith.constant dense<0.000000e+00> : vector<8x256xf32>
    %321 = tpu.matmul %237, %320, %cst_213 {dimension_numbers = #tpu.dot_dimension_numbers<[1], [0], [0], [1], [0, 0, 1, 1], [], []>} : vector<8x24xf32>, vector<24x256xf32>, vector<8x256xf32> -> vector<8x256xf32>
    %c0_214 = arith.constant 0 : index
    %c6_215 = arith.constant 6 : index
    %c0_216 = arith.constant 0 : index
    %c0_217 = arith.constant 0 : index
    %322 = vector.load %arg8[%c0_214, %c6_215, %c0_216, %c0_217] : memref<2x8x8x256xf32, #tpu.memory_space<vmem>>, vector<1x1x8x256xf32>
    %323 = vector.shape_cast %322 : vector<1x1x8x256xf32> to vector<8x256xf32>
    %324 = vector.shape_cast %321 : vector<8x256xf32> to vector<1x1x8x256xf32>
    tpu.vector_store %arg8[%c0_214, %c6_215, %c0_216, %c0_217], %324 {strides = array<i32>} : memref<2x8x8x256xf32, #tpu.memory_space<vmem>>, vector<1x1x8x256xf32>,
    %cst_218 = arith.constant dense<0.000000e+00> : vector<8xf32>
    %325 = vector.multi_reduction <add>, %321, %cst_218 [1] : vector<8x256xf32> to vector<8xf32>
    %326 = vector.shape_cast %325 : vector<8xf32> to vector<8x1xf32>
    %327 = arith.addf %314, %326 : vector<8x1xf32>
    %328 = arith.mulf %321, %321 : vector<8x256xf32>
    %cst_219 = arith.constant dense<0.000000e+00> : vector<8xf32>
    %329 = vector.multi_reduction <add>, %328, %cst_219 [1] : vector<8x256xf32> to vector<8xf32>
    %330 = vector.shape_cast %329 : vector<8xf32> to vector<8x1xf32>
    %331 = arith.addf %318, %330 : vector<8x1xf32>
    %c6_220 = arith.constant 6 : index
    %c0_221 = arith.constant 0 : index
    %c0_222 = arith.constant 0 : index
    %332 = vector.load %arg9[%c6_220, %c0_221, %c0_222] : memref<16x8x256xf32, #tpu.memory_space<vmem>>, vector<2x8x256xf32>
    %333 = vector.shape_cast %332 : vector<2x8x256xf32> to vector<16x256xf32>
    %334 = vector.extract_strided_slice %237 {offsets = [0, 0], sizes = [8, 16], strides = [1, 1]} : vector<8x24xf32> to vector<8x16xf32>
    %cst_223 = arith.constant dense<0.000000e+00> : vector<8x256xf32>
    %335 = tpu.matmul %334, %333, %cst_223 {dimension_numbers = #tpu.dot_dimension_numbers<[1], [0], [0], [1], [0, 0, 1, 1], [], []>} : vector<8x16xf32>, vector<16x256xf32>, vector<8x256xf32> -> vector<8x256xf32>
    %c0_224 = arith.constant 0 : index
    %c7_225 = arith.constant 7 : index
    %c0_226 = arith.constant 0 : index
    %c0_227 = arith.constant 0 : index
    %336 = vector.load %arg8[%c0_224, %c7_225, %c0_226, %c0_227] : memref<2x8x8x256xf32, #tpu.memory_space<vmem>>, vector<1x1x8x256xf32>
    %337 = vector.shape_cast %336 : vector<1x1x8x256xf32> to vector<8x256xf32>
    %338 = vector.shape_cast %335 : vector<8x256xf32> to vector<1x1x8x256xf32>
    tpu.vector_store %arg8[%c0_224, %c7_225, %c0_226, %c0_227], %338 {strides = array<i32>} : memref<2x8x8x256xf32, #tpu.memory_space<vmem>>, vector<1x1x8x256xf32>,
    %cst_228 = arith.constant dense<0.000000e+00> : vector<8xf32>
    %339 = vector.multi_reduction <add>, %335, %cst_228 [1] : vector<8x256xf32> to vector<8xf32>
    %340 = vector.shape_cast %339 : vector<8xf32> to vector<8x1xf32>
    %341 = arith.addf %327, %340 : vector<8x1xf32>
    %342 = arith.mulf %335, %335 : vector<8x256xf32>
    %cst_229 = arith.constant dense<0.000000e+00> : vector<8xf32>
    %343 = vector.multi_reduction <add>, %342, %cst_229 [1] : vector<8x256xf32> to vector<8xf32>
    %344 = vector.shape_cast %343 : vector<8xf32> to vector<8x1xf32>
    %345 = arith.addf %331, %344 : vector<8x1xf32>
    %c8_230 = arith.constant 8 : index
    %c0_231 = arith.constant 0 : index
    %c0_232 = arith.constant 0 : index
    %346 = vector.load %arg9[%c8_230, %c0_231, %c0_232] : memref<16x8x256xf32, #tpu.memory_space<vmem>>, vector<2x8x256xf32>
    %347 = vector.shape_cast %346 : vector<2x8x256xf32> to vector<16x256xf32>
    %348 = vector.extract_strided_slice %237 {offsets = [0, 8], sizes = [8, 16], strides = [1, 1]} : vector<8x24xf32> to vector<8x16xf32>
    %cst_233 = arith.constant dense<0.000000e+00> : vector<8x256xf32>
    %349 = tpu.matmul %348, %347, %cst_233 {dimension_numbers = #tpu.dot_dimension_numbers<[1], [0], [0], [1], [0, 0, 1, 1], [], []>} : vector<8x16xf32>, vector<16x256xf32>, vector<8x256xf32> -> vector<8x256xf32>
    %c1_234 = arith.constant 1 : index
    %c0_235 = arith.constant 0 : index
    %c0_236 = arith.constant 0 : index
    %c0_237 = arith.constant 0 : index
    %350 = vector.load %arg8[%c1_234, %c0_235, %c0_236, %c0_237] : memref<2x8x8x256xf32, #tpu.memory_space<vmem>>, vector<1x1x8x256xf32>
    %351 = vector.shape_cast %350 : vector<1x1x8x256xf32> to vector<8x256xf32>
    %352 = vector.shape_cast %349 : vector<8x256xf32> to vector<1x1x8x256xf32>
    tpu.vector_store %arg8[%c1_234, %c0_235, %c0_236, %c0_237], %352 {strides = array<i32>} : memref<2x8x8x256xf32, #tpu.memory_space<vmem>>, vector<1x1x8x256xf32>,
    %cst_238 = arith.constant dense<0.000000e+00> : vector<8xf32>
    %353 = vector.multi_reduction <add>, %349, %cst_238 [1] : vector<8x256xf32> to vector<8xf32>
    %354 = vector.shape_cast %353 : vector<8xf32> to vector<8x1xf32>
    %355 = arith.addf %341, %354 : vector<8x1xf32>
    %356 = arith.mulf %349, %349 : vector<8x256xf32>
    %cst_239 = arith.constant dense<0.000000e+00> : vector<8xf32>
    %357 = vector.multi_reduction <add>, %356, %cst_239 [1] : vector<8x256xf32> to vector<8xf32>
    %358 = vector.shape_cast %357 : vector<8xf32> to vector<8x1xf32>
    %359 = arith.addf %345, %358 : vector<8x1xf32>
    %c8_240 = arith.constant 8 : index
    %c0_241 = arith.constant 0 : index
    %c0_242 = arith.constant 0 : index
    %360 = vector.load %arg9[%c8_240, %c0_241, %c0_242] : memref<16x8x256xf32, #tpu.memory_space<vmem>>, vector<3x8x256xf32>
    %361 = vector.shape_cast %360 : vector<3x8x256xf32> to vector<24x256xf32>
    %cst_243 = arith.constant dense<0.000000e+00> : vector<8x256xf32>
    %362 = tpu.matmul %237, %361, %cst_243 {dimension_numbers = #tpu.dot_dimension_numbers<[1], [0], [0], [1], [0, 0, 1, 1], [], []>} : vector<8x24xf32>, vector<24x256xf32>, vector<8x256xf32> -> vector<8x256xf32>
    %c1_244 = arith.constant 1 : index
    %c1_245 = arith.constant 1 : index
    %c0_246 = arith.constant 0 : index
    %c0_247 = arith.constant 0 : index
    %363 = vector.load %arg8[%c1_244, %c1_245, %c0_246, %c0_247] : memref<2x8x8x256xf32, #tpu.memory_space<vmem>>, vector<1x1x8x256xf32>
    %364 = vector.shape_cast %363 : vector<1x1x8x256xf32> to vector<8x256xf32>
    %365 = vector.shape_cast %362 : vector<8x256xf32> to vector<1x1x8x256xf32>
    tpu.vector_store %arg8[%c1_244, %c1_245, %c0_246, %c0_247], %365 {strides = array<i32>} : memref<2x8x8x256xf32, #tpu.memory_space<vmem>>, vector<1x1x8x256xf32>,
    %cst_248 = arith.constant dense<0.000000e+00> : vector<8xf32>
    %366 = vector.multi_reduction <add>, %362, %cst_248 [1] : vector<8x256xf32> to vector<8xf32>
    %367 = vector.shape_cast %366 : vector<8xf32> to vector<8x1xf32>
    %368 = arith.addf %355, %367 : vector<8x1xf32>
    %369 = arith.mulf %362, %362 : vector<8x256xf32>
    %cst_249 = arith.constant dense<0.000000e+00> : vector<8xf32>
    %370 = vector.multi_reduction <add>, %369, %cst_249 [1] : vector<8x256xf32> to vector<8xf32>
    %371 = vector.shape_cast %370 : vector<8xf32> to vector<8x1xf32>
    %372 = arith.addf %359, %371 : vector<8x1xf32>
    %c9_250 = arith.constant 9 : index
    %c0_251 = arith.constant 0 : index
    %c0_252 = arith.constant 0 : index
    %373 = vector.load %arg9[%c9_250, %c0_251, %c0_252] : memref<16x8x256xf32, #tpu.memory_space<vmem>>, vector<3x8x256xf32>
    %374 = vector.shape_cast %373 : vector<3x8x256xf32> to vector<24x256xf32>
    %cst_253 = arith.constant dense<0.000000e+00> : vector<8x256xf32>
    %375 = tpu.matmul %237, %374, %cst_253 {dimension_numbers = #tpu.dot_dimension_numbers<[1], [0], [0], [1], [0, 0, 1, 1], [], []>} : vector<8x24xf32>, vector<24x256xf32>, vector<8x256xf32> -> vector<8x256xf32>
    %c1_254 = arith.constant 1 : index
    %c2_255 = arith.constant 2 : index
    %c0_256 = arith.constant 0 : index
    %c0_257 = arith.constant 0 : index
    %376 = vector.load %arg8[%c1_254, %c2_255, %c0_256, %c0_257] : memref<2x8x8x256xf32, #tpu.memory_space<vmem>>, vector<1x1x8x256xf32>
    %377 = vector.shape_cast %376 : vector<1x1x8x256xf32> to vector<8x256xf32>
    %378 = vector.shape_cast %375 : vector<8x256xf32> to vector<1x1x8x256xf32>
    tpu.vector_store %arg8[%c1_254, %c2_255, %c0_256, %c0_257], %378 {strides = array<i32>} : memref<2x8x8x256xf32, #tpu.memory_space<vmem>>, vector<1x1x8x256xf32>,
    %cst_258 = arith.constant dense<0.000000e+00> : vector<8xf32>
    %379 = vector.multi_reduction <add>, %375, %cst_258 [1] : vector<8x256xf32> to vector<8xf32>
    %380 = vector.shape_cast %379 : vector<8xf32> to vector<8x1xf32>
    %381 = arith.addf %368, %380 : vector<8x1xf32>
    %382 = arith.mulf %375, %375 : vector<8x256xf32>
    %cst_259 = arith.constant dense<0.000000e+00> : vector<8xf32>
    %383 = vector.multi_reduction <add>, %382, %cst_259 [1] : vector<8x256xf32> to vector<8xf32>
    %384 = vector.shape_cast %383 : vector<8xf32> to vector<8x1xf32>
    %385 = arith.addf %372, %384 : vector<8x1xf32>
    %c10_260 = arith.constant 10 : index
    %c0_261 = arith.constant 0 : index
    %c0_262 = arith.constant 0 : index
    %386 = vector.load %arg9[%c10_260, %c0_261, %c0_262] : memref<16x8x256xf32, #tpu.memory_space<vmem>>, vector<3x8x256xf32>
    %387 = vector.shape_cast %386 : vector<3x8x256xf32> to vector<24x256xf32>
    %cst_263 = arith.constant dense<0.000000e+00> : vector<8x256xf32>
    %388 = tpu.matmul %237, %387, %cst_263 {dimension_numbers = #tpu.dot_dimension_numbers<[1], [0], [0], [1], [0, 0, 1, 1], [], []>} : vector<8x24xf32>, vector<24x256xf32>, vector<8x256xf32> -> vector<8x256xf32>
    %c1_264 = arith.constant 1 : index
    %c3_265 = arith.constant 3 : index
    %c0_266 = arith.constant 0 : index
    %c0_267 = arith.constant 0 : index
    %389 = vector.load %arg8[%c1_264, %c3_265, %c0_266, %c0_267] : memref<2x8x8x256xf32, #tpu.memory_space<vmem>>, vector<1x1x8x256xf32>
    %390 = vector.shape_cast %389 : vector<1x1x8x256xf32> to vector<8x256xf32>
    %391 = vector.shape_cast %388 : vector<8x256xf32> to vector<1x1x8x256xf32>
    tpu.vector_store %arg8[%c1_264, %c3_265, %c0_266, %c0_267], %391 {strides = array<i32>} : memref<2x8x8x256xf32, #tpu.memory_space<vmem>>, vector<1x1x8x256xf32>,
    %cst_268 = arith.constant dense<0.000000e+00> : vector<8xf32>
    %392 = vector.multi_reduction <add>, %388, %cst_268 [1] : vector<8x256xf32> to vector<8xf32>
    %393 = vector.shape_cast %392 : vector<8xf32> to vector<8x1xf32>
    %394 = arith.addf %381, %393 : vector<8x1xf32>
    %395 = arith.mulf %388, %388 : vector<8x256xf32>
    %cst_269 = arith.constant dense<0.000000e+00> : vector<8xf32>
    %396 = vector.multi_reduction <add>, %395, %cst_269 [1] : vector<8x256xf32> to vector<8xf32>
    %397 = vector.shape_cast %396 : vector<8xf32> to vector<8x1xf32>
    %398 = arith.addf %385, %397 : vector<8x1xf32>
    %c11_270 = arith.constant 11 : index
    %c0_271 = arith.constant 0 : index
    %c0_272 = arith.constant 0 : index
    %399 = vector.load %arg9[%c11_270, %c0_271, %c0_272] : memref<16x8x256xf32, #tpu.memory_space<vmem>>, vector<3x8x256xf32>
    %400 = vector.shape_cast %399 : vector<3x8x256xf32> to vector<24x256xf32>
    %cst_273 = arith.constant dense<0.000000e+00> : vector<8x256xf32>
    %401 = tpu.matmul %237, %400, %cst_273 {dimension_numbers = #tpu.dot_dimension_numbers<[1], [0], [0], [1], [0, 0, 1, 1], [], []>} : vector<8x24xf32>, vector<24x256xf32>, vector<8x256xf32> -> vector<8x256xf32>
    %c1_274 = arith.constant 1 : index
    %c4_275 = arith.constant 4 : index
    %c0_276 = arith.constant 0 : index
    %c0_277 = arith.constant 0 : index
    %402 = vector.load %arg8[%c1_274, %c4_275, %c0_276, %c0_277] : memref<2x8x8x256xf32, #tpu.memory_space<vmem>>, vector<1x1x8x256xf32>
    %403 = vector.shape_cast %402 : vector<1x1x8x256xf32> to vector<8x256xf32>
    %404 = vector.shape_cast %401 : vector<8x256xf32> to vector<1x1x8x256xf32>
    tpu.vector_store %arg8[%c1_274, %c4_275, %c0_276, %c0_277], %404 {strides = array<i32>} : memref<2x8x8x256xf32, #tpu.memory_space<vmem>>, vector<1x1x8x256xf32>,
    %cst_278 = arith.constant dense<0.000000e+00> : vector<8xf32>
    %405 = vector.multi_reduction <add>, %401, %cst_278 [1] : vector<8x256xf32> to vector<8xf32>
    %406 = vector.shape_cast %405 : vector<8xf32> to vector<8x1xf32>
    %407 = arith.addf %394, %406 : vector<8x1xf32>
    %408 = arith.mulf %401, %401 : vector<8x256xf32>
    %cst_279 = arith.constant dense<0.000000e+00> : vector<8xf32>
    %409 = vector.multi_reduction <add>, %408, %cst_279 [1] : vector<8x256xf32> to vector<8xf32>
    %410 = vector.shape_cast %409 : vector<8xf32> to vector<8x1xf32>
    %411 = arith.addf %398, %410 : vector<8x1xf32>
    %c12_280 = arith.constant 12 : index
    %c0_281 = arith.constant 0 : index
    %c0_282 = arith.constant 0 : index
    %412 = vector.load %arg9[%c12_280, %c0_281, %c0_282] : memref<16x8x256xf32, #tpu.memory_space<vmem>>, vector<3x8x256xf32>
    %413 = vector.shape_cast %412 : vector<3x8x256xf32> to vector<24x256xf32>
    %cst_283 = arith.constant dense<0.000000e+00> : vector<8x256xf32>
    %414 = tpu.matmul %237, %413, %cst_283 {dimension_numbers = #tpu.dot_dimension_numbers<[1], [0], [0], [1], [0, 0, 1, 1], [], []>} : vector<8x24xf32>, vector<24x256xf32>, vector<8x256xf32> -> vector<8x256xf32>
    %c1_284 = arith.constant 1 : index
    %c5_285 = arith.constant 5 : index
    %c0_286 = arith.constant 0 : index
    %c0_287 = arith.constant 0 : index
    %415 = vector.load %arg8[%c1_284, %c5_285, %c0_286, %c0_287] : memref<2x8x8x256xf32, #tpu.memory_space<vmem>>, vector<1x1x8x256xf32>
    %416 = vector.shape_cast %415 : vector<1x1x8x256xf32> to vector<8x256xf32>
    %417 = vector.shape_cast %414 : vector<8x256xf32> to vector<1x1x8x256xf32>
    tpu.vector_store %arg8[%c1_284, %c5_285, %c0_286, %c0_287], %417 {strides = array<i32>} : memref<2x8x8x256xf32, #tpu.memory_space<vmem>>, vector<1x1x8x256xf32>,
    %cst_288 = arith.constant dense<0.000000e+00> : vector<8xf32>
    %418 = vector.multi_reduction <add>, %414, %cst_288 [1] : vector<8x256xf32> to vector<8xf32>
    %419 = vector.shape_cast %418 : vector<8xf32> to vector<8x1xf32>
    %420 = arith.addf %407, %419 : vector<8x1xf32>
    %421 = arith.mulf %414, %414 : vector<8x256xf32>
    %cst_289 = arith.constant dense<0.000000e+00> : vector<8xf32>
    %422 = vector.multi_reduction <add>, %421, %cst_289 [1] : vector<8x256xf32> to vector<8xf32>
    %423 = vector.shape_cast %422 : vector<8xf32> to vector<8x1xf32>
    %424 = arith.addf %411, %423 : vector<8x1xf32>
    %c13_290 = arith.constant 13 : index
    %c0_291 = arith.constant 0 : index
    %c0_292 = arith.constant 0 : index
    %425 = vector.load %arg9[%c13_290, %c0_291, %c0_292] : memref<16x8x256xf32, #tpu.memory_space<vmem>>, vector<3x8x256xf32>
    %426 = vector.shape_cast %425 : vector<3x8x256xf32> to vector<24x256xf32>
    %cst_293 = arith.constant dense<0.000000e+00> : vector<8x256xf32>
    %427 = tpu.matmul %237, %426, %cst_293 {dimension_numbers = #tpu.dot_dimension_numbers<[1], [0], [0], [1], [0, 0, 1, 1], [], []>} : vector<8x24xf32>, vector<24x256xf32>, vector<8x256xf32> -> vector<8x256xf32>
    %c1_294 = arith.constant 1 : index
    %c6_295 = arith.constant 6 : index
    %c0_296 = arith.constant 0 : index
    %c0_297 = arith.constant 0 : index
    %428 = vector.load %arg8[%c1_294, %c6_295, %c0_296, %c0_297] : memref<2x8x8x256xf32, #tpu.memory_space<vmem>>, vector<1x1x8x256xf32>
    %429 = vector.shape_cast %428 : vector<1x1x8x256xf32> to vector<8x256xf32>
    %430 = vector.shape_cast %427 : vector<8x256xf32> to vector<1x1x8x256xf32>
    tpu.vector_store %arg8[%c1_294, %c6_295, %c0_296, %c0_297], %430 {strides = array<i32>} : memref<2x8x8x256xf32, #tpu.memory_space<vmem>>, vector<1x1x8x256xf32>,
    %cst_298 = arith.constant dense<0.000000e+00> : vector<8xf32>
    %431 = vector.multi_reduction <add>, %427, %cst_298 [1] : vector<8x256xf32> to vector<8xf32>
    %432 = vector.shape_cast %431 : vector<8xf32> to vector<8x1xf32>
    %433 = arith.addf %420, %432 : vector<8x1xf32>
    %434 = arith.mulf %427, %427 : vector<8x256xf32>
    %cst_299 = arith.constant dense<0.000000e+00> : vector<8xf32>
    %435 = vector.multi_reduction <add>, %434, %cst_299 [1] : vector<8x256xf32> to vector<8xf32>
    %436 = vector.shape_cast %435 : vector<8xf32> to vector<8x1xf32>
    %437 = arith.addf %424, %436 : vector<8x1xf32>
    %c14_300 = arith.constant 14 : index
    %c0_301 = arith.constant 0 : index
    %c0_302 = arith.constant 0 : index
    %438 = vector.load %arg9[%c14_300, %c0_301, %c0_302] : memref<16x8x256xf32, #tpu.memory_space<vmem>>, vector<2x8x256xf32>
    %439 = vector.shape_cast %438 : vector<2x8x256xf32> to vector<16x256xf32>
    %440 = vector.extract_strided_slice %237 {offsets = [0, 0], sizes = [8, 16], strides = [1, 1]} : vector<8x24xf32> to vector<8x16xf32>
    %cst_303 = arith.constant dense<0.000000e+00> : vector<8x256xf32>
    %441 = tpu.matmul %440, %439, %cst_303 {dimension_numbers = #tpu.dot_dimension_numbers<[1], [0], [0], [1], [0, 0, 1, 1], [], []>} : vector<8x16xf32>, vector<16x256xf32>, vector<8x256xf32> -> vector<8x256xf32>
    %c1_304 = arith.constant 1 : index
    %c7_305 = arith.constant 7 : index
    %c0_306 = arith.constant 0 : index
    %c0_307 = arith.constant 0 : index
    %442 = vector.load %arg8[%c1_304, %c7_305, %c0_306, %c0_307] : memref<2x8x8x256xf32, #tpu.memory_space<vmem>>, vector<1x1x8x256xf32>
    %443 = vector.shape_cast %442 : vector<1x1x8x256xf32> to vector<8x256xf32>
    %444 = vector.shape_cast %441 : vector<8x256xf32> to vector<1x1x8x256xf32>
    tpu.vector_store %arg8[%c1_304, %c7_305, %c0_306, %c0_307], %444 {strides = array<i32>} : memref<2x8x8x256xf32, #tpu.memory_space<vmem>>, vector<1x1x8x256xf32>,
    %cst_308 = arith.constant dense<0.000000e+00> : vector<8xf32>
    %445 = vector.multi_reduction <add>, %441, %cst_308 [1] : vector<8x256xf32> to vector<8xf32>
    %446 = vector.shape_cast %445 : vector<8xf32> to vector<8x1xf32>
    %447 = arith.addf %433, %446 : vector<8x1xf32>
    %448 = arith.mulf %441, %441 : vector<8x256xf32>
    %cst_309 = arith.constant dense<0.000000e+00> : vector<8xf32>
    %449 = vector.multi_reduction <add>, %448, %cst_309 [1] : vector<8x256xf32> to vector<8xf32>
    %450 = vector.shape_cast %449 : vector<8xf32> to vector<8x1xf32>
    %451 = arith.addf %437, %450 : vector<8x1xf32>
    %cst_310 = arith.constant 2.44140625E-4 : f32
    %452 = vector.broadcast %cst_310 : f32 to vector<8x1xf32>
    %453 = arith.mulf %447, %452 : vector<8x1xf32>
    %cst_311 = arith.constant 2.44140625E-4 : f32
    %454 = vector.broadcast %cst_311 : f32 to vector<8x1xf32>
    %455 = arith.mulf %451, %454 : vector<8x1xf32>
    %456 = arith.mulf %453, %453 : vector<8x1xf32>
    %457 = arith.subf %455, %456 : vector<8x1xf32>
    %cst_312 = arith.constant 0.000000e+00 : f32
    %458 = vector.broadcast %cst_312 : f32 to vector<8x1xf32>
    %459 = arith.maximumf %457, %458 : vector<8x1xf32>
    %c0_313 = arith.constant 0 : index
    %c0_314 = arith.constant 0 : index
    %460 = vector.load %arg6[%c0_313, %c0_314] : memref<8x1xf32, #tpu.memory_space<vmem>>, vector<8x1xf32>
    %cst_315 = arith.constant 9.99999974E-6 : f32
    %461 = vector.broadcast %cst_315 : f32 to vector<8x1xf32>
    %462 = arith.addf %459, %461 : vector<8x1xf32>
    %463 = math.rsqrt %462 : vector<8x1xf32>
    %464 = arith.mulf %460, %463 : vector<8x1xf32>
    %c0_316 = arith.constant 0 : index
    %c0_317 = arith.constant 0 : index
    %465 = vector.load %arg7[%c0_316, %c0_317] : memref<8x1xf32, #tpu.memory_space<vmem>>, vector<8x1xf32>
    %466 = arith.mulf %453, %464 : vector<8x1xf32>
    %467 = arith.subf %465, %466 : vector<8x1xf32>
    %c0_318 = arith.constant 0 : index
    %c0_319 = arith.constant 0 : index
    %c0_320 = arith.constant 0 : index
    %c0_321 = arith.constant 0 : index
    %468 = vector.load %arg8[%c0_318, %c0_319, %c0_320, %c0_321] : memref<2x8x8x256xf32, #tpu.memory_space<vmem>>, vector<2x8x8x256xf32>
    %469 = vector.shape_cast %464 : vector<8x1xf32> to vector<1x1x8x1xf32>
    %470 = vector.broadcast %469 : vector<1x1x8x1xf32> to vector<2x8x8x256xf32>
    %471 = arith.mulf %468, %470 : vector<2x8x8x256xf32>
    %472 = vector.shape_cast %467 : vector<8x1xf32> to vector<1x1x8x1xf32>
    %473 = vector.broadcast %472 : vector<1x1x8x1xf32> to vector<2x8x8x256xf32>
    %474 = arith.addf %471, %473 : vector<2x8x8x256xf32>
    %cst_322 = arith.constant 0.000000e+00 : f32
    %475 = vector.broadcast %cst_322 : f32 to vector<2x8x8x256xf32>
    %476 = arith.maximumf %474, %475 : vector<2x8x8x256xf32>
    %c0_323 = arith.constant 0 : index
    %c0_324 = arith.constant 0 : index
    %c0_325 = arith.constant 0 : index
    %c0_326 = arith.constant 0 : index
    %477 = vector.load %arg8[%c0_323, %c0_324, %c0_325, %c0_326] : memref<2x8x8x256xf32, #tpu.memory_space<vmem>>, vector<2x8x8x256xf32>
    tpu.vector_store %arg8[%c0_323, %c0_324, %c0_325, %c0_326], %476 {strides = array<i32>} : memref<2x8x8x256xf32, #tpu.memory_space<vmem>>, vector<2x8x8x256xf32>,
    return
  }
  func.func @transform_0(%arg0: i32) -> (i32, i32, i32) {
    %c0_i32 = arith.constant 0 : i32
    %c0_i32_0 = arith.constant 0 : i32
    %c0_i32_1 = arith.constant 0 : i32
    %c0_i32_2 = arith.constant 0 : i32
    return %c0_i32, %c0_i32_0, %c0_i32_1 : i32, i32, i32
  }
  func.func @transform_1(%arg0: i32) -> (i32, i32) {
    %c0_i32 = arith.constant 0 : i32
    %c0_i32_0 = arith.constant 0 : i32
    %c0_i32_1 = arith.constant 0 : i32
    return %c0_i32, %c0_i32_0 : i32, i32
  }
  func.func @transform_2(%arg0: i32) -> (i32, i32) {
    %c0_i32 = arith.constant 0 : i32
    %c0_i32_0 = arith.constant 0 : i32
    %c0_i32_1 = arith.constant 0 : i32
    return %c0_i32, %c0_i32_0 : i32, i32
  }
  func.func @transform_3(%arg0: i32) -> (i32, i32) {
    %c0_i32 = arith.constant 0 : i32
    %c0_i32_0 = arith.constant 0 : i32
    %c0_i32_1 = arith.constant 0 : i32
    return %c0_i32, %c0_i32_0 : i32, i32
  }
  func.func @transform_4(%arg0: i32) -> (i32, i32) {
    %c0_i32 = arith.constant 0 : i32
    %c0_i32_0 = arith.constant 0 : i32
    %c0_i32_1 = arith.constant 0 : i32
    return %c0_i32, %c0_i32_0 : i32, i32
  }
  func.func @transform_5(%arg0: i32) -> (i32, i32) {
    %c0_i32 = arith.constant 0 : i32
    %c0_i32_0 = arith.constant 0 : i32
    %c0_i32_1 = arith.constant 0 : i32
    return %c0_i32, %c0_i32_0 : i32, i32
  }
  func.func @transform_6(%arg0: i32) -> (i32, i32) {
    %c0_i32 = arith.constant 0 : i32
    %c0_i32_0 = arith.constant 0 : i32
    %c0_i32_1 = arith.constant 0 : i32
    return %c0_i32, %c0_i32_0 : i32, i32
  }
  func.func @transform_7(%arg0: i32) -> (i32, i32, i32, i32) {
    %c0_i32 = arith.constant 0 : i32
    %c0_i32_0 = arith.constant 0 : i32
    %c0_i32_1 = arith.constant 0 : i32
    %c0_i32_2 = arith.constant 0 : i32
    %c0_i32_3 = arith.constant 0 : i32
    return %c0_i32, %c0_i32_0, %c0_i32_1, %c0_i32_2 : i32, i32, i32, i32
  }
}

</mosaic_0001>

<llo_original>
// kernel: r2plus1d_forward.1
$region0: #{r2plus1d_forward.1}
  #allocation0 [shape = 'u32[]', space=smem, size = 0x4, offset = 0x4, fixed_abs, tag = 'smem constant byte address 0x4 - core index']
  #allocation1 [shape = 'u32[144,128]{1,0:T(1,128)}', space=vmem, size = 0x12000, scoped, tag = 'internal scratch']
  #allocation2 [shape = 'f32[16,8,256]{2,1,0:T(8,128)}', space=vmem, size = 0x20000, scoped, tag = 'scratch operand']
  %s0 = inlined_call_operand.vmem [shape: f32[16,36,256], index: 0, kind: input, shape index: {}]
  %s1 = inlined_call_operand.vmem [shape: f32[8,36], index: 1, kind: input, shape index: {}]
  %s2 = inlined_call_operand.vmem [shape: f32[8,24], index: 2, kind: input, shape index: {}]
  %s3 = inlined_call_operand.vmem [shape: f32[8,1], index: 3, kind: input, shape index: {}]
  %s4 = inlined_call_operand.vmem [shape: f32[8,1], index: 4, kind: input, shape index: {}]
  %s5 = inlined_call_operand.vmem [shape: f32[8,1], index: 5, kind: input, shape index: {}]
  %s6 = inlined_call_operand.vmem [shape: f32[8,1], index: 6, kind: input, shape index: {}]
  %s7 = inlined_call_operand.vmem [shape: f32[2,8,8,256], index: 7, kind: output, shape index: {}]
  %s8 = sld [smem:[#allocation0]]
  $region38: #{r2plus1d_forward.1} parent=0
    _
  %s10 = ssub.s32 1, %s8
  %s11 = scalar_select 0, %s10, %s8
  // Predicated region
  $region2: #{r2plus1d_forward.1} parent=0 // pred_check
    _
  $region3: #{r2plus1d_forward.1} parent=0 // pred_check_branch
    %13 = sbr.rel (0) target = $region5
  $region4: #{r2plus1d_forward.1} parent=0 // pred_region
    _
  $region5: #{r2plus1d_forward.1} parent=0 // pred_fallthru
    _
  // Predicated region
  $region6: #{r2plus1d_forward.1} parent=0 // pred_check
    _
  $region7: #{r2plus1d_forward.1} parent=0 // pred_check_branch
    %15 = sbr.rel (0) target = $region9
  $region8: #{r2plus1d_forward.1} parent=0 // pred_region
    _
  $region9: #{r2plus1d_forward.1} parent=0 // pred_fallthru
    _
  // Predicated region
  $region10: #{r2plus1d_forward.1} parent=0 // pred_check
    _
  $region11: #{r2plus1d_forward.1} parent=0 // pred_check_branch
    %17 = sbr.rel (0) target = $region13
  $region12: #{r2plus1d_forward.1} parent=0 // pred_region
    _
  $region13: #{r2plus1d_forward.1} parent=0 // pred_fallthru
    _
  // Predicated region
  $region14: #{r2plus1d_forward.1} parent=0 // pred_check
    _
  $region15: #{r2plus1d_forward.1} parent=0 // pred_check_branch
    %19 = sbr.rel (0) target = $region17
  $region16: #{r2plus1d_forward.1} parent=0 // pred_region
    _
  $region17: #{r2plus1d_forward.1} parent=0 // pred_fallthru
    _
  // Predicated region
  $region18: #{r2plus1d_forward.1} parent=0 // pred_check
    _
  $region19: #{r2plus1d_forward.1} parent=0 // pred_check_branch
    %21 = sbr.rel (0) target = $region21
  $region20: #{r2plus1d_forward.1} parent=0 // pred_region
    _
  $region21: #{r2plus1d_forward.1} parent=0 // pred_fallthru
    _
  // Predicated region
  $region22: #{r2plus1d_forward.1} parent=0 // pred_check
    _
  $region23: #{r2plus1d_forward.1} parent=0 // pred_check_branch
    %23 = sbr.rel (0) target = $region25
  $region24: #{r2plus1d_forward.1} parent=0 // pred_region
    _
  $region25: #{r2plus1d_forward.1} parent=0 // pred_fallthru
    _
  // Predicated region
  $region26: #{r2plus1d_forward.1} parent=0 // pred_check
    _
  $region27: #{r2plus1d_forward.1} parent=0 // pred_check_branch
    %25 = sbr.rel (0) target = $region29
  $region28: #{r2plus1d_forward.1} parent=0 // pred_region
    _
  $region29: #{r2plus1d_forward.1} parent=0 // pred_fallthru
    _
  %v26 = vld [vmem:[%s1] sm:$0xff]
  %v27 = vld [vmem:[%s0] sm:$0xff]
  %v28 = vld [vmem:[%s0 + $0x8] sm:$0xff]
  %v29 = vld [vmem:[%s0 + $0x10] sm:$0xff]
  %v30 = vld [vmem:[%s0 + $0x18] sm:$0xff]
  %v31 = vld [vmem:[%s0 + $0x20] sm:$0xff]
  %v32 = vld [vmem:[%s0 + $0x28] sm:$0xff]
  %v33 = vld [vmem:[%s0 + $0x30] sm:$0xff]
  %v34 = vld [vmem:[%s0 + $0x38] sm:$0xff]
  %v35 = vld [vmem:[%s0 + $0x40] sm:$0xf]
  %v36 = vld [vmem:[%s0 + $0x48] sm:$0xf]
  %vm37 = vcmask 293888
  %v39 = vsel %vm37, %v26, 0
  %vm41 = vcmask 1043456
  %v43 = vsel %vm41, %v35, 0
  %v46 = vsel %vm41, %v36, 0
  %48 = vmatprep.subr.mxu0 %v28
  %49 = vmatpush1.msra.mxu0 %v27
  %50 = vmatprep.subr.mxu0 %v30
  %51 = vmatpush1.msra.mxu0 %v29
  %52 = vmatprep.subr.mxu0 %v32
  %53 = vmatpush1.msra.mxu0 %v31
  %54 = vmatprep.subr.mxu0 %v34
  %55 = vmatpush1.msra.mxu0 %v33
  %56 = vmatprep.subr.mxu0 %v46
  %57 = vmatpush1.msra.mxu0 %v43
  %58 = vmatprep.subr.mxu0 0.0
  %59 = vmatpush1.msra.mxu0 0.0
  %60 = vmatprep.subr.mxu0 0.0
  %61 = vmatpush1.msra.mxu0 0.0
  %62 = vmatprep.subr.mxu0 0.0
  %63 = vmatpush1.msra.mxu0 0.0
  %64 = vmatprep.subr.mxu0 0.0
  %65 = vmatpush1.msra.mxu0 0.0
  %66 = vmatprep.subr.mxu0 0.0
  %67 = vmatpush1.msra.mxu0 0.0
  %68 = vmatprep.subr.mxu0 0.0
  %69 = vmatpush1.msra.mxu0 0.0
  %70 = vmatprep.subr.mxu0 0.0
  %71 = vmatpush1.msra.mxu0 0.0
  %72 = vmatprep.subr.mxu0 0.0
  %73 = vmatpush1.msra.mxu0 0.0
  %74 = vmatprep.subr.mxu0 0.0
  %75 = vmatpush1.msra.mxu0 0.0
  %76 = vmatprep.subr.mxu0 0.0
  %77 = vmatpush1.msra.mxu0 0.0
  %78 = vmatprep.subr.mxu0 0.0
  %79 = vmatpush1.msra.mxu0 0.0
  %80 = vmatprep.subr.mxu0 0.0
  %81 = vmatpush1.msra.mxu0 0.0
  %82 = vmatprep.subr.mxu0 0.0
  %83 = vmatpush1.msra.mxu0 0.0
  %84 = vmatprep.subr.mxu0 0.0
  %85 = vmatpush1.msra.mxu0 0.0
  %86 = vmatprep.subr.mxu0 0.0
  %87 = vmatpush1.msra.mxu0 0.0
  %88 = vmatprep.subr.mxu0 0.0
  %89 = vmatpush1.msra.mxu0 0.0
  %90 = vmatprep.subr.mxu0 0.0
  %91 = vmatpush1.msra.mxu0 0.0
  %92 = vmatprep.subr.mxu0 0.0
  %93 = vmatpush1.msra.mxu0 0.0
  %94 = vmatprep.subr.mxu0 0.0
  %95 = vmatpush1.msra.mxu0 0.0
  %96 = vmatprep.subr.mxu0 0.0
  %97 = vmatpush1.msra.mxu0 0.0
  %98 = vmatprep.subr.mxu0 0.0
  %99 = vmatpush1.msra.mxu0 0.0
  %100 = vmatprep.subr.mxu0 0.0
  %101 = vmatpush1.msra.mxu0 0.0
  %102 = vmatprep.subr.mxu0 0.0
  %103 = vmatpush1.msra.mxu0 0.0
  %104 = vmatprep.subr.mxu0 0.0
  %105 = vmatpush1.msra.mxu0 0.0
  %106 = vmatprep.subr.mxu0 0.0
  %107 = vmatpush1.msra.mxu0 0.0
  %108 = vmatprep.subr.mxu0 0.0
  %109 = vmatpush1.msra.mxu0 0.0
  %110 = vmatprep.subr.mxu0 0.0
  %111 = vmatpush1.msra.mxu0 0.0
  %112 = vmatprep.mubr.f32.mxu0 0.0
  %113 = vmatmul.mubr.f32.gmra.mrb[0].mxu0 %v39
  %v114 = vpop.f32.mrb[0].mxu0
  %v115 = vadd.f32 0.0, %v114
  %v116 = vpop.f32.mrb[0].mxu0
  %v117 = vadd.f32 0.0, %v116
  %118 = vdwg.mxu0
  %119 = vst [vmem:[#allocation2] sm:$0xff] %v115
  %120 = vst [vmem:[#allocation2 + $0x8] sm:$0xff] %v117
  %v121 = vadd.f32 %v115, %v117
  %122 = vadd.xlane.f32.xlu0 %v121
  %v123 = vpop.xlane.xlu0 %122
  %v124 = vadd.f32 %v123, 0.0
  %v125 = vmul.f32 %v115, %v115
  %v126 = vmul.f32 %v117, %v117
  %v127 = vadd.f32 %v125, %v126
  %128 = vadd.xlane.f32.xlu0 %v127
  %v129 = vpop.xlane.xlu0 %128
  %v130 = vadd.f32 %v129, 0.0
  %s131 = scalar_lea.vmem %s0, 80
  %v132 = vld [vmem:[%s131] sm:$0xff]
  %v133 = vld [vmem:[%s131 + $0x8] sm:$0xff]
  %v134 = vld [vmem:[%s131 + $0x10] sm:$0xff]
  %v135 = vld [vmem:[%s131 + $0x18] sm:$0xff]
  %v136 = vld [vmem:[%s131 + $0x20] sm:$0xff]
  %v137 = vld [vmem:[%s131 + $0x28] sm:$0xff]
  %v138 = vld [vmem:[%s131 + $0x30] sm:$0xff]
  %v139 = vld [vmem:[%s131 + $0x38] sm:$0xff]
  %v140 = vld [vmem:[%s131 + $0x40] sm:$0xf]
  %v141 = vld [vmem:[%s131 + $0x48] sm:$0xf]
  %v143 = vsel %vm41, %v140, 0
  %v146 = vsel %vm41, %v141, 0
  %148 = vmatprep.subr.mxu0 %v133
  %149 = vmatpush1.msra.mxu0 %v132
  %150 = vmatprep.subr.mxu0 %v135
  %151 = vmatpush1.msra.mxu0 %v134
  %152 = vmatprep.subr.mxu0 %v137
  %153 = vmatpush1.msra.mxu0 %v136
  %154 = vmatprep.subr.mxu0 %v139
  %155 = vmatpush1.msra.mxu0 %v138
  %156 = vmatprep.subr.mxu0 %v146
  %157 = vmatpush1.msra.mxu0 %v143
  %158 = vmatprep.subr.mxu0 0.0
  %159 = vmatpush1.msra.mxu0 0.0
  %160 = vmatprep.subr.mxu0 0.0
  %161 = vmatpush1.msra.mxu0 0.0
  %162 = vmatprep.subr.mxu0 0.0
  %163 = vmatpush1.msra.mxu0 0.0
  %164 = vmatprep.subr.mxu0 0.0
  %165 = vmatpush1.msra.mxu0 0.0
  %166 = vmatprep.subr.mxu0 0.0
  %167 = vmatpush1.msra.mxu0 0.0
  %168 = vmatprep.subr.mxu0 0.0
  %169 = vmatpush1.msra.mxu0 0.0
  %170 = vmatprep.subr.mxu0 0.0
  %171 = vmatpush1.msra.mxu0 0.0
  %172 = vmatprep.subr.mxu0 0.0
  %173 = vmatpush1.msra.mxu0 0.0
  %174 = vmatprep.subr.mxu0 0.0
  %175 = vmatpush1.msra.mxu0 0.0
  %176 = vmatprep.subr.mxu0 0.0
  %177 = vmatpush1.msra.mxu0 0.0
  %178 = vmatprep.subr.mxu0 0.0
  %179 = vmatpush1.msra.mxu0 0.0
  %180 = vmatprep.subr.mxu0 0.0
  %181 = vmatpush1.msra.mxu0 0.0
  %182 = vmatprep.subr.mxu0 0.0
  %183 = vmatpush1.msra.mxu0 0.0
  %184 = vmatprep.subr.mxu0 0.0
  %185 = vmatpush1.msra.mxu0 0.0
  %186 = vmatprep.subr.mxu0 0.0
  %187 = vmatpush1.msra.mxu0 0.0
  %188 = vmatprep.subr.mxu0 0.0
  %189 = vmatpush1.msra.mxu0 0.0
  %190 = vmatprep.subr.mxu0 0.0
  %191 = vmatpush1.msra.mxu0 0.0
  %192 = vmatprep.subr.mxu0 0.0
  %193 = vmatpush1.msra.mxu0 0.0
  %194 = vmatprep.subr.mxu0 0.0
  %195 = vmatpush1.msra.mxu0 0.0
  %196 = vmatprep.subr.mxu0 0.0
  %197 = vmatpush1.msra.mxu0 0.0
  %198 = vmatprep.subr.mxu0 0.0
  %199 = vmatpush1.msra.mxu0 0.0
  %200 = vmatprep.subr.mxu0 0.0
  %201 = vmatpush1.msra.mxu0 0.0
  %202 = vmatprep.subr.mxu0 0.0
  %203 = vmatpush1.msra.mxu0 0.0
  %204 = vmatprep.subr.mxu0 0.0
  %205 = vmatpush1.msra.mxu0 0.0
  %206 = vmatprep.subr.mxu0 0.0
  %207 = vmatpush1.msra.mxu0 0.0
  %208 = vmatprep.subr.mxu0 0.0
  %209 = vmatpush1.msra.mxu0 0.0
  %210 = vmatprep.subr.mxu0 0.0
  %211 = vmatpush1.msra.mxu0 0.0
  %212 = vmatprep.mubr.f32.mxu0 0.0
  %213 = vmatmul.mubr.f32.gmra.mrb[0].mxu0 %v39
  %v214 = vpop.f32.mrb[0].mxu0
  %v215 = vadd.f32 0.0, %v214
  %v216 = vpop.f32.mrb[0].mxu0
  %v217 = vadd.f32 0.0, %v216
  %218 = vdwg.mxu0
  %s219 = scalar_lea.vmem [#allocation2], 16
  %220 = vst [vmem:[%s219] sm:$0xff] %v215
  %221 = vst [vmem:[%s219 + $0x8] sm:$0xff] %v217
  %v222 = vadd.f32 %v215, %v217
  %223 = vadd.xlane.f32.xlu0 %v222
  %v224 = vpop.xlane.xlu0 %223
  %v225 = vadd.f32 %v124, %v224
  %v226 = vmul.f32 %v215, %v215
  %v227 = vmul.f32 %v217, %v217
  %v228 = vadd.f32 %v226, %v227
  %229 = vadd.xlane.f32.xlu0 %v228
  %v230 = vpop.xlane.xlu0 %229
  %v231 = vadd.f32 %v130, %v230
  %s232 = scalar_lea.vmem %s0, 160
  %v233 = vld [vmem:[%s232] sm:$0xff]
  %v234 = vld [vmem:[%s232 + $0x8] sm:$0xff]
  %v235 = vld [vmem:[%s232 + $0x10] sm:$0xff]
  %v236 = vld [vmem:[%s232 + $0x18] sm:$0xff]
  %v237 = vld [vmem:[%s232 + $0x20] sm:$0xff]
  %v238 = vld [vmem:[%s232 + $0x28] sm:$0xff]
  %v239 = vld [vmem:[%s232 + $0x30] sm:$0xff]
  %v240 = vld [vmem:[%s232 + $0x38] sm:$0xff]
  %v241 = vld [vmem:[%s232 + $0x40] sm:$0xf]
  %v242 = vld [vmem:[%s232 + $0x48] sm:$0xf]
  %v244 = vsel %vm41, %v241, 0
  %v247 = vsel %vm41, %v242, 0
  %249 = vmatprep.subr.mxu0 %v234
  %250 = vmatpush1.msra.mxu0 %v233
  %251 = vmatprep.subr.mxu0 %v236
  %252 = vmatpush1.msra.mxu0 %v235
  %253 = vmatprep.subr.mxu0 %v238
  %254 = vmatpush1.msra.mxu0 %v237
  %255 = vmatprep.subr.mxu0 %v240
  %256 = vmatpush1.msra.mxu0 %v239
  %257 = vmatprep.subr.mxu0 %v247
  %258 = vmatpush1.msra.mxu0 %v244
  %259 = vmatprep.subr.mxu0 0.0
  %260 = vmatpush1.msra.mxu0 0.0
  %261 = vmatprep.subr.mxu0 0.0
  %262 = vmatpush1.msra.mxu0 0.0
  %263 = vmatprep.subr.mxu0 0.0
  %264 = vmatpush1.msra.mxu0 0.0
  %265 = vmatprep.subr.mxu0 0.0
  %266 = vmatpush1.msra.mxu0 0.0
  %267 = vmatprep.subr.mxu0 0.0
  %268 = vmatpush1.msra.mxu0 0.0
  %269 = vmatprep.subr.mxu0 0.0
  %270 = vmatpush1.msra.mxu0 0.0
  %271 = vmatprep.subr.mxu0 0.0
  %272 = vmatpush1.msra.mxu0 0.0
  %273 = vmatprep.subr.mxu0 0.0
  %274 = vmatpush1.msra.mxu0 0.0
  %275 = vmatprep.subr.mxu0 0.0
  %276 = vmatpush1.msra.mxu0 0.0
  %277 = vmatprep.subr.mxu0 0.0
  %278 = vmatpush1.msra.mxu0 0.0
  %279 = vmatprep.subr.mxu0 0.0
  %280 = vmatpush1.msra.mxu0 0.0
  %281 = vmatprep.subr.mxu0 0.0
  %282 = vmatpush1.msra.mxu0 0.0
  %283 = vmatprep.subr.mxu0 0.0
  %284 = vmatpush1.msra.mxu0 0.0
  %285 = vmatprep.subr.mxu0 0.0
  %286 = vmatpush1.msra.mxu0 0.0
  %287 = vmatprep.subr.mxu0 0.0
  %288 = vmatpush1.msra.mxu0 0.0
  %289 = vmatprep.subr.mxu0 0.0
  %290 = vmatpush1.msra.mxu0 0.0
  %291 = vmatprep.subr.mxu0 0.0
  %292 = vmatpush1.msra.mxu0 0.0
  %293 = vmatprep.subr.mxu0 0.0
  %294 = vmatpush1.msra.mxu0 0.0
  %295 = vmatprep.subr.mxu0 0.0
  %296 = vmatpush1.msra.mxu0 0.0
  %297 = vmatprep.subr.mxu0 0.0
  %298 = vmatpush1.msra.mxu0 0.0
  %299 = vmatprep.subr.mxu0 0.0
  %300 = vmatpush1.msra.mxu0 0.0
  %301 = vmatprep.subr.mxu0 0.0
  %302 = vmatpush1.msra.mxu0 0.0
  %303 = vmatprep.subr.mxu0 0.0
  %304 = vmatpush1.msra.mxu0 0.0
  %305 = vmatprep.subr.mxu0 0.0
  %306 = vmatpush1.msra.mxu0 0.0
  %307 = vmatprep.subr.mxu0 0.0
  %308 = vmatpush1.msra.mxu0 0.0
  %309 = vmatprep.subr.mxu0 0.0
  %310 = vmatpush1.msra.mxu0 0.0
  %311 = vmatprep.subr.mxu0 0.0
  %312 = vmatpush1.msra.mxu0 0.0
  %313 = vmatprep.mubr.f32.mxu0 0.0
  %314 = vmatmul.mubr.f32.gmra.mrb[0].mxu0 %v39
  %v315 = vpop.f32.mrb[0].mxu0
  %v316 = vadd.f32 0.0, %v315
  %v317 = vpop.f32.mrb[0].mxu0
  %v318 = vadd.f32 0.0, %v317
  %319 = vdwg.mxu0
  %s320 = scalar_lea.vmem [#allocation2], 32
  %321 = vst [vmem:[%s320] sm:$0xff] %v316
  %322 = vst [vmem:[%s320 + $0x8] sm:$0xff] %v318
  %v323 = vadd.f32 %v316, %v318
  %324 = vadd.xlane.f32.xlu0 %v323
  %v325 = vpop.xlane.xlu0 %324
  %v326 = vadd.f32 %v225, %v325
  %v327 = vmul.f32 %v316, %v316
  %v328 = vmul.f32 %v318, %v318
  %v329 = vadd.f32 %v327, %v328
  %330 = vadd.xlane.f32.xlu0 %v329
  %v331 = vpop.xlane.xlu0 %330
  %v332 = vadd.f32 %v231, %v331
  %s333 = scalar_lea.vmem %s0, 240
  %v334 = vld [vmem:[%s333] sm:$0xff]
  %v335 = vld [vmem:[%s333 + $0x8] sm:$0xff]
  %v336 = vld [vmem:[%s333 + $0x10] sm:$0xff]
  %v337 = vld [vmem:[%s333 + $0x18] sm:$0xff]
  %v338 = vld [vmem:[%s333 + $0x20] sm:$0xff]
  %v339 = vld [vmem:[%s333 + $0x28] sm:$0xff]
  %v340 = vld [vmem:[%s333 + $0x30] sm:$0xff]
  %v341 = vld [vmem:[%s333 + $0x38] sm:$0xff]
  %v342 = vld [vmem:[%s333 + $0x40] sm:$0xf]
  %v343 = vld [vmem:[%s333 + $0x48] sm:$0xf]
  %v345 = vsel %vm41, %v342, 0
  %v348 = vsel %vm41, %v343, 0
  %350 = vmatprep.subr.mxu0 %v335
  %351 = vmatpush1.msra.mxu0 %v334
  %352 = vmatprep.subr.mxu0 %v337
  %353 = vmatpush1.msra.mxu0 %v336
  %354 = vmatprep.subr.mxu0 %v339
  %355 = vmatpush1.msra.mxu0 %v338
  %356 = vmatprep.subr.mxu0 %v341
  %357 = vmatpush1.msra.mxu0 %v340
  %358 = vmatprep.subr.mxu0 %v348
  %359 = vmatpush1.msra.mxu0 %v345
  %360 = vmatprep.subr.mxu0 0.0
  %361 = vmatpush1.msra.mxu0 0.0
  %362 = vmatprep.subr.mxu0 0.0
  %363 = vmatpush1.msra.mxu0 0.0
  %364 = vmatprep.subr.mxu0 0.0
  %365 = vmatpush1.msra.mxu0 0.0
  %366 = vmatprep.subr.mxu0 0.0
  %367 = vmatpush1.msra.mxu0 0.0
  %368 = vmatprep.subr.mxu0 0.0
  %369 = vmatpush1.msra.mxu0 0.0
  %370 = vmatprep.subr.mxu0 0.0
  %371 = vmatpush1.msra.mxu0 0.0
  %372 = vmatprep.subr.mxu0 0.0
  %373 = vmatpush1.msra.mxu0 0.0
  %374 = vmatprep.subr.mxu0 0.0
  %375 = vmatpush1.msra.mxu0 0.0
  %376 = vmatprep.subr.mxu0 0.0
  %377 = vmatpush1.msra.mxu0 0.0
  %378 = vmatprep.subr.mxu0 0.0
  %379 = vmatpush1.msra.mxu0 0.0
  %380 = vmatprep.subr.mxu0 0.0
  %381 = vmatpush1.msra.mxu0 0.0
  %382 = vmatprep.subr.mxu0 0.0
  %383 = vmatpush1.msra.mxu0 0.0
  %384 = vmatprep.subr.mxu0 0.0
  %385 = vmatpush1.msra.mxu0 0.0
  %386 = vmatprep.subr.mxu0 0.0
  %387 = vmatpush1.msra.mxu0 0.0
  %388 = vmatprep.subr.mxu0 0.0
  %389 = vmatpush1.msra.mxu0 0.0
  %390 = vmatprep.subr.mxu0 0.0
  %391 = vmatpush1.msra.mxu0 0.0
  %392 = vmatprep.subr.mxu0 0.0
  %393 = vmatpush1.msra.mxu0 0.0
  %394 = vmatprep.subr.mxu0 0.0
  %395 = vmatpush1.msra.mxu0 0.0
  %396 = vmatprep.subr.mxu0 0.0
  %397 = vmatpush1.msra.mxu0 0.0
  %398 = vmatprep.subr.mxu0 0.0
  %399 = vmatpush1.msra.mxu0 0.0
  %400 = vmatprep.subr.mxu0 0.0
  %401 = vmatpush1.msra.mxu0 0.0
  %402 = vmatprep.subr.mxu0 0.0
  %403 = vmatpush1.msra.mxu0 0.0
  %404 = vmatprep.subr.mxu0 0.0
  %405 = vmatpush1.msra.mxu0 0.0
  %406 = vmatprep.subr.mxu0 0.0
  %407 = vmatpush1.msra.mxu0 0.0
  %408 = vmatprep.subr.mxu0 0.0
  %409 = vmatpush1.msra.mxu0 0.0
  %410 = vmatprep.subr.mxu0 0.0
  %411 = vmatpush1.msra.mxu0 0.0
  %412 = vmatprep.subr.mxu0 0.0
  %413 = vmatpush1.msra.mxu0 0.0
  %414 = vmatprep.mubr.f32.mxu0 0.0
  %415 = vmatmul.mubr.f32.gmra.mrb[0].mxu0 %v39
  %v416 = vpop.f32.mrb[0].mxu0
  %v417 = vadd.f32 0.0, %v416
  %v418 = vpop.f32.mrb[0].mxu0
  %v419 = vadd.f32 0.0, %v418
  %420 = vdwg.mxu0
  %s421 = scalar_lea.vmem [#allocation2], 48
  %422 = vst [vmem:[%s421] sm:$0xff] %v417
  %423 = vst [vmem:[%s421 + $0x8] sm:$0xff] %v419
  %v424 = vadd.f32 %v417, %v419
  %425 = vadd.xlane.f32.xlu0 %v424
  %v426 = vpop.xlane.xlu0 %425
  %v427 = vadd.f32 %v326, %v426
  %v428 = vmul.f32 %v417, %v417
  %v429 = vmul.f32 %v419, %v419
  %v430 = vadd.f32 %v428, %v429
  %431 = vadd.xlane.f32.xlu0 %v430
  %v432 = vpop.xlane.xlu0 %431
  %v433 = vadd.f32 %v332, %v432
  %s434 = scalar_lea.vmem %s0, 320
  %v435 = vld [vmem:[%s434] sm:$0xff]
  %v436 = vld [vmem:[%s434 + $0x8] sm:$0xff]
  %v437 = vld [vmem:[%s434 + $0x10] sm:$0xff]
  %v438 = vld [vmem:[%s434 + $0x18] sm:$0xff]
  %v439 = vld [vmem:[%s434 + $0x20] sm:$0xff]
  %v440 = vld [vmem:[%s434 + $0x28] sm:$0xff]
  %v441 = vld [vmem:[%s434 + $0x30] sm:$0xff]
  %v442 = vld [vmem:[%s434 + $0x38] sm:$0xff]
  %v443 = vld [vmem:[%s434 + $0x40] sm:$0xf]
  %v444 = vld [vmem:[%s434 + $0x48] sm:$0xf]
  %v446 = vsel %vm41, %v443, 0
  %v449 = vsel %vm41, %v444, 0
  %451 = vmatprep.subr.mxu0 %v436
  %452 = vmatpush1.msra.mxu0 %v435
  %453 = vmatprep.subr.mxu0 %v438
  %454 = vmatpush1.msra.mxu0 %v437
  %455 = vmatprep.subr.mxu0 %v440
  %456 = vmatpush1.msra.mxu0 %v439
  %457 = vmatprep.subr.mxu0 %v442
  %458 = vmatpush1.msra.mxu0 %v441
  %459 = vmatprep.subr.mxu0 %v449
  %460 = vmatpush1.msra.mxu0 %v446
  %461 = vmatprep.subr.mxu0 0.0
  %462 = vmatpush1.msra.mxu0 0.0
  %463 = vmatprep.subr.mxu0 0.0
  %464 = vmatpush1.msra.mxu0 0.0
  %465 = vmatprep.subr.mxu0 0.0
  %466 = vmatpush1.msra.mxu0 0.0
  %467 = vmatprep.subr.mxu0 0.0
  %468 = vmatpush1.msra.mxu0 0.0
  %469 = vmatprep.subr.mxu0 0.0
  %470 = vmatpush1.msra.mxu0 0.0
  %471 = vmatprep.subr.mxu0 0.0
  %472 = vmatpush1.msra.mxu0 0.0
  %473 = vmatprep.subr.mxu0 0.0
  %474 = vmatpush1.msra.mxu0 0.0
  %475 = vmatprep.subr.mxu0 0.0
  %476 = vmatpush1.msra.mxu0 0.0
  %477 = vmatprep.subr.mxu0 0.0
  %478 = vmatpush1.msra.mxu0 0.0
  %479 = vmatprep.subr.mxu0 0.0
  %480 = vmatpush1.msra.mxu0 0.0
  %481 = vmatprep.subr.mxu0 0.0
  %482 = vmatpush1.msra.mxu0 0.0
  %483 = vmatprep.subr.mxu0 0.0
  %484 = vmatpush1.msra.mxu0 0.0
  %485 = vmatprep.subr.mxu0 0.0
  %486 = vmatpush1.msra.mxu0 0.0
  %487 = vmatprep.subr.mxu0 0.0
  %488 = vmatpush1.msra.mxu0 0.0
  %489 = vmatprep.subr.mxu0 0.0
  %490 = vmatpush1.msra.mxu0 0.0
  %491 = vmatprep.subr.mxu0 0.0
  %492 = vmatpush1.msra.mxu0 0.0
  %493 = vmatprep.subr.mxu0 0.0
  %494 = vmatpush1.msra.mxu0 0.0
  %495 = vmatprep.subr.mxu0 0.0
  %496 = vmatpush1.msra.mxu0 0.0
  %497 = vmatprep.subr.mxu0 0.0
  %498 = vmatpush1.msra.mxu0 0.0
  %499 = vmatprep.subr.mxu0 0.0
  %500 = vmatpush1.msra.mxu0 0.0
  %501 = vmatprep.subr.mxu0 0.0
  %502 = vmatpush1.msra.mxu0 0.0
  %503 = vmatprep.subr.mxu0 0.0
  %504 = vmatpush1.msra.mxu0 0.0
  %505 = vmatprep.subr.mxu0 0.0
  %506 = vmatpush1.msra.mxu0 0.0
  %507 = vmatprep.subr.mxu0 0.0
  %508 = vmatpush1.msra.mxu0 0.0
  %509 = vmatprep.subr.mxu0 0.0
  %510 = vmatpush1.msra.mxu0 0.0
  %511 = vmatprep.subr.mxu0 0.0
  %512 = vmatpush1.msra.mxu0 0.0
  %513 = vmatprep.subr.mxu0 0.0
  %514 = vmatpush1.msra.mxu0 0.0
  %515 = vmatprep.mubr.f32.mxu0 0.0
  %516 = vmatmul.mubr.f32.gmra.mrb[0].mxu0 %v39
  %v517 = vpop.f32.mrb[0].mxu0
  %v518 = vadd.f32 0.0, %v517
  %v519 = vpop.f32.mrb[0].mxu0
  %v520 = vadd.f32 0.0, %v519
  %521 = vdwg.mxu0
  %s522 = scalar_lea.vmem [#allocation2], 64
  %523 = vst [vmem:[%s522] sm:$0xff] %v518
  %524 = vst [vmem:[%s522 + $0x8] sm:$0xff] %v520
  %v525 = vadd.f32 %v518, %v520
  %526 = vadd.xlane.f32.xlu0 %v525
  %v527 = vpop.xlane.xlu0 %526
  %v528 = vadd.f32 %v427, %v527
  %v529 = vmul.f32 %v518, %v518
  %v530 = vmul.f32 %v520, %v520
  %v531 = vadd.f32 %v529, %v530
  %532 = vadd.xlane.f32.xlu0 %v531
  %v533 = vpop.xlane.xlu0 %532
  %v534 = vadd.f32 %v433, %v533
  %s535 = scalar_lea.vmem %s0, 400
  %v536 = vld [vmem:[%s535] sm:$0xff]
  %v537 = vld [vmem:[%s535 + $0x8] sm:$0xff]
  %v538 = vld [vmem:[%s535 + $0x10] sm:$0xff]
  %v539 = vld [vmem:[%s535 + $0x18] sm:$0xff]
  %v540 = vld [vmem:[%s535 + $0x20] sm:$0xff]
  %v541 = vld [vmem:[%s535 + $0x28] sm:$0xff]
  %v542 = vld [vmem:[%s535 + $0x30] sm:$0xff]
  %v543 = vld [vmem:[%s535 + $0x38] sm:$0xff]
  %v544 = vld [vmem:[%s535 + $0x40] sm:$0xf]
  %v545 = vld [vmem:[%s535 + $0x48] sm:$0xf]
  %v547 = vsel %vm41, %v544, 0
  %v550 = vsel %vm41, %v545, 0
  %552 = vmatprep.subr.mxu0 %v537
  %553 = vmatpush1.msra.mxu0 %v536
  %554 = vmatprep.subr.mxu0 %v539
  %555 = vmatpush1.msra.mxu0 %v538
  %556 = vmatprep.subr.mxu0 %v541
  %557 = vmatpush1.msra.mxu0 %v540
  %558 = vmatprep.subr.mxu0 %v543
  %559 = vmatpush1.msra.mxu0 %v542
  %560 = vmatprep.subr.mxu0 %v550
  %561 = vmatpush1.msra.mxu0 %v547
  %562 = vmatprep.subr.mxu0 0.0
  %563 = vmatpush1.msra.mxu0 0.0
  %564 = vmatprep.subr.mxu0 0.0
  %565 = vmatpush1.msra.mxu0 0.0
  %566 = vmatprep.subr.mxu0 0.0
  %567 = vmatpush1.msra.mxu0 0.0
  %568 = vmatprep.subr.mxu0 0.0
  %569 = vmatpush1.msra.mxu0 0.0
  %570 = vmatprep.subr.mxu0 0.0
  %571 = vmatpush1.msra.mxu0 0.0
  %572 = vmatprep.subr.mxu0 0.0
  %573 = vmatpush1.msra.mxu0 0.0
  %574 = vmatprep.subr.mxu0 0.0
  %575 = vmatpush1.msra.mxu0 0.0
  %576 = vmatprep.subr.mxu0 0.0
  %577 = vmatpush1.msra.mxu0 0.0
  %578 = vmatprep.subr.mxu0 0.0
  %579 = vmatpush1.msra.mxu0 0.0
  %580 = vmatprep.subr.mxu0 0.0
  %581 = vmatpush1.msra.mxu0 0.0
  %582 = vmatprep.subr.mxu0 0.0
  %583 = vmatpush1.msra.mxu0 0.0
  %584 = vmatprep.subr.mxu0 0.0
  %585 = vmatpush1.msra.mxu0 0.0
  %586 = vmatprep.subr.mxu0 0.0
  %587 = vmatpush1.msra.mxu0 0.0
  %588 = vmatprep.subr.mxu0 0.0
  %589 = vmatpush1.msra.mxu0 0.0
  %590 = vmatprep.subr.mxu0 0.0
  %591 = vmatpush1.msra.mxu0 0.0
  %592 = vmatprep.subr.mxu0 0.0
  %593 = vmatpush1.msra.mxu0 0.0
  %594 = vmatprep.subr.mxu0 0.0
  %595 = vmatpush1.msra.mxu0 0.0
  %596 = vmatprep.subr.mxu0 0.0
  %597 = vmatpush1.msra.mxu0 0.0
  %598 = vmatprep.subr.mxu0 0.0
  %599 = vmatpush1.msra.mxu0 0.0
  %600 = vmatprep.subr.mxu0 0.0
  %601 = vmatpush1.msra.mxu0 0.0
  %602 = vmatprep.subr.mxu0 0.0
  %603 = vmatpush1.msra.mxu0 0.0
  %604 = vmatprep.subr.mxu0 0.0
  %605 = vmatpush1.msra.mxu0 0.0
  %606 = vmatprep.subr.mxu0 0.0
  %607 = vmatpush1.msra.mxu0 0.0
  %608 = vmatprep.subr.mxu0 0.0
  %609 = vmatpush1.msra.mxu0 0.0
  %610 = vmatprep.subr.mxu0 0.0
  %611 = vmatpush1.msra.mxu0 0.0
  %612 = vmatprep.subr.mxu0 0.0
  %613 = vmatpush1.msra.mxu0 0.0
  %614 = vmatprep.subr.mxu0 0.0
  %615 = vmatpush1.msra.mxu0 0.0
  %616 = vmatprep.mubr.f32.mxu0 0.0
  %617 = vmatmul.mubr.f32.gmra.mrb[0].mxu0 %v39
  %v618 = vpop.f32.mrb[0].mxu0
  %v619 = vadd.f32 0.0, %v618
  %v620 = vpop.f32.mrb[0].mxu0
  %v621 = vadd.f32 0.0, %v620
  %622 = vdwg.mxu0
  %s623 = scalar_lea.vmem [#allocation2], 80
  %624 = vst [vmem:[%s623] sm:$0xff] %v619
  %625 = vst [vmem:[%s623 + $0x8] sm:$0xff] %v621
  %v626 = vadd.f32 %v619, %v621
  %627 = vadd.xlane.f32.xlu0 %v626
  %v628 = vpop.xlane.xlu0 %627
  %v629 = vadd.f32 %v528, %v628
  %v630 = vmul.f32 %v619, %v619
  %v631 = vmul.f32 %v621, %v621
  %v632 = vadd.f32 %v630, %v631
  %633 = vadd.xlane.f32.xlu0 %v632
  %v634 = vpop.xlane.xlu0 %633
  %v635 = vadd.f32 %v534, %v634
  %s636 = scalar_lea.vmem %s0, 480
  %v637 = vld [vmem:[%s636] sm:$0xff]
  %v638 = vld [vmem:[%s636 + $0x8] sm:$0xff]
  %v639 = vld [vmem:[%s636 + $0x10] sm:$0xff]
  %v640 = vld [vmem:[%s636 + $0x18] sm:$0xff]
  %v641 = vld [vmem:[%s636 + $0x20] sm:$0xff]
  %v642 = vld [vmem:[%s636 + $0x28] sm:$0xff]
  %v643 = vld [vmem:[%s636 + $0x30] sm:$0xff]
  %v644 = vld [vmem:[%s636 + $0x38] sm:$0xff]
  %v645 = vld [vmem:[%s636 + $0x40] sm:$0xf]
  %v646 = vld [vmem:[%s636 + $0x48] sm:$0xf]
  %v648 = vsel %vm41, %v645, 0
  %v651 = vsel %vm41, %v646, 0
  %653 = vmatprep.subr.mxu0 %v638
  %654 = vmatpush1.msra.mxu0 %v637
  %655 = vmatprep.subr.mxu0 %v640
  %656 = vmatpush1.msra.mxu0 %v639
  %657 = vmatprep.subr.mxu0 %v642
  %658 = vmatpush1.msra.mxu0 %v641
  %659 = vmatprep.subr.mxu0 %v644
  %660 = vmatpush1.msra.mxu0 %v643
  %661 = vmatprep.subr.mxu0 %v651
  %662 = vmatpush1.msra.mxu0 %v648
  %663 = vmatprep.subr.mxu0 0.0
  %664 = vmatpush1.msra.mxu0 0.0
  %665 = vmatprep.subr.mxu0 0.0
  %666 = vmatpush1.msra.mxu0 0.0
  %667 = vmatprep.subr.mxu0 0.0
  %668 = vmatpush1.msra.mxu0 0.0
  %669 = vmatprep.subr.mxu0 0.0
  %670 = vmatpush1.msra.mxu0 0.0
  %671 = vmatprep.subr.mxu0 0.0
  %672 = vmatpush1.msra.mxu0 0.0
  %673 = vmatprep.subr.mxu0 0.0
  %674 = vmatpush1.msra.mxu0 0.0
  %675 = vmatprep.subr.mxu0 0.0
  %676 = vmatpush1.msra.mxu0 0.0
  %677 = vmatprep.subr.mxu0 0.0
  %678 = vmatpush1.msra.mxu0 0.0
  %679 = vmatprep.subr.mxu0 0.0
  %680 = vmatpush1.msra.mxu0 0.0
  %681 = vmatprep.subr.mxu0 0.0
  %682 = vmatpush1.msra.mxu0 0.0
  %683 = vmatprep.subr.mxu0 0.0
  %684 = vmatpush1.msra.mxu0 0.0
  %685 = vmatprep.subr.mxu0 0.0
  %686 = vmatpush1.msra.mxu0 0.0
  %687 = vmatprep.subr.mxu0 0.0
  %688 = vmatpush1.msra.mxu0 0.0
  %689 = vmatprep.subr.mxu0 0.0
  %690 = vmatpush1.msra.mxu0 0.0
  %691 = vmatprep.subr.mxu0 0.0
  %692 = vmatpush1.msra.mxu0 0.0
  %693 = vmatprep.subr.mxu0 0.0
  %694 = vmatpush1.msra.mxu0 0.0
  %695 = vmatprep.subr.mxu0 0.0
  %696 = vmatpush1.msra.mxu0 0.0
  %697 = vmatprep.subr.mxu0 0.0
  %698 = vmatpush1.msra.mxu0 0.0
  %699 = vmatprep.subr.mxu0 0.0
  %700 = vmatpush1.msra.mxu0 0.0
  %701 = vmatprep.subr.mxu0 0.0
  %702 = vmatpush1.msra.mxu0 0.0
  %703 = vmatprep.subr.mxu0 0.0
  %704 = vmatpush1.msra.mxu0 0.0
  %705 = vmatprep.subr.mxu0 0.0
  %706 = vmatpush1.msra.mxu0 0.0
  %707 = vmatprep.subr.mxu0 0.0
  %708 = vmatpush1.msra.mxu0 0.0
  %709 = vmatprep.subr.mxu0 0.0
  %710 = vmatpush1.msra.mxu0 0.0
  %711 = vmatprep.subr.mxu0 0.0
  %712 = vmatpush1.msra.mxu0 0.0
  %713 = vmatprep.subr.mxu0 0.0
  %714 = vmatpush1.msra.mxu0 0.0
  %715 = vmatprep.subr.mxu0 0.0
  %716 = vmatpush1.msra.mxu0 0.0
  %717 = vmatprep.mubr.f32.mxu0 0.0
  %718 = vmatmul.mubr.f32.gmra.mrb[0].mxu0 %v39
  %v719 = vpop.f32.mrb[0].mxu0
  %v720 = vadd.f32 0.0, %v719
  %v721 = vpop.f32.mrb[0].mxu0
  %v722 = vadd.f32 0.0, %v721
  %723 = vdwg.mxu0
  %s724 = scalar_lea.vmem [#allocation2], 96
  %725 = vst [vmem:[%s724] sm:$0xff] %v720
  %726 = vst [vmem:[%s724 + $0x8] sm:$0xff] %v722
  %v727 = vadd.f32 %v720, %v722
  %728 = vadd.xlane.f32.xlu0 %v727
  %v729 = vpop.xlane.xlu0 %728
  %v730 = vadd.f32 %v629, %v729
  %v731 = vmul.f32 %v720, %v720
  %v732 = vmul.f32 %v722, %v722
  %v733 = vadd.f32 %v731, %v732
  %734 = vadd.xlane.f32.xlu0 %v733
  %v735 = vpop.xlane.xlu0 %734
  %v736 = vadd.f32 %v635, %v735
  %s737 = scalar_lea.vmem %s0, 560
  %v738 = vld [vmem:[%s737] sm:$0xff]
  %v739 = vld [vmem:[%s737 + $0x8] sm:$0xff]
  %v740 = vld [vmem:[%s737 + $0x10] sm:$0xff]
  %v741 = vld [vmem:[%s737 + $0x18] sm:$0xff]
  %v742 = vld [vmem:[%s737 + $0x20] sm:$0xff]
  %v743 = vld [vmem:[%s737 + $0x28] sm:$0xff]
  %v744 = vld [vmem:[%s737 + $0x30] sm:$0xff]
  %v745 = vld [vmem:[%s737 + $0x38] sm:$0xff]
  %v746 = vld [vmem:[%s737 + $0x40] sm:$0xf]
  %v747 = vld [vmem:[%s737 + $0x48] sm:$0xf]
  %v749 = vsel %vm41, %v746, 0
  %v752 = vsel %vm41, %v747, 0
  %754 = vmatprep.subr.mxu0 %v739
  %755 = vmatpush1.msra.mxu0 %v738
  %756 = vmatprep.subr.mxu0 %v741
  %757 = vmatpush1.msra.mxu0 %v740
  %758 = vmatprep.subr.mxu0 %v743
  %759 = vmatpush1.msra.mxu0 %v742
  %760 = vmatprep.subr.mxu0 %v745
  %761 = vmatpush1.msra.mxu0 %v744
  %762 = vmatprep.subr.mxu0 %v752
  %763 = vmatpush1.msra.mxu0 %v749
  %764 = vmatprep.subr.mxu0 0.0
  %765 = vmatpush1.msra.mxu0 0.0
  %766 = vmatprep.subr.mxu0 0.0
  %767 = vmatpush1.msra.mxu0 0.0
  %768 = vmatprep.subr.mxu0 0.0
  %769 = vmatpush1.msra.mxu0 0.0
  %770 = vmatprep.subr.mxu0 0.0
  %771 = vmatpush1.msra.mxu0 0.0
  %772 = vmatprep.subr.mxu0 0.0
  %773 = vmatpush1.msra.mxu0 0.0
  %774 = vmatprep.subr.mxu0 0.0
  %775 = vmatpush1.msra.mxu0 0.0
  %776 = vmatprep.subr.mxu0 0.0
  %777 = vmatpush1.msra.mxu0 0.0
  %778 = vmatprep.subr.mxu0 0.0
  %779 = vmatpush1.msra.mxu0 0.0
  %780 = vmatprep.subr.mxu0 0.0
  %781 = vmatpush1.msra.mxu0 0.0
  %782 = vmatprep.subr.mxu0 0.0
  %783 = vmatpush1.msra.mxu0 0.0
  %784 = vmatprep.subr.mxu0 0.0
  %785 = vmatpush1.msra.mxu0 0.0
  %786 = vmatprep.subr.mxu0 0.0
  %787 = vmatpush1.msra.mxu0 0.0
  %788 = vmatprep.subr.mxu0 0.0
  %789 = vmatpush1.msra.mxu0 0.0
  %790 = vmatprep.subr.mxu0 0.0
  %791 = vmatpush1.msra.mxu0 0.0
  %792 = vmatprep.subr.mxu0 0.0
  %793 = vmatpush1.msra.mxu0 0.0
  %794 = vmatprep.subr.mxu0 0.0
  %795 = vmatpush1.msra.mxu0 0.0
  %796 = vmatprep.subr.mxu0 0.0
  %797 = vmatpush1.msra.mxu0 0.0
  %798 = vmatprep.subr.mxu0 0.0
  %799 = vmatpush1.msra.mxu0 0.0
  %800 = vmatprep.subr.mxu0 0.0
  %801 = vmatpush1.msra.mxu0 0.0
  %802 = vmatprep.subr.mxu0 0.0
  %803 = vmatpush1.msra.mxu0 0.0
  %804 = vmatprep.subr.mxu0 0.0
  %805 = vmatpush1.msra.mxu0 0.0
  %806 = vmatprep.subr.mxu0 0.0
  %807 = vmatpush1.msra.mxu0 0.0
  %808 = vmatprep.subr.mxu0 0.0
  %809 = vmatpush1.msra.mxu0 0.0
  %810 = vmatprep.subr.mxu0 0.0
  %811 = vmatpush1.msra.mxu0 0.0
  %812 = vmatprep.subr.mxu0 0.0
  %813 = vmatpush1.msra.mxu0 0.0
  %814 = vmatprep.subr.mxu0 0.0
  %815 = vmatpush1.msra.mxu0 0.0
  %816 = vmatprep.subr.mxu0 0.0
  %817 = vmatpush1.msra.mxu0 0.0
  %818 = vmatprep.mubr.f32.mxu0 0.0
  %819 = vmatmul.mubr.f32.gmra.mrb[0].mxu0 %v39
  %v820 = vpop.f32.mrb[0].mxu0
  %v821 = vadd.f32 0.0, %v820
  %v822 = vpop.f32.mrb[0].mxu0
  %v823 = vadd.f32 0.0, %v822
  %824 = vdwg.mxu0
  %s825 = scalar_lea.vmem [#allocation2], 112
  %826 = vst [vmem:[%s825] sm:$0xff] %v821
  %827 = vst [vmem:[%s825 + $0x8] sm:$0xff] %v823
  %v828 = vadd.f32 %v821, %v823
  %829 = vadd.xlane.f32.xlu0 %v828
  %v830 = vpop.xlane.xlu0 %829
  %v831 = vadd.f32 %v730, %v830
  %v832 = vmul.f32 %v821, %v821
  %v833 = vmul.f32 %v823, %v823
  %v834 = vadd.f32 %v832, %v833
  %835 = vadd.xlane.f32.xlu0 %v834
  %v836 = vpop.xlane.xlu0 %835
  %v837 = vadd.f32 %v736, %v836
  %s838 = scalar_lea.vmem %s0, 640
  %v839 = vld [vmem:[%s838] sm:$0xff]
  %v840 = vld [vmem:[%s838 + $0x8] sm:$0xff]
  %v841 = vld [vmem:[%s838 + $0x10] sm:$0xff]
  %v842 = vld [vmem:[%s838 + $0x18] sm:$0xff]
  %v843 = vld [vmem:[%s838 + $0x20] sm:$0xff]
  %v844 = vld [vmem:[%s838 + $0x28] sm:$0xff]
  %v845 = vld [vmem:[%s838 + $0x30] sm:$0xff]
  %v846 = vld [vmem:[%s838 + $0x38] sm:$0xff]
  %v847 = vld [vmem:[%s838 + $0x40] sm:$0xf]
  %v848 = vld [vmem:[%s838 + $0x48] sm:$0xf]
  %v850 = vsel %vm41, %v847, 0
  %v853 = vsel %vm41, %v848, 0
  %855 = vmatprep.subr.mxu0 %v840
  %856 = vmatpush1.msra.mxu0 %v839
  %857 = vmatprep.subr.mxu0 %v842
  %858 = vmatpush1.msra.mxu0 %v841
  %859 = vmatprep.subr.mxu0 %v844
  %860 = vmatpush1.msra.mxu0 %v843
  %861 = vmatprep.subr.mxu0 %v846
  %862 = vmatpush1.msra.mxu0 %v845
  %863 = vmatprep.subr.mxu0 %v853
  %864 = vmatpush1.msra.mxu0 %v850
  %865 = vmatprep.subr.mxu0 0.0
  %866 = vmatpush1.msra.mxu0 0.0
  %867 = vmatprep.subr.mxu0 0.0
  %868 = vmatpush1.msra.mxu0 0.0
  %869 = vmatprep.subr.mxu0 0.0
  %870 = vmatpush1.msra.mxu0 0.0
  %871 = vmatprep.subr.mxu0 0.0
  %872 = vmatpush1.msra.mxu0 0.0
  %873 = vmatprep.subr.mxu0 0.0
  %874 = vmatpush1.msra.mxu0 0.0
  %875 = vmatprep.subr.mxu0 0.0
  %876 = vmatpush1.msra.mxu0 0.0
  %877 = vmatprep.subr.mxu0 0.0
  %878 = vmatpush1.msra.mxu0 0.0
  %879 = vmatprep.subr.mxu0 0.0
  %880 = vmatpush1.msra.mxu0 0.0
  %881 = vmatprep.subr.mxu0 0.0
  %882 = vmatpush1.msra.mxu0 0.0
  %883 = vmatprep.subr.mxu0 0.0
  %884 = vmatpush1.msra.mxu0 0.0
  %885 = vmatprep.subr.mxu0 0.0
  %886 = vmatpush1.msra.mxu0 0.0
  %887 = vmatprep.subr.mxu0 0.0
  %888 = vmatpush1.msra.mxu0 0.0
  %889 = vmatprep.subr.mxu0 0.0
  %890 = vmatpush1.msra.mxu0 0.0
  %891 = vmatprep.subr.mxu0 0.0
  %892 = vmatpush1.msra.mxu0 0.0
  %893 = vmatprep.subr.mxu0 0.0
  %894 = vmatpush1.msra.mxu0 0.0
  %895 = vmatprep.subr.mxu0 0.0
  %896 = vmatpush1.msra.mxu0 0.0
  %897 = vmatprep.subr.mxu0 0.0
  %898 = vmatpush1.msra.mxu0 0.0
  %899 = vmatprep.subr.mxu0 0.0
  %900 = vmatpush1.msra.mxu0 0.0
  %901 = vmatprep.subr.mxu0 0.0
  %902 = vmatpush1.msra.mxu0 0.0
  %903 = vmatprep.subr.mxu0 0.0
  %904 = vmatpush1.msra.mxu0 0.0
  %905 = vmatprep.subr.mxu0 0.0
  %906 = vmatpush1.msra.mxu0 0.0
  %907 = vmatprep.subr.mxu0 0.0
  %908 = vmatpush1.msra.mxu0 0.0
  %909 = vmatprep.subr.mxu0 0.0
  %910 = vmatpush1.msra.mxu0 0.0
  %911 = vmatprep.subr.mxu0 0.0
  %912 = vmatpush1.msra.mxu0 0.0
  %913 = vmatprep.subr.mxu0 0.0
  %914 = vmatpush1.msra.mxu0 0.0
  %915 = vmatprep.subr.mxu0 0.0
  %916 = vmatpush1.msra.mxu0 0.0
  %917 = vmatprep.subr.mxu0 0.0
  %918 = vmatpush1.msra.mxu0 0.0
  %919 = vmatprep.mubr.f32.mxu0 0.0
  %920 = vmatmul.mubr.f32.gmra.mrb[0].mxu0 %v39
  %v921 = vpop.f32.mrb[0].mxu0
  %v922 = vadd.f32 0.0, %v921
  %v923 = vpop.f32.mrb[0].mxu0
  %v924 = vadd.f32 0.0, %v923
  %925 = vdwg.mxu0
  %s926 = scalar_lea.vmem [#allocation2], 128
  %927 = vst [vmem:[%s926] sm:$0xff] %v922
  %928 = vst [vmem:[%s926 + $0x8] sm:$0xff] %v924
  %v929 = vadd.f32 %v922, %v924
  %930 = vadd.xlane.f32.xlu0 %v929
  %v931 = vpop.xlane.xlu0 %930
  %v932 = vadd.f32 %v831, %v931
  %v933 = vmul.f32 %v922, %v922
  %v934 = vmul.f32 %v924, %v924
  %v935 = vadd.f32 %v933, %v934
  %936 = vadd.xlane.f32.xlu0 %v935
  %v937 = vpop.xlane.xlu0 %936
  %v938 = vadd.f32 %v837, %v937
  %s939 = scalar_lea.vmem %s0, 720
  %v940 = vld [vmem:[%s939] sm:$0xff]
  %v941 = vld [vmem:[%s939 + $0x8] sm:$0xff]
  %v942 = vld [vmem:[%s939 + $0x10] sm:$0xff]
  %v943 = vld [vmem:[%s939 + $0x18] sm:$0xff]
  %v944 = vld [vmem:[%s939 + $0x20] sm:$0xff]
  %v945 = vld [vmem:[%s939 + $0x28] sm:$0xff]
  %v946 = vld [vmem:[%s939 + $0x30] sm:$0xff]
  %v947 = vld [vmem:[%s939 + $0x38] sm:$0xff]
  %v948 = vld [vmem:[%s939 + $0x40] sm:$0xf]
  %v949 = vld [vmem:[%s939 + $0x48] sm:$0xf]
  %v951 = vsel %vm41, %v948, 0
  %v954 = vsel %vm41, %v949, 0
  %956 = vmatprep.subr.mxu0 %v941
  %957 = vmatpush1.msra.mxu0 %v940
  %958 = vmatprep.subr.mxu0 %v943
  %959 = vmatpush1.msra.mxu0 %v942
  %960 = vmatprep.subr.mxu0 %v945
  %961 = vmatpush1.msra.mxu0 %v944
  %962 = vmatprep.subr.mxu0 %v947
  %963 = vmatpush1.msra.mxu0 %v946
  %964 = vmatprep.subr.mxu0 %v954
  %965 = vmatpush1.msra.mxu0 %v951
  %966 = vmatprep.subr.mxu0 0.0
  %967 = vmatpush1.msra.mxu0 0.0
  %968 = vmatprep.subr.mxu0 0.0
  %969 = vmatpush1.msra.mxu0 0.0
  %970 = vmatprep.subr.mxu0 0.0
  %971 = vmatpush1.msra.mxu0 0.0
  %972 = vmatprep.subr.mxu0 0.0
  %973 = vmatpush1.msra.mxu0 0.0
  %974 = vmatprep.subr.mxu0 0.0
  %975 = vmatpush1.msra.mxu0 0.0
  %976 = vmatprep.subr.mxu0 0.0
  %977 = vmatpush1.msra.mxu0 0.0
  %978 = vmatprep.subr.mxu0 0.0
  %979 = vmatpush1.msra.mxu0 0.0
  %980 = vmatprep.subr.mxu0 0.0
  %981 = vmatpush1.msra.mxu0 0.0
  %982 = vmatprep.subr.mxu0 0.0
  %983 = vmatpush1.msra.mxu0 0.0
  %984 = vmatprep.subr.mxu0 0.0
  %985 = vmatpush1.msra.mxu0 0.0
  %986 = vmatprep.subr.mxu0 0.0
  %987 = vmatpush1.msra.mxu0 0.0
  %988 = vmatprep.subr.mxu0 0.0
  %989 = vmatpush1.msra.mxu0 0.0
  %990 = vmatprep.subr.mxu0 0.0
  %991 = vmatpush1.msra.mxu0 0.0
  %992 = vmatprep.subr.mxu0 0.0
  %993 = vmatpush1.msra.mxu0 0.0
  %994 = vmatprep.subr.mxu0 0.0
  %995 = vmatpush1.msra.mxu0 0.0
  %996 = vmatprep.subr.mxu0 0.0
  %997 = vmatpush1.msra.mxu0 0.0
  %998 = vmatprep.subr.mxu0 0.0
  %999 = vmatpush1.msra.mxu0 0.0
  %1000 = vmatprep.subr.mxu0 0.0
  %1001 = vmatpush1.msra.mxu0 0.0
  %1002 = vmatprep.subr.mxu0 0.0
  %1003 = vmatpush1.msra.mxu0 0.0
  %1004 = vmatprep.subr.mxu0 0.0
  %1005 = vmatpush1.msra.mxu0 0.0
  %1006 = vmatprep.subr.mxu0 0.0
  %1007 = vmatpush1.msra.mxu0 0.0
  %1008 = vmatprep.subr.mxu0 0.0
  %1009 = vmatpush1.msra.mxu0 0.0
  %1010 = vmatprep.subr.mxu0 0.0
  %1011 = vmatpush1.msra.mxu0 0.0
  %1012 = vmatprep.subr.mxu0 0.0
  %1013 = vmatpush1.msra.mxu0 0.0
  %1014 = vmatprep.subr.mxu0 0.0
  %1015 = vmatpush1.msra.mxu0 0.0
  %1016 = vmatprep.subr.mxu0 0.0
  %1017 = vmatpush1.msra.mxu0 0.0
  %1018 = vmatprep.subr.mxu0 0.0
  %1019 = vmatpush1.msra.mxu0 0.0
  %1020 = vmatprep.mubr.f32.mxu0 0.0
  %1021 = vmatmul.mubr.f32.gmra.mrb[0].mxu0 %v39
  %v1022 = vpop.f32.mrb[0].mxu0
  %v1023 = vadd.f32 0.0, %v1022
  %v1024 = vpop.f32.mrb[0].mxu0
  %v1025 = vadd.f32 0.0, %v1024
  %1026 = vdwg.mxu0
  %s1027 = scalar_lea.vmem [#allocation2], 144
  %1028 = vst [vmem:[%s1027] sm:$0xff] %v1023
  %1029 = vst [vmem:[%s1027 + $0x8] sm:$0xff] %v1025
  %v1030 = vadd.f32 %v1023, %v1025
  %1031 = vadd.xlane.f32.xlu0 %v1030
  %v1032 = vpop.xlane.xlu0 %1031
  %v1033 = vadd.f32 %v932, %v1032
  %v1034 = vmul.f32 %v1023, %v1023
  %v1035 = vmul.f32 %v1025, %v1025
  %v1036 = vadd.f32 %v1034, %v1035
  %1037 = vadd.xlane.f32.xlu0 %v1036
  %v1038 = vpop.xlane.xlu0 %1037
  %v1039 = vadd.f32 %v938, %v1038
  %s1040 = scalar_lea.vmem %s0, 800
  %v1041 = vld [vmem:[%s1040] sm:$0xff]
  %v1042 = vld [vmem:[%s1040 + $0x8] sm:$0xff]
  %v1043 = vld [vmem:[%s1040 + $0x10] sm:$0xff]
  %v1044 = vld [vmem:[%s1040 + $0x18] sm:$0xff]
  %v1045 = vld [vmem:[%s1040 + $0x20] sm:$0xff]
  %v1046 = vld [vmem:[%s1040 + $0x28] sm:$0xff]
  %v1047 = vld [vmem:[%s1040 + $0x30] sm:$0xff]
  %v1048 = vld [vmem:[%s1040 + $0x38] sm:$0xff]
  %v1049 = vld [vmem:[%s1040 + $0x40] sm:$0xf]
  %v1050 = vld [vmem:[%s1040 + $0x48] sm:$0xf]
  %v1052 = vsel %vm41, %v1049, 0
  %v1055 = vsel %vm41, %v1050, 0
  %1057 = vmatprep.subr.mxu0 %v1042
  %1058 = vmatpush1.msra.mxu0 %v1041
  %1059 = vmatprep.subr.mxu0 %v1044
  %1060 = vmatpush1.msra.mxu0 %v1043
  %1061 = vmatprep.subr.mxu0 %v1046
  %1062 = vmatpush1.msra.mxu0 %v1045
  %1063 = vmatprep.subr.mxu0 %v1048
  %1064 = vmatpush1.msra.mxu0 %v1047
  %1065 = vmatprep.subr.mxu0 %v1055
  %1066 = vmatpush1.msra.mxu0 %v1052
  %1067 = vmatprep.subr.mxu0 0.0
  %1068 = vmatpush1.msra.mxu0 0.0
  %1069 = vmatprep.subr.mxu0 0.0
  %1070 = vmatpush1.msra.mxu0 0.0
  %1071 = vmatprep.subr.mxu0 0.0
  %1072 = vmatpush1.msra.mxu0 0.0
  %1073 = vmatprep.subr.mxu0 0.0
  %1074 = vmatpush1.msra.mxu0 0.0
  %1075 = vmatprep.subr.mxu0 0.0
  %1076 = vmatpush1.msra.mxu0 0.0
  %1077 = vmatprep.subr.mxu0 0.0
  %1078 = vmatpush1.msra.mxu0 0.0
  %1079 = vmatprep.subr.mxu0 0.0
  %1080 = vmatpush1.msra.mxu0 0.0
  %1081 = vmatprep.subr.mxu0 0.0
  %1082 = vmatpush1.msra.mxu0 0.0
  %1083 = vmatprep.subr.mxu0 0.0
  %1084 = vmatpush1.msra.mxu0 0.0
  %1085 = vmatprep.subr.mxu0 0.0
  %1086 = vmatpush1.msra.mxu0 0.0
  %1087 = vmatprep.subr.mxu0 0.0
  %1088 = vmatpush1.msra.mxu0 0.0
  %1089 = vmatprep.subr.mxu0 0.0
  %1090 = vmatpush1.msra.mxu0 0.0
  %1091 = vmatprep.subr.mxu0 0.0
  %1092 = vmatpush1.msra.mxu0 0.0
  %1093 = vmatprep.subr.mxu0 0.0
  %1094 = vmatpush1.msra.mxu0 0.0
  %1095 = vmatprep.subr.mxu0 0.0
  %1096 = vmatpush1.msra.mxu0 0.0
  %1097 = vmatprep.subr.mxu0 0.0
  %1098 = vmatpush1.msra.mxu0 0.0
  %1099 = vmatprep.subr.mxu0 0.0
  %1100 = vmatpush1.msra.mxu0 0.0
  %1101 = vmatprep.subr.mxu0 0.0
  %1102 = vmatpush1.msra.mxu0 0.0
  %1103 = vmatprep.subr.mxu0 0.0
  %1104 = vmatpush1.msra.mxu0 0.0
  %1105 = vmatprep.subr.mxu0 0.0
  %1106 = vmatpush1.msra.mxu0 0.0
  %1107 = vmatprep.subr.mxu0 0.0
  %1108 = vmatpush1.msra.mxu0 0.0
  %1109 = vmatprep.subr.mxu0 0.0
  %1110 = vmatpush1.msra.mxu0 0.0
  %1111 = vmatprep.subr.mxu0 0.0
  %1112 = vmatpush1.msra.mxu0 0.0
  %1113 = vmatprep.subr.mxu0 0.0
  %1114 = vmatpush1.msra.mxu0 0.0
  %1115 = vmatprep.subr.mxu0 0.0
  %1116 = vmatpush1.msra.mxu0 0.0
  %1117 = vmatprep.subr.mxu0 0.0
  %1118 = vmatpush1.msra.mxu0 0.0
  %1119 = vmatprep.subr.mxu0 0.0
  %1120 = vmatpush1.msra.mxu0 0.0
  %1121 = vmatprep.mubr.f32.mxu0 0.0
  %1122 = vmatmul.mubr.f32.gmra.mrb[0].mxu0 %v39
  %v1123 = vpop.f32.mrb[0].mxu0
  %v1124 = vadd.f32 0.0, %v1123
  %v1125 = vpop.f32.mrb[0].mxu0
  %v1126 = vadd.f32 0.0, %v1125
  %1127 = vdwg.mxu0
  %s1128 = scalar_lea.vmem [#allocation2], 160
  %1129 = vst [vmem:[%s1128] sm:$0xff] %v1124
  %1130 = vst [vmem:[%s1128 + $0x8] sm:$0xff] %v1126
  %v1131 = vadd.f32 %v1124, %v1126
  %1132 = vadd.xlane.f32.xlu0 %v1131
  %v1133 = vpop.xlane.xlu0 %1132
  %v1134 = vadd.f32 %v1033, %v1133
  %v1135 = vmul.f32 %v1124, %v1124
  %v1136 = vmul.f32 %v1126, %v1126
  %v1137 = vadd.f32 %v1135, %v1136
  %1138 = vadd.xlane.f32.xlu0 %v1137
  %v1139 = vpop.xlane.xlu0 %1138
  %v1140 = vadd.f32 %v1039, %v1139
  %s1141 = scalar_lea.vmem %s0, 880
  %v1142 = vld [vmem:[%s1141] sm:$0xff]
  %v1143 = vld [vmem:[%s1141 + $0x8] sm:$0xff]
  %v1144 = vld [vmem:[%s1141 + $0x10] sm:$0xff]
  %v1145 = vld [vmem:[%s1141 + $0x18] sm:$0xff]
  %v1146 = vld [vmem:[%s1141 + $0x20] sm:$0xff]
  %v1147 = vld [vmem:[%s1141 + $0x28] sm:$0xff]
  %v1148 = vld [vmem:[%s1141 + $0x30] sm:$0xff]
  %v1149 = vld [vmem:[%s1141 + $0x38] sm:$0xff]
  %v1150 = vld [vmem:[%s1141 + $0x40] sm:$0xf]
  %v1151 = vld [vmem:[%s1141 + $0x48] sm:$0xf]
  %v1153 = vsel %vm41, %v1150, 0
  %v1156 = vsel %vm41, %v1151, 0
  %1158 = vmatprep.subr.mxu0 %v1143
  %1159 = vmatpush1.msra.mxu0 %v1142
  %1160 = vmatprep.subr.mxu0 %v1145
  %1161 = vmatpush1.msra.mxu0 %v1144
  %1162 = vmatprep.subr.mxu0 %v1147
  %1163 = vmatpush1.msra.mxu0 %v1146
  %1164 = vmatprep.subr.mxu0 %v1149
  %1165 = vmatpush1.msra.mxu0 %v1148
  %1166 = vmatprep.subr.mxu0 %v1156
  %1167 = vmatpush1.msra.mxu0 %v1153
  %1168 = vmatprep.subr.mxu0 0.0
  %1169 = vmatpush1.msra.mxu0 0.0
  %1170 = vmatprep.subr.mxu0 0.0
  %1171 = vmatpush1.msra.mxu0 0.0
  %1172 = vmatprep.subr.mxu0 0.0
  %1173 = vmatpush1.msra.mxu0 0.0
  %1174 = vmatprep.subr.mxu0 0.0
  %1175 = vmatpush1.msra.mxu0 0.0
  %1176 = vmatprep.subr.mxu0 0.0
  %1177 = vmatpush1.msra.mxu0 0.0
  %1178 = vmatprep.subr.mxu0 0.0
  %1179 = vmatpush1.msra.mxu0 0.0
  %1180 = vmatprep.subr.mxu0 0.0
  %1181 = vmatpush1.msra.mxu0 0.0
  %1182 = vmatprep.subr.mxu0 0.0
  %1183 = vmatpush1.msra.mxu0 0.0
  %1184 = vmatprep.subr.mxu0 0.0
  %1185 = vmatpush1.msra.mxu0 0.0
  %1186 = vmatprep.subr.mxu0 0.0
  %1187 = vmatpush1.msra.mxu0 0.0
  %1188 = vmatprep.subr.mxu0 0.0
  %1189 = vmatpush1.msra.mxu0 0.0
  %1190 = vmatprep.subr.mxu0 0.0
  %1191 = vmatpush1.msra.mxu0 0.0
  %1192 = vmatprep.subr.mxu0 0.0
  %1193 = vmatpush1.msra.mxu0 0.0
  %1194 = vmatprep.subr.mxu0 0.0
  %1195 = vmatpush1.msra.mxu0 0.0
  %1196 = vmatprep.subr.mxu0 0.0
  %1197 = vmatpush1.msra.mxu0 0.0
  %1198 = vmatprep.subr.mxu0 0.0
  %1199 = vmatpush1.msra.mxu0 0.0
  %1200 = vmatprep.subr.mxu0 0.0
  %1201 = vmatpush1.msra.mxu0 0.0
  %1202 = vmatprep.subr.mxu0 0.0
  %1203 = vmatpush1.msra.mxu0 0.0
  %1204 = vmatprep.subr.mxu0 0.0
  %1205 = vmatpush1.msra.mxu0 0.0
  %1206 = vmatprep.subr.mxu0 0.0
  %1207 = vmatpush1.msra.mxu0 0.0
  %1208 = vmatprep.subr.mxu0 0.0
  %1209 = vmatpush1.msra.mxu0 0.0
  %1210 = vmatprep.subr.mxu0 0.0
  %1211 = vmatpush1.msra.mxu0 0.0
  %1212 = vmatprep.subr.mxu0 0.0
  %1213 = vmatpush1.msra.mxu0 0.0
  %1214 = vmatprep.subr.mxu0 0.0
  %1215 = vmatpush1.msra.mxu0 0.0
  %1216 = vmatprep.subr.mxu0 0.0
  %1217 = vmatpush1.msra.mxu0 0.0
  %1218 = vmatprep.subr.mxu0 0.0
  %1219 = vmatpush1.msra.mxu0 0.0
  %1220 = vmatprep.subr.mxu0 0.0
  %1221 = vmatpush1.msra.mxu0 0.0
  %1222 = vmatprep.mubr.f32.mxu0 0.0
  %1223 = vmatmul.mubr.f32.gmra.mrb[0].mxu0 %v39
  %v1224 = vpop.f32.mrb[0].mxu0
  %v1225 = vadd.f32 0.0, %v1224
  %v1226 = vpop.f32.mrb[0].mxu0
  %v1227 = vadd.f32 0.0, %v1226
  %1228 = vdwg.mxu0
  %s1229 = scalar_lea.vmem [#allocation2], 176
  %1230 = vst [vmem:[%s1229] sm:$0xff] %v1225
  %1231 = vst [vmem:[%s1229 + $0x8] sm:$0xff] %v1227
  %v1232 = vadd.f32 %v1225, %v1227
  %1233 = vadd.xlane.f32.xlu0 %v1232
  %v1234 = vpop.xlane.xlu0 %1233
  %v1235 = vadd.f32 %v1134, %v1234
  %v1236 = vmul.f32 %v1225, %v1225
  %v1237 = vmul.f32 %v1227, %v1227
  %v1238 = vadd.f32 %v1236, %v1237
  %1239 = vadd.xlane.f32.xlu0 %v1238
  %v1240 = vpop.xlane.xlu0 %1239
  %v1241 = vadd.f32 %v1140, %v1240
  %s1242 = scalar_lea.vmem %s0, 960
  %v1243 = vld [vmem:[%s1242] sm:$0xff]
  %v1244 = vld [vmem:[%s1242 + $0x8] sm:$0xff]
  %v1245 = vld [vmem:[%s1242 + $0x10] sm:$0xff]
  %v1246 = vld [vmem:[%s1242 + $0x18] sm:$0xff]
  %v1247 = vld [vmem:[%s1242 + $0x20] sm:$0xff]
  %v1248 = vld [vmem:[%s1242 + $0x28] sm:$0xff]
  %v1249 = vld [vmem:[%s1242 + $0x30] sm:$0xff]
  %v1250 = vld [vmem:[%s1242 + $0x38] sm:$0xff]
  %v1251 = vld [vmem:[%s1242 + $0x40] sm:$0xf]
  %v1252 = vld [vmem:[%s1242 + $0x48] sm:$0xf]
  %v1254 = vsel %vm41, %v1251, 0
  %v1257 = vsel %vm41, %v1252, 0
  %1259 = vmatprep.subr.mxu0 %v1244
  %1260 = vmatpush1.msra.mxu0 %v1243
  %1261 = vmatprep.subr.mxu0 %v1246
  %1262 = vmatpush1.msra.mxu0 %v1245
  %1263 = vmatprep.subr.mxu0 %v1248
  %1264 = vmatpush1.msra.mxu0 %v1247
  %1265 = vmatprep.subr.mxu0 %v1250
  %1266 = vmatpush1.msra.mxu0 %v1249
  %1267 = vmatprep.subr.mxu0 %v1257
  %1268 = vmatpush1.msra.mxu0 %v1254
  %1269 = vmatprep.subr.mxu0 0.0
  %1270 = vmatpush1.msra.mxu0 0.0
  %1271 = vmatprep.subr.mxu0 0.0
  %1272 = vmatpush1.msra.mxu0 0.0
  %1273 = vmatprep.subr.mxu0 0.0
  %1274 = vmatpush1.msra.mxu0 0.0
  %1275 = vmatprep.subr.mxu0 0.0
  %1276 = vmatpush1.msra.mxu0 0.0
  %1277 = vmatprep.subr.mxu0 0.0
  %1278 = vmatpush1.msra.mxu0 0.0
  %1279 = vmatprep.subr.mxu0 0.0
  %1280 = vmatpush1.msra.mxu0 0.0
  %1281 = vmatprep.subr.mxu0 0.0
  %1282 = vmatpush1.msra.mxu0 0.0
  %1283 = vmatprep.subr.mxu0 0.0
  %1284 = vmatpush1.msra.mxu0 0.0
  %1285 = vmatprep.subr.mxu0 0.0
  %1286 = vmatpush1.msra.mxu0 0.0
  %1287 = vmatprep.subr.mxu0 0.0
  %1288 = vmatpush1.msra.mxu0 0.0
  %1289 = vmatprep.subr.mxu0 0.0
  %1290 = vmatpush1.msra.mxu0 0.0
  %1291 = vmatprep.subr.mxu0 0.0
  %1292 = vmatpush1.msra.mxu0 0.0
  %1293 = vmatprep.subr.mxu0 0.0
  %1294 = vmatpush1.msra.mxu0 0.0
  %1295 = vmatprep.subr.mxu0 0.0
  %1296 = vmatpush1.msra.mxu0 0.0
  %1297 = vmatprep.subr.mxu0 0.0
  %1298 = vmatpush1.msra.mxu0 0.0
  %1299 = vmatprep.subr.mxu0 0.0
  %1300 = vmatpush1.msra.mxu0 0.0
  %1301 = vmatprep.subr.mxu0 0.0
  %1302 = vmatpush1.msra.mxu0 0.0
  %1303 = vmatprep.subr.mxu0 0.0
  %1304 = vmatpush1.msra.mxu0 0.0
  %1305 = vmatprep.subr.mxu0 0.0
  %1306 = vmatpush1.msra.mxu0 0.0
  %1307 = vmatprep.subr.mxu0 0.0
  %1308 = vmatpush1.msra.mxu0 0.0
  %1309 = vmatprep.subr.mxu0 0.0
  %1310 = vmatpush1.msra.mxu0 0.0
  %1311 = vmatprep.subr.mxu0 0.0
  %1312 = vmatpush1.msra.mxu0 0.0
  %1313 = vmatprep.subr.mxu0 0.0
  %1314 = vmatpush1.msra.mxu0 0.0
  %1315 = vmatprep.subr.mxu0 0.0
  %1316 = vmatpush1.msra.mxu0 0.0
  %1317 = vmatprep.subr.mxu0 0.0
  %1318 = vmatpush1.msra.mxu0 0.0
  %1319 = vmatprep.subr.mxu0 0.0
  %1320 = vmatpush1.msra.mxu0 0.0
  %1321 = vmatprep.subr.mxu0 0.0
  %1322 = vmatpush1.msra.mxu0 0.0
  %1323 = vmatprep.mubr.f32.mxu0 0.0
  %1324 = vmatmul.mubr.f32.gmra.mrb[0].mxu0 %v39
  %v1325 = vpop.f32.mrb[0].mxu0
  %v1326 = vadd.f32 0.0, %v1325
  %v1327 = vpop.f32.mrb[0].mxu0
  %v1328 = vadd.f32 0.0, %v1327
  %1329 = vdwg.mxu0
  %s1330 = scalar_lea.vmem [#allocation2], 192
  %1331 = vst [vmem:[%s1330] sm:$0xff] %v1326
  %1332 = vst [vmem:[%s1330 + $0x8] sm:$0xff] %v1328
  %v1333 = vadd.f32 %v1326, %v1328
  %1334 = vadd.xlane.f32.xlu0 %v1333
  %v1335 = vpop.xlane.xlu0 %1334
  %v1336 = vadd.f32 %v1235, %v1335
  %v1337 = vmul.f32 %v1326, %v1326
  %v1338 = vmul.f32 %v1328, %v1328
  %v1339 = vadd.f32 %v1337, %v1338
  %1340 = vadd.xlane.f32.xlu0 %v1339
  %v1341 = vpop.xlane.xlu0 %1340
  %v1342 = vadd.f32 %v1241, %v1341
  %s1343 = scalar_lea.vmem %s0, 1040
  %v1344 = vld [vmem:[%s1343] sm:$0xff]
  %v1345 = vld [vmem:[%s1343 + $0x8] sm:$0xff]
  %v1346 = vld [vmem:[%s1343 + $0x10] sm:$0xff]
  %v1347 = vld [vmem:[%s1343 + $0x18] sm:$0xff]
  %v1348 = vld [vmem:[%s1343 + $0x20] sm:$0xff]
  %v1349 = vld [vmem:[%s1343 + $0x28] sm:$0xff]
  %v1350 = vld [vmem:[%s1343 + $0x30] sm:$0xff]
  %v1351 = vld [vmem:[%s1343 + $0x38] sm:$0xff]
  %v1352 = vld [vmem:[%s1343 + $0x40] sm:$0xf]
  %v1353 = vld [vmem:[%s1343 + $0x48] sm:$0xf]
  %v1355 = vsel %vm41, %v1352, 0
  %v1358 = vsel %vm41, %v1353, 0
  %1360 = vmatprep.subr.mxu0 %v1345
  %1361 = vmatpush1.msra.mxu0 %v1344
  %1362 = vmatprep.subr.mxu0 %v1347
  %1363 = vmatpush1.msra.mxu0 %v1346
  %1364 = vmatprep.subr.mxu0 %v1349
  %1365 = vmatpush1.msra.mxu0 %v1348
  %1366 = vmatprep.subr.mxu0 %v1351
  %1367 = vmatpush1.msra.mxu0 %v1350
  %1368 = vmatprep.subr.mxu0 %v1358
  %1369 = vmatpush1.msra.mxu0 %v1355
  %1370 = vmatprep.subr.mxu0 0.0
  %1371 = vmatpush1.msra.mxu0 0.0
  %1372 = vmatprep.subr.mxu0 0.0
  %1373 = vmatpush1.msra.mxu0 0.0
  %1374 = vmatprep.subr.mxu0 0.0
  %1375 = vmatpush1.msra.mxu0 0.0
  %1376 = vmatprep.subr.mxu0 0.0
  %1377 = vmatpush1.msra.mxu0 0.0
  %1378 = vmatprep.subr.mxu0 0.0
  %1379 = vmatpush1.msra.mxu0 0.0
  %1380 = vmatprep.subr.mxu0 0.0
  %1381 = vmatpush1.msra.mxu0 0.0
  %1382 = vmatprep.subr.mxu0 0.0
  %1383 = vmatpush1.msra.mxu0 0.0
  %1384 = vmatprep.subr.mxu0 0.0
  %1385 = vmatpush1.msra.mxu0 0.0
  %1386 = vmatprep.subr.mxu0 0.0
  %1387 = vmatpush1.msra.mxu0 0.0
  %1388 = vmatprep.subr.mxu0 0.0
  %1389 = vmatpush1.msra.mxu0 0.0
  %1390 = vmatprep.subr.mxu0 0.0
  %1391 = vmatpush1.msra.mxu0 0.0
  %1392 = vmatprep.subr.mxu0 0.0
  %1393 = vmatpush1.msra.mxu0 0.0
  %1394 = vmatprep.subr.mxu0 0.0
  %1395 = vmatpush1.msra.mxu0 0.0
  %1396 = vmatprep.subr.mxu0 0.0
  %1397 = vmatpush1.msra.mxu0 0.0
  %1398 = vmatprep.subr.mxu0 0.0
  %1399 = vmatpush1.msra.mxu0 0.0
  %1400 = vmatprep.subr.mxu0 0.0
  %1401 = vmatpush1.msra.mxu0 0.0
  %1402 = vmatprep.subr.mxu0 0.0
  %1403 = vmatpush1.msra.mxu0 0.0
  %1404 = vmatprep.subr.mxu0 0.0
  %1405 = vmatpush1.msra.mxu0 0.0
  %1406 = vmatprep.subr.mxu0 0.0
  %1407 = vmatpush1.msra.mxu0 0.0
  %1408 = vmatprep.subr.mxu0 0.0
  %1409 = vmatpush1.msra.mxu0 0.0
  %1410 = vmatprep.subr.mxu0 0.0
  %1411 = vmatpush1.msra.mxu0 0.0
  %1412 = vmatprep.subr.mxu0 0.0
  %1413 = vmatpush1.msra.mxu0 0.0
  %1414 = vmatprep.subr.mxu0 0.0
  %1415 = vmatpush1.msra.mxu0 0.0
  %1416 = vmatprep.subr.mxu0 0.0
  %1417 = vmatpush1.msra.mxu0 0.0
  %1418 = vmatprep.subr.mxu0 0.0
  %1419 = vmatpush1.msra.mxu0 0.0
  %1420 = vmatprep.subr.mxu0 0.0
  %1421 = vmatpush1.msra.mxu0 0.0
  %1422 = vmatprep.subr.mxu0 0.0
  %1423 = vmatpush1.msra.mxu0 0.0
  %1424 = vmatprep.mubr.f32.mxu0 0.0
  %1425 = vmatmul.mubr.f32.gmra.mrb[0].mxu0 %v39
  %v1426 = vpop.f32.mrb[0].mxu0
  %v1427 = vadd.f32 0.0, %v1426
  %v1428 = vpop.f32.mrb[0].mxu0
  %v1429 = vadd.f32 0.0, %v1428
  %1430 = vdwg.mxu0
  %s1431 = scalar_lea.vmem [#allocation2], 208
  %1432 = vst [vmem:[%s1431] sm:$0xff] %v1427
  %1433 = vst [vmem:[%s1431 + $0x8] sm:$0xff] %v1429
  %v1434 = vadd.f32 %v1427, %v1429
  %1435 = vadd.xlane.f32.xlu0 %v1434
  %v1436 = vpop.xlane.xlu0 %1435
  %v1437 = vadd.f32 %v1336, %v1436
  %v1438 = vmul.f32 %v1427, %v1427
  %v1439 = vmul.f32 %v1429, %v1429
  %v1440 = vadd.f32 %v1438, %v1439
  %1441 = vadd.xlane.f32.xlu0 %v1440
  %v1442 = vpop.xlane.xlu0 %1441
  %v1443 = vadd.f32 %v1342, %v1442
  %s1444 = scalar_lea.vmem %s0, 1120
  %v1445 = vld [vmem:[%s1444] sm:$0xff]
  %v1446 = vld [vmem:[%s1444 + $0x8] sm:$0xff]
  %v1447 = vld [vmem:[%s1444 + $0x10] sm:$0xff]
  %v1448 = vld [vmem:[%s1444 + $0x18] sm:$0xff]
  %v1449 = vld [vmem:[%s1444 + $0x20] sm:$0xff]
  %v1450 = vld [vmem:[%s1444 + $0x28] sm:$0xff]
  %v1451 = vld [vmem:[%s1444 + $0x30] sm:$0xff]
  %v1452 = vld [vmem:[%s1444 + $0x38] sm:$0xff]
  %v1453 = vld [vmem:[%s1444 + $0x40] sm:$0xf]
  %v1454 = vld [vmem:[%s1444 + $0x48] sm:$0xf]
  %v1456 = vsel %vm41, %v1453, 0
  %v1459 = vsel %vm41, %v1454, 0
  %1461 = vmatprep.subr.mxu0 %v1446
  %1462 = vmatpush1.msra.mxu0 %v1445
  %1463 = vmatprep.subr.mxu0 %v1448
  %1464 = vmatpush1.msra.mxu0 %v1447
  %1465 = vmatprep.subr.mxu0 %v1450
  %1466 = vmatpush1.msra.mxu0 %v1449
  %1467 = vmatprep.subr.mxu0 %v1452
  %1468 = vmatpush1.msra.mxu0 %v1451
  %1469 = vmatprep.subr.mxu0 %v1459
  %1470 = vmatpush1.msra.mxu0 %v1456
  %1471 = vmatprep.subr.mxu0 0.0
  %1472 = vmatpush1.msra.mxu0 0.0
  %1473 = vmatprep.subr.mxu0 0.0
  %1474 = vmatpush1.msra.mxu0 0.0
  %1475 = vmatprep.subr.mxu0 0.0
  %1476 = vmatpush1.msra.mxu0 0.0
  %1477 = vmatprep.subr.mxu0 0.0
  %1478 = vmatpush1.msra.mxu0 0.0
  %1479 = vmatprep.subr.mxu0 0.0
  %1480 = vmatpush1.msra.mxu0 0.0
  %1481 = vmatprep.subr.mxu0 0.0
  %1482 = vmatpush1.msra.mxu0 0.0
  %1483 = vmatprep.subr.mxu0 0.0
  %1484 = vmatpush1.msra.mxu0 0.0
  %1485 = vmatprep.subr.mxu0 0.0
  %1486 = vmatpush1.msra.mxu0 0.0
  %1487 = vmatprep.subr.mxu0 0.0
  %1488 = vmatpush1.msra.mxu0 0.0
  %1489 = vmatprep.subr.mxu0 0.0
  %1490 = vmatpush1.msra.mxu0 0.0
  %1491 = vmatprep.subr.mxu0 0.0
  %1492 = vmatpush1.msra.mxu0 0.0
  %1493 = vmatprep.subr.mxu0 0.0
  %1494 = vmatpush1.msra.mxu0 0.0
  %1495 = vmatprep.subr.mxu0 0.0
  %1496 = vmatpush1.msra.mxu0 0.0
  %1497 = vmatprep.subr.mxu0 0.0
  %1498 = vmatpush1.msra.mxu0 0.0
  %1499 = vmatprep.subr.mxu0 0.0
  %1500 = vmatpush1.msra.mxu0 0.0
  %1501 = vmatprep.subr.mxu0 0.0
  %1502 = vmatpush1.msra.mxu0 0.0
  %1503 = vmatprep.subr.mxu0 0.0
  %1504 = vmatpush1.msra.mxu0 0.0
  %1505 = vmatprep.subr.mxu0 0.0
  %1506 = vmatpush1.msra.mxu0 0.0
  %1507 = vmatprep.subr.mxu0 0.0
  %1508 = vmatpush1.msra.mxu0 0.0
  %1509 = vmatprep.subr.mxu0 0.0
  %1510 = vmatpush1.msra.mxu0 0.0
  %1511 = vmatprep.subr.mxu0 0.0
  %1512 = vmatpush1.msra.mxu0 0.0
  %1513 = vmatprep.subr.mxu0 0.0
  %1514 = vmatpush1.msra.mxu0 0.0
  %1515 = vmatprep.subr.mxu0 0.0
  %1516 = vmatpush1.msra.mxu0 0.0
  %1517 = vmatprep.subr.mxu0 0.0
  %1518 = vmatpush1.msra.mxu0 0.0
  %1519 = vmatprep.subr.mxu0 0.0
  %1520 = vmatpush1.msra.mxu0 0.0
  %1521 = vmatprep.subr.mxu0 0.0
  %1522 = vmatpush1.msra.mxu0 0.0
  %1523 = vmatprep.subr.mxu0 0.0
  %1524 = vmatpush1.msra.mxu0 0.0
  %1525 = vmatprep.mubr.f32.mxu0 0.0
  %1526 = vmatmul.mubr.f32.gmra.mrb[0].mxu0 %v39
  %v1527 = vpop.f32.mrb[0].mxu0
  %v1528 = vadd.f32 0.0, %v1527
  %v1529 = vpop.f32.mrb[0].mxu0
  %v1530 = vadd.f32 0.0, %v1529
  %1531 = vdwg.mxu0
  %s1532 = scalar_lea.vmem [#allocation2], 224
  %1533 = vst [vmem:[%s1532] sm:$0xff] %v1528
  %1534 = vst [vmem:[%s1532 + $0x8] sm:$0xff] %v1530
  %v1535 = vadd.f32 %v1528, %v1530
  %1536 = vadd.xlane.f32.xlu0 %v1535
  %v1537 = vpop.xlane.xlu0 %1536
  %v1538 = vadd.f32 %v1437, %v1537
  %v1539 = vmul.f32 %v1528, %v1528
  %v1540 = vmul.f32 %v1530, %v1530
  %v1541 = vadd.f32 %v1539, %v1540
  %1542 = vadd.xlane.f32.xlu0 %v1541
  %v1543 = vpop.xlane.xlu0 %1542
  %v1544 = vadd.f32 %v1443, %v1543
  %s1545 = scalar_lea.vmem %s0, 1200
  %v1546 = vld [vmem:[%s1545] sm:$0xff]
  %v1547 = vld [vmem:[%s1545 + $0x8] sm:$0xff]
  %v1548 = vld [vmem:[%s1545 + $0x10] sm:$0xff]
  %v1549 = vld [vmem:[%s1545 + $0x18] sm:$0xff]
  %v1550 = vld [vmem:[%s1545 + $0x20] sm:$0xff]
  %v1551 = vld [vmem:[%s1545 + $0x28] sm:$0xff]
  %v1552 = vld [vmem:[%s1545 + $0x30] sm:$0xff]
  %v1553 = vld [vmem:[%s1545 + $0x38] sm:$0xff]
  %v1554 = vld [vmem:[%s1545 + $0x40] sm:$0xf]
  %v1555 = vld [vmem:[%s1545 + $0x48] sm:$0xf]
  %v1557 = vsel %vm41, %v1554, 0
  %v1560 = vsel %vm41, %v1555, 0
  %1562 = vmatprep.subr.mxu0 %v1547
  %1563 = vmatpush1.msra.mxu0 %v1546
  %1564 = vmatprep.subr.mxu0 %v1549
  %1565 = vmatpush1.msra.mxu0 %v1548
  %1566 = vmatprep.subr.mxu0 %v1551
  %1567 = vmatpush1.msra.mxu0 %v1550
  %1568 = vmatprep.subr.mxu0 %v1553
  %1569 = vmatpush1.msra.mxu0 %v1552
  %1570 = vmatprep.subr.mxu0 %v1560
  %1571 = vmatpush1.msra.mxu0 %v1557
  %1572 = vmatprep.subr.mxu0 0.0
  %1573 = vmatpush1.msra.mxu0 0.0
  %1574 = vmatprep.subr.mxu0 0.0
  %1575 = vmatpush1.msra.mxu0 0.0
  %1576 = vmatprep.subr.mxu0 0.0
  %1577 = vmatpush1.msra.mxu0 0.0
  %1578 = vmatprep.subr.mxu0 0.0
  %1579 = vmatpush1.msra.mxu0 0.0
  %1580 = vmatprep.subr.mxu0 0.0
  %1581 = vmatpush1.msra.mxu0 0.0
  %1582 = vmatprep.subr.mxu0 0.0
  %1583 = vmatpush1.msra.mxu0 0.0
  %1584 = vmatprep.subr.mxu0 0.0
  %1585 = vmatpush1.msra.mxu0 0.0
  %1586 = vmatprep.subr.mxu0 0.0
  %1587 = vmatpush1.msra.mxu0 0.0
  %1588 = vmatprep.subr.mxu0 0.0
  %1589 = vmatpush1.msra.mxu0 0.0
  %1590 = vmatprep.subr.mxu0 0.0
  %1591 = vmatpush1.msra.mxu0 0.0
  %1592 = vmatprep.subr.mxu0 0.0
  %1593 = vmatpush1.msra.mxu0 0.0
  %1594 = vmatprep.subr.mxu0 0.0
  %1595 = vmatpush1.msra.mxu0 0.0
  %1596 = vmatprep.subr.mxu0 0.0
  %1597 = vmatpush1.msra.mxu0 0.0
  %1598 = vmatprep.subr.mxu0 0.0
  %1599 = vmatpush1.msra.mxu0 0.0
  %1600 = vmatprep.subr.mxu0 0.0
  %1601 = vmatpush1.msra.mxu0 0.0
  %1602 = vmatprep.subr.mxu0 0.0
  %1603 = vmatpush1.msra.mxu0 0.0
  %1604 = vmatprep.subr.mxu0 0.0
  %1605 = vmatpush1.msra.mxu0 0.0
  %1606 = vmatprep.subr.mxu0 0.0
  %1607 = vmatpush1.msra.mxu0 0.0
  %1608 = vmatprep.subr.mxu0 0.0
  %1609 = vmatpush1.msra.mxu0 0.0
  %1610 = vmatprep.subr.mxu0 0.0
  %1611 = vmatpush1.msra.mxu0 0.0
  %1612 = vmatprep.subr.mxu0 0.0
  %1613 = vmatpush1.msra.mxu0 0.0
  %1614 = vmatprep.subr.mxu0 0.0
  %1615 = vmatpush1.msra.mxu0 0.0
  %1616 = vmatprep.subr.mxu0 0.0
  %1617 = vmatpush1.msra.mxu0 0.0
  %1618 = vmatprep.subr.mxu0 0.0
  %1619 = vmatpush1.msra.mxu0 0.0
  %1620 = vmatprep.subr.mxu0 0.0
  %1621 = vmatpush1.msra.mxu0 0.0
  %1622 = vmatprep.subr.mxu0 0.0
  %1623 = vmatpush1.msra.mxu0 0.0
  %1624 = vmatprep.subr.mxu0 0.0
  %1625 = vmatpush1.msra.mxu0 0.0
  %1626 = vmatprep.mubr.f32.mxu0 0.0
  %1627 = vmatmul.mubr.f32.gmra.mrb[0].mxu0 %v39
  %v1628 = vpop.f32.mrb[0].mxu0
  %v1629 = vadd.f32 0.0, %v1628
  %v1630 = vpop.f32.mrb[0].mxu0
  %v1631 = vadd.f32 0.0, %v1630
  %1632 = vdwg.mxu0
  %s1633 = scalar_lea.vmem [#allocation2], 240
  %1634 = vst [vmem:[%s1633] sm:$0xff] %v1629
  %1635 = vst [vmem:[%s1633 + $0x8] sm:$0xff] %v1631
  %v1636 = vadd.f32 %v1629, %v1631
  %1637 = vadd.xlane.f32.xlu0 %v1636
  %v1638 = vpop.xlane.xlu0 %1637
  %v1639 = vadd.f32 %v1538, %v1638
  %v1640 = vmul.f32 %v1629, %v1629
  %v1641 = vmul.f32 %v1631, %v1631
  %v1642 = vadd.f32 %v1640, %v1641
  %1643 = vadd.xlane.f32.xlu0 %v1642
  %v1644 = vpop.xlane.xlu0 %1643
  %v1645 = vadd.f32 %v1544, %v1644
  %v1646 = vmul.f32 %v1639, 0.00024414063
  %v1647 = vmul.f32 %v1645, 0.00024414063
  %v1648 = vmul.f32 %v1646, %v1646
  %v1649 = vsub.f32 %v1647, %v1648
  %v1650 = vmax.f32 %v1649, 0.0
  %v1651 = vld [vmem:[%s3] sm:$0xff]
  %v1652 = vadd.f32 %v1650, 1e-05
  %v1653 = vrsqrt.pop %v1652
  %v1654 = vmul.f32 %v1651, %v1653
  %v1655 = vld [vmem:[%s4] sm:$0xff]
  %v1656 = vmul.f32 %v1646, %v1654
  %v1657 = vsub.f32 %v1655, %v1656
  %v1658 = vld [vmem:[#allocation2] sm:$0xff]
  %v1659 = vld [vmem:[#allocation2 + $0x8] sm:$0xff]
  %v1660 = vld [vmem:[#allocation2 + $0x10] sm:$0xff]
  %v1661 = vld [vmem:[#allocation2 + $0x18] sm:$0xff]
  %v1662 = vld [vmem:[#allocation2 + $0x20] sm:$0xff]
  %v1663 = vld [vmem:[#allocation2 + $0x28] sm:$0xff]
  %v1664 = vld [vmem:[#allocation2 + $0x30] sm:$0xff]
  %v1665 = vld [vmem:[#allocation2 + $0x38] sm:$0xff]
  %v1666 = vld [vmem:[#allocation2 + $0x40] sm:$0xff]
  %v1667 = vld [vmem:[#allocation2 + $0x48] sm:$0xff]
  %v1668 = vld [vmem:[#allocation2 + $0x50] sm:$0xff]
  %v1669 = vld [vmem:[#allocation2 + $0x58] sm:$0xff]
  %v1670 = vld [vmem:[#allocation2 + $0x60] sm:$0xff]
  %v1671 = vld [vmem:[#allocation2 + $0x68] sm:$0xff]
  %v1672 = vld [vmem:[#allocation2 + $0x70] sm:$0xff]
  %v1673 = vld [vmem:[#allocation2 + $0x78] sm:$0xff]
  %v1674 = vld [vmem:[#allocation2 + $0x80] sm:$0xff]
  %v1675 = vld [vmem:[#allocation2 + $0x88] sm:$0xff]
  %v1676 = vld [vmem:[#allocation2 + $0x90] sm:$0xff]
  %v1677 = vld [vmem:[#allocation2 + $0x98] sm:$0xff]
  %v1678 = vld [vmem:[#allocation2 + $0xa0] sm:$0xff]
  %v1679 = vld [vmem:[#allocation2 + $0xa8] sm:$0xff]
  %v1680 = vld [vmem:[#allocation2 + $0xb0] sm:$0xff]
  %v1681 = vld [vmem:[#allocation2 + $0xb8] sm:$0xff]
  %v1682 = vld [vmem:[#allocation2 + $0xc0] sm:$0xff]
  %v1683 = vld [vmem:[#allocation2 + $0xc8] sm:$0xff]
  %v1684 = vld [vmem:[#allocation2 + $0xd0] sm:$0xff]
  %v1685 = vld [vmem:[#allocation2 + $0xd8] sm:$0xff]
  %v1686 = vld [vmem:[#allocation2 + $0xe0] sm:$0xff]
  %v1687 = vld [vmem:[#allocation2 + $0xe8] sm:$0xff]
  %v1688 = vld [vmem:[#allocation2 + $0xf0] sm:$0xff]
  %v1689 = vld [vmem:[#allocation2 + $0xf8] sm:$0xff]
  %1691 = vset.pattern.permute.xlu0 0
  %1692 = vperm.xlu0 %1691, %v1654
  %v1693 = vpop.permute.xlu0 %1692
  %v1695 = vmul.f32 %v1658, %v1693
  %v1696 = vmul.f32 %v1659, %v1693
  %v1697 = vmul.f32 %v1660, %v1693
  %v1698 = vmul.f32 %v1661, %v1693
  %v1699 = vmul.f32 %v1662, %v1693
  %v1700 = vmul.f32 %v1663, %v1693
  %v1701 = vmul.f32 %v1664, %v1693
  %v1702 = vmul.f32 %v1665, %v1693
  %v1703 = vmul.f32 %v1666, %v1693
  %v1704 = vmul.f32 %v1667, %v1693
  %v1705 = vmul.f32 %v1668, %v1693
  %v1706 = vmul.f32 %v1669, %v1693
  %v1707 = vmul.f32 %v1670, %v1693
  %v1708 = vmul.f32 %v1671, %v1693
  %v1709 = vmul.f32 %v1672, %v1693
  %v1710 = vmul.f32 %v1673, %v1693
  %v1711 = vmul.f32 %v1674, %v1693
  %v1712 = vmul.f32 %v1675, %v1693
  %v1713 = vmul.f32 %v1676, %v1693
  %v1714 = vmul.f32 %v1677, %v1693
  %v1715 = vmul.f32 %v1678, %v1693
  %v1716 = vmul.f32 %v1679, %v1693
  %v1717 = vmul.f32 %v1680, %v1693
  %v1718 = vmul.f32 %v1681, %v1693
  %v1719 = vmul.f32 %v1682, %v1693
  %v1720 = vmul.f32 %v1683, %v1693
  %v1721 = vmul.f32 %v1684, %v1693
  %v1722 = vmul.f32 %v1685, %v1693
  %v1723 = vmul.f32 %v1686, %v1693
  %v1724 = vmul.f32 %v1687, %v1693
  %v1725 = vmul.f32 %v1688, %v1693
  %v1726 = vmul.f32 %v1689, %v1693
  %1728 = vset.pattern.permute.xlu0 0
  %1729 = vperm.xlu0 %1728, %v1657
  %v1730 = vpop.permute.xlu0 %1729
  %v1732 = vadd.f32 %v1695, %v1730
  %v1733 = vadd.f32 %v1696, %v1730
  %v1734 = vadd.f32 %v1697, %v1730
  %v1735 = vadd.f32 %v1698, %v1730
  %v1736 = vadd.f32 %v1699, %v1730
  %v1737 = vadd.f32 %v1700, %v1730
  %v1738 = vadd.f32 %v1701, %v1730
  %v1739 = vadd.f32 %v1702, %v1730
  %v1740 = vadd.f32 %v1703, %v1730
  %v1741 = vadd.f32 %v1704, %v1730
  %v1742 = vadd.f32 %v1705, %v1730
  %v1743 = vadd.f32 %v1706, %v1730
  %v1744 = vadd.f32 %v1707, %v1730
  %v1745 = vadd.f32 %v1708, %v1730
  %v1746 = vadd.f32 %v1709, %v1730
  %v1747 = vadd.f32 %v1710, %v1730
  %v1748 = vadd.f32 %v1711, %v1730
  %v1749 = vadd.f32 %v1712, %v1730
  %v1750 = vadd.f32 %v1713, %v1730
  %v1751 = vadd.f32 %v1714, %v1730
  %v1752 = vadd.f32 %v1715, %v1730
  %v1753 = vadd.f32 %v1716, %v1730
  %v1754 = vadd.f32 %v1717, %v1730
  %v1755 = vadd.f32 %v1718, %v1730
  %v1756 = vadd.f32 %v1719, %v1730
  %v1757 = vadd.f32 %v1720, %v1730
  %v1758 = vadd.f32 %v1721, %v1730
  %v1759 = vadd.f32 %v1722, %v1730
  %v1760 = vadd.f32 %v1723, %v1730
  %v1761 = vadd.f32 %v1724, %v1730
  %v1762 = vadd.f32 %v1725, %v1730
  %v1763 = vadd.f32 %v1726, %v1730
  %v1764 = vmax.f32 %v1732, 0.0
  %v1765 = vmax.f32 %v1733, 0.0
  %v1766 = vmax.f32 %v1734, 0.0
  %v1767 = vmax.f32 %v1735, 0.0
  %v1768 = vmax.f32 %v1736, 0.0
  %v1769 = vmax.f32 %v1737, 0.0
  %v1770 = vmax.f32 %v1738, 0.0
  %v1771 = vmax.f32 %v1739, 0.0
  %v1772 = vmax.f32 %v1740, 0.0
  %v1773 = vmax.f32 %v1741, 0.0
  %v1774 = vmax.f32 %v1742, 0.0
  %v1775 = vmax.f32 %v1743, 0.0
  %v1776 = vmax.f32 %v1744, 0.0
  %v1777 = vmax.f32 %v1745, 0.0
  %v1778 = vmax.f32 %v1746, 0.0
  %v1779 = vmax.f32 %v1747, 0.0
  %v1780 = vmax.f32 %v1748, 0.0
  %v1781 = vmax.f32 %v1749, 0.0
  %v1782 = vmax.f32 %v1750, 0.0
  %v1783 = vmax.f32 %v1751, 0.0
  %v1784 = vmax.f32 %v1752, 0.0
  %v1785 = vmax.f32 %v1753, 0.0
  %v1786 = vmax.f32 %v1754, 0.0
  %v1787 = vmax.f32 %v1755, 0.0
  %v1788 = vmax.f32 %v1756, 0.0
  %v1789 = vmax.f32 %v1757, 0.0
  %v1790 = vmax.f32 %v1758, 0.0
  %v1791 = vmax.f32 %v1759, 0.0
  %v1792 = vmax.f32 %v1760, 0.0
  %v1793 = vmax.f32 %v1761, 0.0
  %v1794 = vmax.f32 %v1762, 0.0
  %v1795 = vmax.f32 %v1763, 0.0
  %1796 = vst [vmem:[#allocation2] sm:$0xff] %v1764
  %1797 = vst [vmem:[#allocation2 + $0x8] sm:$0xff] %v1765
  %1798 = vst [vmem:[#allocation2 + $0x10] sm:$0xff] %v1766
  %1799 = vst [vmem:[#allocation2 + $0x18] sm:$0xff] %v1767
  %1800 = vst [vmem:[#allocation2 + $0x20] sm:$0xff] %v1768
  %1801 = vst [vmem:[#allocation2 + $0x28] sm:$0xff] %v1769
  %1802 = vst [vmem:[#allocation2 + $0x30] sm:$0xff] %v1770
  %1803 = vst [vmem:[#allocation2 + $0x38] sm:$0xff] %v1771
  %1804 = vst [vmem:[#allocation2 + $0x40] sm:$0xff] %v1772
  %1805 = vst [vmem:[#allocation2 + $0x48] sm:$0xff] %v1773
  %1806 = vst [vmem:[#allocation2 + $0x50] sm:$0xff] %v1774
  %1807 = vst [vmem:[#allocation2 + $0x58] sm:$0xff] %v1775
  %1808 = vst [vmem:[#allocation2 + $0x60] sm:$0xff] %v1776
  %1809 = vst [vmem:[#allocation2 + $0x68] sm:$0xff] %v1777
  %1810 = vst [vmem:[#allocation2 + $0x70] sm:$0xff] %v1778
  %1811 = vst [vmem:[#allocation2 + $0x78] sm:$0xff] %v1779
  %1812 = vst [vmem:[#allocation2 + $0x80] sm:$0xff] %v1780
  %1813 = vst [vmem:[#allocation2 + $0x88] sm:$0xff] %v1781
  %1814 = vst [vmem:[#allocation2 + $0x90] sm:$0xff] %v1782
  %1815 = vst [vmem:[#allocation2 + $0x98] sm:$0xff] %v1783
  %1816 = vst [vmem:[#allocation2 + $0xa0] sm:$0xff] %v1784
  %1817 = vst [vmem:[#allocation2 + $0xa8] sm:$0xff] %v1785
  %1818 = vst [vmem:[#allocation2 + $0xb0] sm:$0xff] %v1786
  %1819 = vst [vmem:[#allocation2 + $0xb8] sm:$0xff] %v1787
  %1820 = vst [vmem:[#allocation2 + $0xc0] sm:$0xff] %v1788
  %1821 = vst [vmem:[#allocation2 + $0xc8] sm:$0xff] %v1789
  %1822 = vst [vmem:[#allocation2 + $0xd0] sm:$0xff] %v1790
  %1823 = vst [vmem:[#allocation2 + $0xd8] sm:$0xff] %v1791
  %1824 = vst [vmem:[#allocation2 + $0xe0] sm:$0xff] %v1792
  %1825 = vst [vmem:[#allocation2 + $0xe8] sm:$0xff] %v1793
  %1826 = vst [vmem:[#allocation2 + $0xf0] sm:$0xff] %v1794
  %1827 = vst [vmem:[#allocation2 + $0xf8] sm:$0xff] %v1795
  %v1828 = vld [vmem:[%s2] sm:$0xff]
  %v1829 = vld [vmem:[#allocation2] sm:$0xff]
  %v1830 = vld [vmem:[#allocation2 + $0x8] sm:$0xff]
  %v1831 = vld [vmem:[#allocation2 + $0x10] sm:$0xff]
  %v1832 = vld [vmem:[#allocation2 + $0x18] sm:$0xff]
  %1834 = vrot.lane.b32.xlu0 %v1828, 120
  %v1835 = vpop.permute.xlu0 %1834
  %vm1836 = vcmask 130048
  %v1837 = vsel %vm1836, %v1835, 0
  %1839 = vmatprep.subr.mxu0 %v1830
  %1840 = vmatpush1.msra.mxu0 %v1829
  %1841 = vmatprep.subr.mxu0 %v1832
  %1842 = vmatpush1.msra.mxu0 %v1831
  %1843 = vmatprep.subr.mxu0 0.0
  %1844 = vmatpush1.msra.mxu0 0.0
  %1845 = vmatprep.subr.mxu0 0.0
  %1846 = vmatpush1.msra.mxu0 0.0
  %1847 = vmatprep.subr.mxu0 0.0
  %1848 = vmatpush1.msra.mxu0 0.0
  %1849 = vmatprep.subr.mxu0 0.0
  %1850 = vmatpush1.msra.mxu0 0.0
  %1851 = vmatprep.subr.mxu0 0.0
  %1852 = vmatpush1.msra.mxu0 0.0
  %1853 = vmatprep.subr.mxu0 0.0
  %1854 = vmatpush1.msra.mxu0 0.0
  %1855 = vmatprep.subr.mxu0 0.0
  %1856 = vmatpush1.msra.mxu0 0.0
  %1857 = vmatprep.subr.mxu0 0.0
  %1858 = vmatpush1.msra.mxu0 0.0
  %1859 = vmatprep.subr.mxu0 0.0
  %1860 = vmatpush1.msra.mxu0 0.0
  %1861 = vmatprep.subr.mxu0 0.0
  %1862 = vmatpush1.msra.mxu0 0.0
  %1863 = vmatprep.subr.mxu0 0.0
  %1864 = vmatpush1.msra.mxu0 0.0
  %1865 = vmatprep.subr.mxu0 0.0
  %1866 = vmatpush1.msra.mxu0 0.0
  %1867 = vmatprep.subr.mxu0 0.0
  %1868 = vmatpush1.msra.mxu0 0.0
  %1869 = vmatprep.subr.mxu0 0.0
  %1870 = vmatpush1.msra.mxu0 0.0
  %1871 = vmatprep.subr.mxu0 0.0
  %1872 = vmatpush1.msra.mxu0 0.0
  %1873 = vmatprep.subr.mxu0 0.0
  %1874 = vmatpush1.msra.mxu0 0.0
  %1875 = vmatprep.subr.mxu0 0.0
  %1876 = vmatpush1.msra.mxu0 0.0
  %1877 = vmatprep.subr.mxu0 0.0
  %1878 = vmatpush1.msra.mxu0 0.0
  %1879 = vmatprep.subr.mxu0 0.0
  %1880 = vmatpush1.msra.mxu0 0.0
  %1881 = vmatprep.subr.mxu0 0.0
  %1882 = vmatpush1.msra.mxu0 0.0
  %1883 = vmatprep.subr.mxu0 0.0
  %1884 = vmatpush1.msra.mxu0 0.0
  %1885 = vmatprep.subr.mxu0 0.0
  %1886 = vmatpush1.msra.mxu0 0.0
  %1887 = vmatprep.subr.mxu0 0.0
  %1888 = vmatpush1.msra.mxu0 0.0
  %1889 = vmatprep.subr.mxu0 0.0
  %1890 = vmatpush1.msra.mxu0 0.0
  %1891 = vmatprep.subr.mxu0 0.0
  %1892 = vmatpush1.msra.mxu0 0.0
  %1893 = vmatprep.subr.mxu0 0.0
  %1894 = vmatpush1.msra.mxu0 0.0
  %1895 = vmatprep.subr.mxu0 0.0
  %1896 = vmatpush1.msra.mxu0 0.0
  %1897 = vmatprep.subr.mxu0 0.0
  %1898 = vmatpush1.msra.mxu0 0.0
  %1899 = vmatprep.subr.mxu0 0.0
  %1900 = vmatpush1.msra.mxu0 0.0
  %1901 = vmatprep.subr.mxu0 0.0
  %1902 = vmatpush1.msra.mxu0 0.0
  %1903 = vmatprep.mubr.f32.mxu0 0.0
  %1904 = vmatmul.mubr.f32.gmra.mrb[0].mxu0 %v1837
  %v1905 = vpop.f32.mrb[0].mxu0
  %v1906 = vadd.f32 0.0, %v1905
  %v1907 = vpop.f32.mrb[0].mxu0
  %v1908 = vadd.f32 0.0, %v1907
  %1909 = vdwg.mxu0
  %1910 = vst [vmem:[%s7] sm:$0xff] %v1906
  %1911 = vst [vmem:[%s7 + $0x8] sm:$0xff] %v1908
  %v1912 = vadd.f32 %v1906, %v1908
  %1913 = vadd.xlane.f32.xlu0 %v1912
  %v1914 = vpop.xlane.xlu0 %1913
  %v1915 = vadd.f32 %v1914, 0.0
  %v1916 = vmul.f32 %v1906, %v1906
  %v1917 = vmul.f32 %v1908, %v1908
  %v1918 = vadd.f32 %v1916, %v1917
  %1919 = vadd.xlane.f32.xlu0 %v1918
  %v1920 = vpop.xlane.xlu0 %1919
  %v1921 = vadd.f32 %v1920, 0.0
  %v1922 = vld [vmem:[#allocation2] sm:$0xff]
  %v1923 = vld [vmem:[#allocation2 + $0x8] sm:$0xff]
  %v1924 = vld [vmem:[#allocation2 + $0x10] sm:$0xff]
  %v1925 = vld [vmem:[#allocation2 + $0x18] sm:$0xff]
  %v1926 = vld [vmem:[#allocation2 + $0x20] sm:$0xff]
  %v1927 = vld [vmem:[#allocation2 + $0x28] sm:$0xff]
  %vm1928 = vcmask 195584
  %v1929 = vsel %vm1928, %v1828, 0
  %1931 = vmatprep.subr.mxu0 %v1923
  %1932 = vmatpush1.msra.mxu0 %v1922
  %1933 = vmatprep.subr.mxu0 %v1925
  %1934 = vmatpush1.msra.mxu0 %v1924
  %1935 = vmatprep.subr.mxu0 %v1927
  %1936 = vmatpush1.msra.mxu0 %v1926
  %1937 = vmatprep.subr.mxu0 0.0
  %1938 = vmatpush1.msra.mxu0 0.0
  %1939 = vmatprep.subr.mxu0 0.0
  %1940 = vmatpush1.msra.mxu0 0.0
  %1941 = vmatprep.subr.mxu0 0.0
  %1942 = vmatpush1.msra.mxu0 0.0
  %1943 = vmatprep.subr.mxu0 0.0
  %1944 = vmatpush1.msra.mxu0 0.0
  %1945 = vmatprep.subr.mxu0 0.0
  %1946 = vmatpush1.msra.mxu0 0.0
  %1947 = vmatprep.subr.mxu0 0.0
  %1948 = vmatpush1.msra.mxu0 0.0
  %1949 = vmatprep.subr.mxu0 0.0
  %1950 = vmatpush1.msra.mxu0 0.0
  %1951 = vmatprep.subr.mxu0 0.0
  %1952 = vmatpush1.msra.mxu0 0.0
  %1953 = vmatprep.subr.mxu0 0.0
  %1954 = vmatpush1.msra.mxu0 0.0
  %1955 = vmatprep.subr.mxu0 0.0
  %1956 = vmatpush1.msra.mxu0 0.0
  %1957 = vmatprep.subr.mxu0 0.0
  %1958 = vmatpush1.msra.mxu0 0.0
  %1959 = vmatprep.subr.mxu0 0.0
  %1960 = vmatpush1.msra.mxu0 0.0
  %1961 = vmatprep.subr.mxu0 0.0
  %1962 = vmatpush1.msra.mxu0 0.0
  %1963 = vmatprep.subr.mxu0 0.0
  %1964 = vmatpush1.msra.mxu0 0.0
  %1965 = vmatprep.subr.mxu0 0.0
  %1966 = vmatpush1.msra.mxu0 0.0
  %1967 = vmatprep.subr.mxu0 0.0
  %1968 = vmatpush1.msra.mxu0 0.0
  %1969 = vmatprep.subr.mxu0 0.0
  %1970 = vmatpush1.msra.mxu0 0.0
  %1971 = vmatprep.subr.mxu0 0.0
  %1972 = vmatpush1.msra.mxu0 0.0
  %1973 = vmatprep.subr.mxu0 0.0
  %1974 = vmatpush1.msra.mxu0 0.0
  %1975 = vmatprep.subr.mxu0 0.0
  %1976 = vmatpush1.msra.mxu0 0.0
  %1977 = vmatprep.subr.mxu0 0.0
  %1978 = vmatpush1.msra.mxu0 0.0
  %1979 = vmatprep.subr.mxu0 0.0
  %1980 = vmatpush1.msra.mxu0 0.0
  %1981 = vmatprep.subr.mxu0 0.0
  %1982 = vmatpush1.msra.mxu0 0.0
  %1983 = vmatprep.subr.mxu0 0.0
  %1984 = vmatpush1.msra.mxu0 0.0
  %1985 = vmatprep.subr.mxu0 0.0
  %1986 = vmatpush1.msra.mxu0 0.0
  %1987 = vmatprep.subr.mxu0 0.0
  %1988 = vmatpush1.msra.mxu0 0.0
  %1989 = vmatprep.subr.mxu0 0.0
  %1990 = vmatpush1.msra.mxu0 0.0
  %1991 = vmatprep.subr.mxu0 0.0
  %1992 = vmatpush1.msra.mxu0 0.0
  %1993 = vmatprep.subr.mxu0 0.0
  %1994 = vmatpush1.msra.mxu0 0.0
  %1995 = vmatprep.mubr.f32.mxu0 0.0
  %1996 = vmatmul.mubr.f32.gmra.mrb[0].mxu0 %v1929
  %v1997 = vpop.f32.mrb[0].mxu0
  %v1998 = vadd.f32 0.0, %v1997
  %v1999 = vpop.f32.mrb[0].mxu0
  %v2000 = vadd.f32 0.0, %v1999
  %2001 = vdwg.mxu0
  %s2002 = scalar_lea.vmem %s7, 16
  %2003 = vst [vmem:[%s2002] sm:$0xff] %v1998
  %2004 = vst [vmem:[%s2002 + $0x8] sm:$0xff] %v2000
  %v2005 = vadd.f32 %v1998, %v2000
  %2006 = vadd.xlane.f32.xlu0 %v2005
  %v2007 = vpop.xlane.xlu0 %2006
  %v2008 = vadd.f32 %v1915, %v2007
  %v2009 = vmul.f32 %v1998, %v1998
  %v2010 = vmul.f32 %v2000, %v2000
  %v2011 = vadd.f32 %v2009, %v2010
  %2012 = vadd.xlane.f32.xlu0 %v2011
  %v2013 = vpop.xlane.xlu0 %2012
  %v2014 = vadd.f32 %v1921, %v2013
  %v2015 = vld [vmem:[%s219] sm:$0xff]
  %v2016 = vld [vmem:[%s219 + $0x8] sm:$0xff]
  %v2017 = vld [vmem:[%s219 + $0x10] sm:$0xff]
  %v2018 = vld [vmem:[%s219 + $0x18] sm:$0xff]
  %v2019 = vld [vmem:[%s219 + $0x20] sm:$0xff]
  %v2020 = vld [vmem:[%s219 + $0x28] sm:$0xff]
  %2021 = vmatprep.subr.mxu0 %v2016
  %2022 = vmatpush1.msra.mxu0 %v2015
  %2023 = vmatprep.subr.mxu0 %v2018
  %2024 = vmatpush1.msra.mxu0 %v2017
  %2025 = vmatprep.subr.mxu0 %v2020
  %2026 = vmatpush1.msra.mxu0 %v2019
  %2027 = vmatprep.subr.mxu0 0.0
  %2028 = vmatpush1.msra.mxu0 0.0
  %2029 = vmatprep.subr.mxu0 0.0
  %2030 = vmatpush1.msra.mxu0 0.0
  %2031 = vmatprep.subr.mxu0 0.0
  %2032 = vmatpush1.msra.mxu0 0.0
  %2033 = vmatprep.subr.mxu0 0.0
  %2034 = vmatpush1.msra.mxu0 0.0
  %2035 = vmatprep.subr.mxu0 0.0
  %2036 = vmatpush1.msra.mxu0 0.0
  %2037 = vmatprep.subr.mxu0 0.0
  %2038 = vmatpush1.msra.mxu0 0.0
  %2039 = vmatprep.subr.mxu0 0.0
  %2040 = vmatpush1.msra.mxu0 0.0
  %2041 = vmatprep.subr.mxu0 0.0
  %2042 = vmatpush1.msra.mxu0 0.0
  %2043 = vmatprep.subr.mxu0 0.0
  %2044 = vmatpush1.msra.mxu0 0.0
  %2045 = vmatprep.subr.mxu0 0.0
  %2046 = vmatpush1.msra.mxu0 0.0
  %2047 = vmatprep.subr.mxu0 0.0
  %2048 = vmatpush1.msra.mxu0 0.0
  %2049 = vmatprep.subr.mxu0 0.0
  %2050 = vmatpush1.msra.mxu0 0.0
  %2051 = vmatprep.subr.mxu0 0.0
  %2052 = vmatpush1.msra.mxu0 0.0
  %2053 = vmatprep.subr.mxu0 0.0
  %2054 = vmatpush1.msra.mxu0 0.0
  %2055 = vmatprep.subr.mxu0 0.0
  %2056 = vmatpush1.msra.mxu0 0.0
  %2057 = vmatprep.subr.mxu0 0.0
  %2058 = vmatpush1.msra.mxu0 0.0
  %2059 = vmatprep.subr.mxu0 0.0
  %2060 = vmatpush1.msra.mxu0 0.0
  %2061 = vmatprep.subr.mxu0 0.0
  %2062 = vmatpush1.msra.mxu0 0.0
  %2063 = vmatprep.subr.mxu0 0.0
  %2064 = vmatpush1.msra.mxu0 0.0
  %2065 = vmatprep.subr.mxu0 0.0
  %2066 = vmatpush1.msra.mxu0 0.0
  %2067 = vmatprep.subr.mxu0 0.0
  %2068 = vmatpush1.msra.mxu0 0.0
  %2069 = vmatprep.subr.mxu0 0.0
  %2070 = vmatpush1.msra.mxu0 0.0
  %2071 = vmatprep.subr.mxu0 0.0
  %2072 = vmatpush1.msra.mxu0 0.0
  %2073 = vmatprep.subr.mxu0 0.0
  %2074 = vmatpush1.msra.mxu0 0.0
  %2075 = vmatprep.subr.mxu0 0.0
  %2076 = vmatpush1.msra.mxu0 0.0
  %2077 = vmatprep.subr.mxu0 0.0
  %2078 = vmatpush1.msra.mxu0 0.0
  %2079 = vmatprep.subr.mxu0 0.0
  %2080 = vmatpush1.msra.mxu0 0.0
  %2081 = vmatprep.subr.mxu0 0.0
  %2082 = vmatpush1.msra.mxu0 0.0
  %2083 = vmatprep.subr.mxu0 0.0
  %2084 = vmatpush1.msra.mxu0 0.0
  %2085 = vmatprep.mubr.f32.mxu0 0.0
  %2086 = vmatmul.mubr.f32.gmra.mrb[0].mxu0 %v1929
  %v2087 = vpop.f32.mrb[0].mxu0
  %v2088 = vadd.f32 0.0, %v2087
  %v2089 = vpop.f32.mrb[0].mxu0
  %v2090 = vadd.f32 0.0, %v2089
  %2091 = vdwg.mxu0
  %s2092 = scalar_lea.vmem %s7, 32
  %2093 = vst [vmem:[%s2092] sm:$0xff] %v2088
  %2094 = vst [vmem:[%s2092 + $0x8] sm:$0xff] %v2090
  %v2095 = vadd.f32 %v2088, %v2090
  %2096 = vadd.xlane.f32.xlu0 %v2095
  %v2097 = vpop.xlane.xlu0 %2096
  %v2098 = vadd.f32 %v2008, %v2097
  %v2099 = vmul.f32 %v2088, %v2088
  %v2100 = vmul.f32 %v2090, %v2090
  %v2101 = vadd.f32 %v2099, %v2100
  %2102 = vadd.xlane.f32.xlu0 %v2101
  %v2103 = vpop.xlane.xlu0 %2102
  %v2104 = vadd.f32 %v2014, %v2103
  %v2105 = vld [vmem:[%s320] sm:$0xff]
  %v2106 = vld [vmem:[%s320 + $0x8] sm:$0xff]
  %v2107 = vld [vmem:[%s320 + $0x10] sm:$0xff]
  %v2108 = vld [vmem:[%s320 + $0x18] sm:$0xff]
  %v2109 = vld [vmem:[%s320 + $0x20] sm:$0xff]
  %v2110 = vld [vmem:[%s320 + $0x28] sm:$0xff]
  %2111 = vmatprep.subr.mxu0 %v2106
  %2112 = vmatpush1.msra.mxu0 %v2105
  %2113 = vmatprep.subr.mxu0 %v2108
  %2114 = vmatpush1.msra.mxu0 %v2107
  %2115 = vmatprep.subr.mxu0 %v2110
  %2116 = vmatpush1.msra.mxu0 %v2109
  %2117 = vmatprep.subr.mxu0 0.0
  %2118 = vmatpush1.msra.mxu0 0.0
  %2119 = vmatprep.subr.mxu0 0.0
  %2120 = vmatpush1.msra.mxu0 0.0
  %2121 = vmatprep.subr.mxu0 0.0
  %2122 = vmatpush1.msra.mxu0 0.0
  %2123 = vmatprep.subr.mxu0 0.0
  %2124 = vmatpush1.msra.mxu0 0.0
  %2125 = vmatprep.subr.mxu0 0.0
  %2126 = vmatpush1.msra.mxu0 0.0
  %2127 = vmatprep.subr.mxu0 0.0
  %2128 = vmatpush1.msra.mxu0 0.0
  %2129 = vmatprep.subr.mxu0 0.0
  %2130 = vmatpush1.msra.mxu0 0.0
  %2131 = vmatprep.subr.mxu0 0.0
  %2132 = vmatpush1.msra.mxu0 0.0
  %2133 = vmatprep.subr.mxu0 0.0
  %2134 = vmatpush1.msra.mxu0 0.0
  %2135 = vmatprep.subr.mxu0 0.0
  %2136 = vmatpush1.msra.mxu0 0.0
  %2137 = vmatprep.subr.mxu0 0.0
  %2138 = vmatpush1.msra.mxu0 0.0
  %2139 = vmatprep.subr.mxu0 0.0
  %2140 = vmatpush1.msra.mxu0 0.0
  %2141 = vmatprep.subr.mxu0 0.0
  %2142 = vmatpush1.msra.mxu0 0.0
  %2143 = vmatprep.subr.mxu0 0.0
  %2144 = vmatpush1.msra.mxu0 0.0
  %2145 = vmatprep.subr.mxu0 0.0
  %2146 = vmatpush1.msra.mxu0 0.0
  %2147 = vmatprep.subr.mxu0 0.0
  %2148 = vmatpush1.msra.mxu0 0.0
  %2149 = vmatprep.subr.mxu0 0.0
  %2150 = vmatpush1.msra.mxu0 0.0
  %2151 = vmatprep.subr.mxu0 0.0
  %2152 = vmatpush1.msra.mxu0 0.0
  %2153 = vmatprep.subr.mxu0 0.0
  %2154 = vmatpush1.msra.mxu0 0.0
  %2155 = vmatprep.subr.mxu0 0.0
  %2156 = vmatpush1.msra.mxu0 0.0
  %2157 = vmatprep.subr.mxu0 0.0
  %2158 = vmatpush1.msra.mxu0 0.0
  %2159 = vmatprep.subr.mxu0 0.0
  %2160 = vmatpush1.msra.mxu0 0.0
  %2161 = vmatprep.subr.mxu0 0.0
  %2162 = vmatpush1.msra.mxu0 0.0
  %2163 = vmatprep.subr.mxu0 0.0
  %2164 = vmatpush1.msra.mxu0 0.0
  %2165 = vmatprep.subr.mxu0 0.0
  %2166 = vmatpush1.msra.mxu0 0.0
  %2167 = vmatprep.subr.mxu0 0.0
  %2168 = vmatpush1.msra.mxu0 0.0
  %2169 = vmatprep.subr.mxu0 0.0
  %2170 = vmatpush1.msra.mxu0 0.0
  %2171 = vmatprep.subr.mxu0 0.0
  %2172 = vmatpush1.msra.mxu0 0.0
  %2173 = vmatprep.subr.mxu0 0.0
  %2174 = vmatpush1.msra.mxu0 0.0
  %2175 = vmatprep.mubr.f32.mxu0 0.0
  %2176 = vmatmul.mubr.f32.gmra.mrb[0].mxu0 %v1929
  %v2177 = vpop.f32.mrb[0].mxu0
  %v2178 = vadd.f32 0.0, %v2177
  %v2179 = vpop.f32.mrb[0].mxu0
  %v2180 = vadd.f32 0.0, %v2179
  %2181 = vdwg.mxu0
  %s2182 = scalar_lea.vmem %s7, 48
  %2183 = vst [vmem:[%s2182] sm:$0xff] %v2178
  %2184 = vst [vmem:[%s2182 + $0x8] sm:$0xff] %v2180
  %v2185 = vadd.f32 %v2178, %v2180
  %2186 = vadd.xlane.f32.xlu0 %v2185
  %v2187 = vpop.xlane.xlu0 %2186
  %v2188 = vadd.f32 %v2098, %v2187
  %v2189 = vmul.f32 %v2178, %v2178
  %v2190 = vmul.f32 %v2180, %v2180
  %v2191 = vadd.f32 %v2189, %v2190
  %2192 = vadd.xlane.f32.xlu0 %v2191
  %v2193 = vpop.xlane.xlu0 %2192
  %v2194 = vadd.f32 %v2104, %v2193
  %v2195 = vld [vmem:[%s421] sm:$0xff]
  %v2196 = vld [vmem:[%s421 + $0x8] sm:$0xff]
  %v2197 = vld [vmem:[%s421 + $0x10] sm:$0xff]
  %v2198 = vld [vmem:[%s421 + $0x18] sm:$0xff]
  %v2199 = vld [vmem:[%s421 + $0x20] sm:$0xff]
  %v2200 = vld [vmem:[%s421 + $0x28] sm:$0xff]
  %2201 = vmatprep.subr.mxu0 %v2196
  %2202 = vmatpush1.msra.mxu0 %v2195
  %2203 = vmatprep.subr.mxu0 %v2198
  %2204 = vmatpush1.msra.mxu0 %v2197
  %2205 = vmatprep.subr.mxu0 %v2200
  %2206 = vmatpush1.msra.mxu0 %v2199
  %2207 = vmatprep.subr.mxu0 0.0
  %2208 = vmatpush1.msra.mxu0 0.0
  %2209 = vmatprep.subr.mxu0 0.0
  %2210 = vmatpush1.msra.mxu0 0.0
  %2211 = vmatprep.subr.mxu0 0.0
  %2212 = vmatpush1.msra.mxu0 0.0
  %2213 = vmatprep.subr.mxu0 0.0
  %2214 = vmatpush1.msra.mxu0 0.0
  %2215 = vmatprep.subr.mxu0 0.0
  %2216 = vmatpush1.msra.mxu0 0.0
  %2217 = vmatprep.subr.mxu0 0.0
  %2218 = vmatpush1.msra.mxu0 0.0
  %2219 = vmatprep.subr.mxu0 0.0
  %2220 = vmatpush1.msra.mxu0 0.0
  %2221 = vmatprep.subr.mxu0 0.0
  %2222 = vmatpush1.msra.mxu0 0.0
  %2223 = vmatprep.subr.mxu0 0.0
  %2224 = vmatpush1.msra.mxu0 0.0
  %2225 = vmatprep.subr.mxu0 0.0
  %2226 = vmatpush1.msra.mxu0 0.0
  %2227 = vmatprep.subr.mxu0 0.0
  %2228 = vmatpush1.msra.mxu0 0.0
  %2229 = vmatprep.subr.mxu0 0.0
  %2230 = vmatpush1.msra.mxu0 0.0
  %2231 = vmatprep.subr.mxu0 0.0
  %2232 = vmatpush1.msra.mxu0 0.0
  %2233 = vmatprep.subr.mxu0 0.0
  %2234 = vmatpush1.msra.mxu0 0.0
  %2235 = vmatprep.subr.mxu0 0.0
  %2236 = vmatpush1.msra.mxu0 0.0
  %2237 = vmatprep.subr.mxu0 0.0
  %2238 = vmatpush1.msra.mxu0 0.0
  %2239 = vmatprep.subr.mxu0 0.0
  %2240 = vmatpush1.msra.mxu0 0.0
  %2241 = vmatprep.subr.mxu0 0.0
  %2242 = vmatpush1.msra.mxu0 0.0
  %2243 = vmatprep.subr.mxu0 0.0
  %2244 = vmatpush1.msra.mxu0 0.0
  %2245 = vmatprep.subr.mxu0 0.0
  %2246 = vmatpush1.msra.mxu0 0.0
  %2247 = vmatprep.subr.mxu0 0.0
  %2248 = vmatpush1.msra.mxu0 0.0
  %2249 = vmatprep.subr.mxu0 0.0
  %2250 = vmatpush1.msra.mxu0 0.0
  %2251 = vmatprep.subr.mxu0 0.0
  %2252 = vmatpush1.msra.mxu0 0.0
  %2253 = vmatprep.subr.mxu0 0.0
  %2254 = vmatpush1.msra.mxu0 0.0
  %2255 = vmatprep.subr.mxu0 0.0
  %2256 = vmatpush1.msra.mxu0 0.0
  %2257 = vmatprep.subr.mxu0 0.0
  %2258 = vmatpush1.msra.mxu0 0.0
  %2259 = vmatprep.subr.mxu0 0.0
  %2260 = vmatpush1.msra.mxu0 0.0
  %2261 = vmatprep.subr.mxu0 0.0
  %2262 = vmatpush1.msra.mxu0 0.0
  %2263 = vmatprep.subr.mxu0 0.0
  %2264 = vmatpush1.msra.mxu0 0.0
  %2265 = vmatprep.mubr.f32.mxu0 0.0
  %2266 = vmatmul.mubr.f32.gmra.mrb[0].mxu0 %v1929
  %v2267 = vpop.f32.mrb[0].mxu0
  %v2268 = vadd.f32 0.0, %v2267
  %v2269 = vpop.f32.mrb[0].mxu0
  %v2270 = vadd.f32 0.0, %v2269
  %2271 = vdwg.mxu0
  %s2272 = scalar_lea.vmem %s7, 64
  %2273 = vst [vmem:[%s2272] sm:$0xff] %v2268
  %2274 = vst [vmem:[%s2272 + $0x8] sm:$0xff] %v2270
  %v2275 = vadd.f32 %v2268, %v2270
  %2276 = vadd.xlane.f32.xlu0 %v2275
  %v2277 = vpop.xlane.xlu0 %2276
  %v2278 = vadd.f32 %v2188, %v2277
  %v2279 = vmul.f32 %v2268, %v2268
  %v2280 = vmul.f32 %v2270, %v2270
  %v2281 = vadd.f32 %v2279, %v2280
  %2282 = vadd.xlane.f32.xlu0 %v2281
  %v2283 = vpop.xlane.xlu0 %2282
  %v2284 = vadd.f32 %v2194, %v2283
  %v2285 = vld [vmem:[%s522] sm:$0xff]
  %v2286 = vld [vmem:[%s522 + $0x8] sm:$0xff]
  %v2287 = vld [vmem:[%s522 + $0x10] sm:$0xff]
  %v2288 = vld [vmem:[%s522 + $0x18] sm:$0xff]
  %v2289 = vld [vmem:[%s522 + $0x20] sm:$0xff]
  %v2290 = vld [vmem:[%s522 + $0x28] sm:$0xff]
  %2291 = vmatprep.subr.mxu0 %v2286
  %2292 = vmatpush1.msra.mxu0 %v2285
  %2293 = vmatprep.subr.mxu0 %v2288
  %2294 = vmatpush1.msra.mxu0 %v2287
  %2295 = vmatprep.subr.mxu0 %v2290
  %2296 = vmatpush1.msra.mxu0 %v2289
  %2297 = vmatprep.subr.mxu0 0.0
  %2298 = vmatpush1.msra.mxu0 0.0
  %2299 = vmatprep.subr.mxu0 0.0
  %2300 = vmatpush1.msra.mxu0 0.0
  %2301 = vmatprep.subr.mxu0 0.0
  %2302 = vmatpush1.msra.mxu0 0.0
  %2303 = vmatprep.subr.mxu0 0.0
  %2304 = vmatpush1.msra.mxu0 0.0
  %2305 = vmatprep.subr.mxu0 0.0
  %2306 = vmatpush1.msra.mxu0 0.0
  %2307 = vmatprep.subr.mxu0 0.0
  %2308 = vmatpush1.msra.mxu0 0.0
  %2309 = vmatprep.subr.mxu0 0.0
  %2310 = vmatpush1.msra.mxu0 0.0
  %2311 = vmatprep.subr.mxu0 0.0
  %2312 = vmatpush1.msra.mxu0 0.0
  %2313 = vmatprep.subr.mxu0 0.0
  %2314 = vmatpush1.msra.mxu0 0.0
  %2315 = vmatprep.subr.mxu0 0.0
  %2316 = vmatpush1.msra.mxu0 0.0
  %2317 = vmatprep.subr.mxu0 0.0
  %2318 = vmatpush1.msra.mxu0 0.0
  %2319 = vmatprep.subr.mxu0 0.0
  %2320 = vmatpush1.msra.mxu0 0.0
  %2321 = vmatprep.subr.mxu0 0.0
  %2322 = vmatpush1.msra.mxu0 0.0
  %2323 = vmatprep.subr.mxu0 0.0
  %2324 = vmatpush1.msra.mxu0 0.0
  %2325 = vmatprep.subr.mxu0 0.0
  %2326 = vmatpush1.msra.mxu0 0.0
  %2327 = vmatprep.subr.mxu0 0.0
  %2328 = vmatpush1.msra.mxu0 0.0
  %2329 = vmatprep.subr.mxu0 0.0
  %2330 = vmatpush1.msra.mxu0 0.0
  %2331 = vmatprep.subr.mxu0 0.0
  %2332 = vmatpush1.msra.mxu0 0.0
  %2333 = vmatprep.subr.mxu0 0.0
  %2334 = vmatpush1.msra.mxu0 0.0
  %2335 = vmatprep.subr.mxu0 0.0
  %2336 = vmatpush1.msra.mxu0 0.0
  %2337 = vmatprep.subr.mxu0 0.0
  %2338 = vmatpush1.msra.mxu0 0.0
  %2339 = vmatprep.subr.mxu0 0.0
  %2340 = vmatpush1.msra.mxu0 0.0
  %2341 = vmatprep.subr.mxu0 0.0
  %2342 = vmatpush1.msra.mxu0 0.0
  %2343 = vmatprep.subr.mxu0 0.0
  %2344 = vmatpush1.msra.mxu0 0.0
  %2345 = vmatprep.subr.mxu0 0.0
  %2346 = vmatpush1.msra.mxu0 0.0
  %2347 = vmatprep.subr.mxu0 0.0
  %2348 = vmatpush1.msra.mxu0 0.0
  %2349 = vmatprep.subr.mxu0 0.0
  %2350 = vmatpush1.msra.mxu0 0.0
  %2351 = vmatprep.subr.mxu0 0.0
  %2352 = vmatpush1.msra.mxu0 0.0
  %2353 = vmatprep.subr.mxu0 0.0
  %2354 = vmatpush1.msra.mxu0 0.0
  %2355 = vmatprep.mubr.f32.mxu0 0.0
  %2356 = vmatmul.mubr.f32.gmra.mrb[0].mxu0 %v1929
  %v2357 = vpop.f32.mrb[0].mxu0
  %v2358 = vadd.f32 0.0, %v2357
  %v2359 = vpop.f32.mrb[0].mxu0
  %v2360 = vadd.f32 0.0, %v2359
  %2361 = vdwg.mxu0
  %s2362 = scalar_lea.vmem %s7, 80
  %2363 = vst [vmem:[%s2362] sm:$0xff] %v2358
  %2364 = vst [vmem:[%s2362 + $0x8] sm:$0xff] %v2360
  %v2365 = vadd.f32 %v2358, %v2360
  %2366 = vadd.xlane.f32.xlu0 %v2365
  %v2367 = vpop.xlane.xlu0 %2366
  %v2368 = vadd.f32 %v2278, %v2367
  %v2369 = vmul.f32 %v2358, %v2358
  %v2370 = vmul.f32 %v2360, %v2360
  %v2371 = vadd.f32 %v2369, %v2370
  %2372 = vadd.xlane.f32.xlu0 %v2371
  %v2373 = vpop.xlane.xlu0 %2372
  %v2374 = vadd.f32 %v2284, %v2373
  %v2375 = vld [vmem:[%s623] sm:$0xff]
  %v2376 = vld [vmem:[%s623 + $0x8] sm:$0xff]
  %v2377 = vld [vmem:[%s623 + $0x10] sm:$0xff]
  %v2378 = vld [vmem:[%s623 + $0x18] sm:$0xff]
  %v2379 = vld [vmem:[%s623 + $0x20] sm:$0xff]
  %v2380 = vld [vmem:[%s623 + $0x28] sm:$0xff]
  %2381 = vmatprep.subr.mxu0 %v2376
  %2382 = vmatpush1.msra.mxu0 %v2375
  %2383 = vmatprep.subr.mxu0 %v2378
  %2384 = vmatpush1.msra.mxu0 %v2377
  %2385 = vmatprep.subr.mxu0 %v2380
  %2386 = vmatpush1.msra.mxu0 %v2379
  %2387 = vmatprep.subr.mxu0 0.0
  %2388 = vmatpush1.msra.mxu0 0.0
  %2389 = vmatprep.subr.mxu0 0.0
  %2390 = vmatpush1.msra.mxu0 0.0
  %2391 = vmatprep.subr.mxu0 0.0
  %2392 = vmatpush1.msra.mxu0 0.0
  %2393 = vmatprep.subr.mxu0 0.0
  %2394 = vmatpush1.msra.mxu0 0.0
  %2395 = vmatprep.subr.mxu0 0.0
  %2396 = vmatpush1.msra.mxu0 0.0
  %2397 = vmatprep.subr.mxu0 0.0
  %2398 = vmatpush1.msra.mxu0 0.0
  %2399 = vmatprep.subr.mxu0 0.0
  %2400 = vmatpush1.msra.mxu0 0.0
  %2401 = vmatprep.subr.mxu0 0.0
  %2402 = vmatpush1.msra.mxu0 0.0
  %2403 = vmatprep.subr.mxu0 0.0
  %2404 = vmatpush1.msra.mxu0 0.0
  %2405 = vmatprep.subr.mxu0 0.0
  %2406 = vmatpush1.msra.mxu0 0.0
  %2407 = vmatprep.subr.mxu0 0.0
  %2408 = vmatpush1.msra.mxu0 0.0
  %2409 = vmatprep.subr.mxu0 0.0
  %2410 = vmatpush1.msra.mxu0 0.0
  %2411 = vmatprep.subr.mxu0 0.0
  %2412 = vmatpush1.msra.mxu0 0.0
  %2413 = vmatprep.subr.mxu0 0.0
  %2414 = vmatpush1.msra.mxu0 0.0
  %2415 = vmatprep.subr.mxu0 0.0
  %2416 = vmatpush1.msra.mxu0 0.0
  %2417 = vmatprep.subr.mxu0 0.0
  %2418 = vmatpush1.msra.mxu0 0.0
  %2419 = vmatprep.subr.mxu0 0.0
  %2420 = vmatpush1.msra.mxu0 0.0
  %2421 = vmatprep.subr.mxu0 0.0
  %2422 = vmatpush1.msra.mxu0 0.0
  %2423 = vmatprep.subr.mxu0 0.0
  %2424 = vmatpush1.msra.mxu0 0.0
  %2425 = vmatprep.subr.mxu0 0.0
  %2426 = vmatpush1.msra.mxu0 0.0
  %2427 = vmatprep.subr.mxu0 0.0
  %2428 = vmatpush1.msra.mxu0 0.0
  %2429 = vmatprep.subr.mxu0 0.0
  %2430 = vmatpush1.msra.mxu0 0.0
  %2431 = vmatprep.subr.mxu0 0.0
  %2432 = vmatpush1.msra.mxu0 0.0
  %2433 = vmatprep.subr.mxu0 0.0
  %2434 = vmatpush1.msra.mxu0 0.0
  %2435 = vmatprep.subr.mxu0 0.0
  %2436 = vmatpush1.msra.mxu0 0.0
  %2437 = vmatprep.subr.mxu0 0.0
  %2438 = vmatpush1.msra.mxu0 0.0
  %2439 = vmatprep.subr.mxu0 0.0
  %2440 = vmatpush1.msra.mxu0 0.0
  %2441 = vmatprep.subr.mxu0 0.0
  %2442 = vmatpush1.msra.mxu0 0.0
  %2443 = vmatprep.subr.mxu0 0.0
  %2444 = vmatpush1.msra.mxu0 0.0
  %2445 = vmatprep.mubr.f32.mxu0 0.0
  %2446 = vmatmul.mubr.f32.gmra.mrb[0].mxu0 %v1929
  %v2447 = vpop.f32.mrb[0].mxu0
  %v2448 = vadd.f32 0.0, %v2447
  %v2449 = vpop.f32.mrb[0].mxu0
  %v2450 = vadd.f32 0.0, %v2449
  %2451 = vdwg.mxu0
  %s2452 = scalar_lea.vmem %s7, 96
  %2453 = vst [vmem:[%s2452] sm:$0xff] %v2448
  %2454 = vst [vmem:[%s2452 + $0x8] sm:$0xff] %v2450
  %v2455 = vadd.f32 %v2448, %v2450
  %2456 = vadd.xlane.f32.xlu0 %v2455
  %v2457 = vpop.xlane.xlu0 %2456
  %v2458 = vadd.f32 %v2368, %v2457
  %v2459 = vmul.f32 %v2448, %v2448
  %v2460 = vmul.f32 %v2450, %v2450
  %v2461 = vadd.f32 %v2459, %v2460
  %2462 = vadd.xlane.f32.xlu0 %v2461
  %v2463 = vpop.xlane.xlu0 %2462
  %v2464 = vadd.f32 %v2374, %v2463
  %v2465 = vld [vmem:[%s724] sm:$0xff]
  %v2466 = vld [vmem:[%s724 + $0x8] sm:$0xff]
  %v2467 = vld [vmem:[%s724 + $0x10] sm:$0xff]
  %v2468 = vld [vmem:[%s724 + $0x18] sm:$0xff]
  %v2469 = vsel %vm1836, %v1828, 0
  %2471 = vmatprep.subr.mxu0 %v2466
  %2472 = vmatpush1.msra.mxu0 %v2465
  %2473 = vmatprep.subr.mxu0 %v2468
  %2474 = vmatpush1.msra.mxu0 %v2467
  %2475 = vmatprep.subr.mxu0 0.0
  %2476 = vmatpush1.msra.mxu0 0.0
  %2477 = vmatprep.subr.mxu0 0.0
  %2478 = vmatpush1.msra.mxu0 0.0
  %2479 = vmatprep.subr.mxu0 0.0
  %2480 = vmatpush1.msra.mxu0 0.0
  %2481 = vmatprep.subr.mxu0 0.0
  %2482 = vmatpush1.msra.mxu0 0.0
  %2483 = vmatprep.subr.mxu0 0.0
  %2484 = vmatpush1.msra.mxu0 0.0
  %2485 = vmatprep.subr.mxu0 0.0
  %2486 = vmatpush1.msra.mxu0 0.0
  %2487 = vmatprep.subr.mxu0 0.0
  %2488 = vmatpush1.msra.mxu0 0.0
  %2489 = vmatprep.subr.mxu0 0.0
  %2490 = vmatpush1.msra.mxu0 0.0
  %2491 = vmatprep.subr.mxu0 0.0
  %2492 = vmatpush1.msra.mxu0 0.0
  %2493 = vmatprep.subr.mxu0 0.0
  %2494 = vmatpush1.msra.mxu0 0.0
  %2495 = vmatprep.subr.mxu0 0.0
  %2496 = vmatpush1.msra.mxu0 0.0
  %2497 = vmatprep.subr.mxu0 0.0
  %2498 = vmatpush1.msra.mxu0 0.0
  %2499 = vmatprep.subr.mxu0 0.0
  %2500 = vmatpush1.msra.mxu0 0.0
  %2501 = vmatprep.subr.mxu0 0.0
  %2502 = vmatpush1.msra.mxu0 0.0
  %2503 = vmatprep.subr.mxu0 0.0
  %2504 = vmatpush1.msra.mxu0 0.0
  %2505 = vmatprep.subr.mxu0 0.0
  %2506 = vmatpush1.msra.mxu0 0.0
  %2507 = vmatprep.subr.mxu0 0.0
  %2508 = vmatpush1.msra.mxu0 0.0
  %2509 = vmatprep.subr.mxu0 0.0
  %2510 = vmatpush1.msra.mxu0 0.0
  %2511 = vmatprep.subr.mxu0 0.0
  %2512 = vmatpush1.msra.mxu0 0.0
  %2513 = vmatprep.subr.mxu0 0.0
  %2514 = vmatpush1.msra.mxu0 0.0
  %2515 = vmatprep.subr.mxu0 0.0
  %2516 = vmatpush1.msra.mxu0 0.0
  %2517 = vmatprep.subr.mxu0 0.0
  %2518 = vmatpush1.msra.mxu0 0.0
  %2519 = vmatprep.subr.mxu0 0.0
  %2520 = vmatpush1.msra.mxu0 0.0
  %2521 = vmatprep.subr.mxu0 0.0
  %2522 = vmatpush1.msra.mxu0 0.0
  %2523 = vmatprep.subr.mxu0 0.0
  %2524 = vmatpush1.msra.mxu0 0.0
  %2525 = vmatprep.subr.mxu0 0.0
  %2526 = vmatpush1.msra.mxu0 0.0
  %2527 = vmatprep.subr.mxu0 0.0
  %2528 = vmatpush1.msra.mxu0 0.0
  %2529 = vmatprep.subr.mxu0 0.0
  %2530 = vmatpush1.msra.mxu0 0.0
  %2531 = vmatprep.subr.mxu0 0.0
  %2532 = vmatpush1.msra.mxu0 0.0
  %2533 = vmatprep.subr.mxu0 0.0
  %2534 = vmatpush1.msra.mxu0 0.0
  %2535 = vmatprep.mubr.f32.mxu0 0.0
  %2536 = vmatmul.mubr.f32.gmra.mrb[0].mxu0 %v2469
  %v2537 = vpop.f32.mrb[0].mxu0
  %v2538 = vadd.f32 0.0, %v2537
  %v2539 = vpop.f32.mrb[0].mxu0
  %v2540 = vadd.f32 0.0, %v2539
  %2541 = vdwg.mxu0
  %s2542 = scalar_lea.vmem %s7, 112
  %2543 = vst [vmem:[%s2542] sm:$0xff] %v2538
  %2544 = vst [vmem:[%s2542 + $0x8] sm:$0xff] %v2540
  %v2545 = vadd.f32 %v2538, %v2540
  %2546 = vadd.xlane.f32.xlu0 %v2545
  %v2547 = vpop.xlane.xlu0 %2546
  %v2548 = vadd.f32 %v2458, %v2547
  %v2549 = vmul.f32 %v2538, %v2538
  %v2550 = vmul.f32 %v2540, %v2540
  %v2551 = vadd.f32 %v2549, %v2550
  %2552 = vadd.xlane.f32.xlu0 %v2551
  %v2553 = vpop.xlane.xlu0 %2552
  %v2554 = vadd.f32 %v2464, %v2553
  %v2555 = vld [vmem:[%s926] sm:$0xff]
  %v2556 = vld [vmem:[%s926 + $0x8] sm:$0xff]
  %v2557 = vld [vmem:[%s926 + $0x10] sm:$0xff]
  %v2558 = vld [vmem:[%s926 + $0x18] sm:$0xff]
  %2559 = vmatprep.subr.mxu0 %v2556
  %2560 = vmatpush1.msra.mxu0 %v2555
  %2561 = vmatprep.subr.mxu0 %v2558
  %2562 = vmatpush1.msra.mxu0 %v2557
  %2563 = vmatprep.subr.mxu0 0.0
  %2564 = vmatpush1.msra.mxu0 0.0
  %2565 = vmatprep.subr.mxu0 0.0
  %2566 = vmatpush1.msra.mxu0 0.0
  %2567 = vmatprep.subr.mxu0 0.0
  %2568 = vmatpush1.msra.mxu0 0.0
  %2569 = vmatprep.subr.mxu0 0.0
  %2570 = vmatpush1.msra.mxu0 0.0
  %2571 = vmatprep.subr.mxu0 0.0
  %2572 = vmatpush1.msra.mxu0 0.0
  %2573 = vmatprep.subr.mxu0 0.0
  %2574 = vmatpush1.msra.mxu0 0.0
  %2575 = vmatprep.subr.mxu0 0.0
  %2576 = vmatpush1.msra.mxu0 0.0
  %2577 = vmatprep.subr.mxu0 0.0
  %2578 = vmatpush1.msra.mxu0 0.0
  %2579 = vmatprep.subr.mxu0 0.0
  %2580 = vmatpush1.msra.mxu0 0.0
  %2581 = vmatprep.subr.mxu0 0.0
  %2582 = vmatpush1.msra.mxu0 0.0
  %2583 = vmatprep.subr.mxu0 0.0
  %2584 = vmatpush1.msra.mxu0 0.0
  %2585 = vmatprep.subr.mxu0 0.0
  %2586 = vmatpush1.msra.mxu0 0.0
  %2587 = vmatprep.subr.mxu0 0.0
  %2588 = vmatpush1.msra.mxu0 0.0
  %2589 = vmatprep.subr.mxu0 0.0
  %2590 = vmatpush1.msra.mxu0 0.0
  %2591 = vmatprep.subr.mxu0 0.0
  %2592 = vmatpush1.msra.mxu0 0.0
  %2593 = vmatprep.subr.mxu0 0.0
  %2594 = vmatpush1.msra.mxu0 0.0
  %2595 = vmatprep.subr.mxu0 0.0
  %2596 = vmatpush1.msra.mxu0 0.0
  %2597 = vmatprep.subr.mxu0 0.0
  %2598 = vmatpush1.msra.mxu0 0.0
  %2599 = vmatprep.subr.mxu0 0.0
  %2600 = vmatpush1.msra.mxu0 0.0
  %2601 = vmatprep.subr.mxu0 0.0
  %2602 = vmatpush1.msra.mxu0 0.0
  %2603 = vmatprep.subr.mxu0 0.0
  %2604 = vmatpush1.msra.mxu0 0.0
  %2605 = vmatprep.subr.mxu0 0.0
  %2606 = vmatpush1.msra.mxu0 0.0
  %2607 = vmatprep.subr.mxu0 0.0
  %2608 = vmatpush1.msra.mxu0 0.0
  %2609 = vmatprep.subr.mxu0 0.0
  %2610 = vmatpush1.msra.mxu0 0.0
  %2611 = vmatprep.subr.mxu0 0.0
  %2612 = vmatpush1.msra.mxu0 0.0
  %2613 = vmatprep.subr.mxu0 0.0
  %2614 = vmatpush1.msra.mxu0 0.0
  %2615 = vmatprep.subr.mxu0 0.0
  %2616 = vmatpush1.msra.mxu0 0.0
  %2617 = vmatprep.subr.mxu0 0.0
  %2618 = vmatpush1.msra.mxu0 0.0
  %2619 = vmatprep.subr.mxu0 0.0
  %2620 = vmatpush1.msra.mxu0 0.0
  %2621 = vmatprep.subr.mxu0 0.0
  %2622 = vmatpush1.msra.mxu0 0.0
  %2623 = vmatprep.mubr.f32.mxu0 0.0
  %2624 = vmatmul.mubr.f32.gmra.mrb[0].mxu0 %v1837
  %v2625 = vpop.f32.mrb[0].mxu0
  %v2626 = vadd.f32 0.0, %v2625
  %v2627 = vpop.f32.mrb[0].mxu0
  %v2628 = vadd.f32 0.0, %v2627
  %2629 = vdwg.mxu0
  %s2630 = scalar_lea.vmem %s7, 128
  %2631 = vst [vmem:[%s2630] sm:$0xff] %v2626
  %2632 = vst [vmem:[%s2630 + $0x8] sm:$0xff] %v2628
  %v2633 = vadd.f32 %v2626, %v2628
  %2634 = vadd.xlane.f32.xlu0 %v2633
  %v2635 = vpop.xlane.xlu0 %2634
  %v2636 = vadd.f32 %v2548, %v2635
  %v2637 = vmul.f32 %v2626, %v2626
  %v2638 = vmul.f32 %v2628, %v2628
  %v2639 = vadd.f32 %v2637, %v2638
  %2640 = vadd.xlane.f32.xlu0 %v2639
  %v2641 = vpop.xlane.xlu0 %2640
  %v2642 = vadd.f32 %v2554, %v2641
  %v2643 = vld [vmem:[%s926] sm:$0xff]
  %v2644 = vld [vmem:[%s926 + $0x8] sm:$0xff]
  %v2645 = vld [vmem:[%s926 + $0x10] sm:$0xff]
  %v2646 = vld [vmem:[%s926 + $0x18] sm:$0xff]
  %v2647 = vld [vmem:[%s926 + $0x20] sm:$0xff]
  %v2648 = vld [vmem:[%s926 + $0x28] sm:$0xff]
  %2649 = vmatprep.subr.mxu0 %v2644
  %2650 = vmatpush1.msra.mxu0 %v2643
  %2651 = vmatprep.subr.mxu0 %v2646
  %2652 = vmatpush1.msra.mxu0 %v2645
  %2653 = vmatprep.subr.mxu0 %v2648
  %2654 = vmatpush1.msra.mxu0 %v2647
  %2655 = vmatprep.subr.mxu0 0.0
  %2656 = vmatpush1.msra.mxu0 0.0
  %2657 = vmatprep.subr.mxu0 0.0
  %2658 = vmatpush1.msra.mxu0 0.0
  %2659 = vmatprep.subr.mxu0 0.0
  %2660 = vmatpush1.msra.mxu0 0.0
  %2661 = vmatprep.subr.mxu0 0.0
  %2662 = vmatpush1.msra.mxu0 0.0
  %2663 = vmatprep.subr.mxu0 0.0
  %2664 = vmatpush1.msra.mxu0 0.0
  %2665 = vmatprep.subr.mxu0 0.0
  %2666 = vmatpush1.msra.mxu0 0.0
  %2667 = vmatprep.subr.mxu0 0.0
  %2668 = vmatpush1.msra.mxu0 0.0
  %2669 = vmatprep.subr.mxu0 0.0
  %2670 = vmatpush1.msra.mxu0 0.0
  %2671 = vmatprep.subr.mxu0 0.0
  %2672 = vmatpush1.msra.mxu0 0.0
  %2673 = vmatprep.subr.mxu0 0.0
  %2674 = vmatpush1.msra.mxu0 0.0
  %2675 = vmatprep.subr.mxu0 0.0
  %2676 = vmatpush1.msra.mxu0 0.0
  %2677 = vmatprep.subr.mxu0 0.0
  %2678 = vmatpush1.msra.mxu0 0.0
  %2679 = vmatprep.subr.mxu0 0.0
  %2680 = vmatpush1.msra.mxu0 0.0
  %2681 = vmatprep.subr.mxu0 0.0
  %2682 = vmatpush1.msra.mxu0 0.0
  %2683 = vmatprep.subr.mxu0 0.0
  %2684 = vmatpush1.msra.mxu0 0.0
  %2685 = vmatprep.subr.mxu0 0.0
  %2686 = vmatpush1.msra.mxu0 0.0
  %2687 = vmatprep.subr.mxu0 0.0
  %2688 = vmatpush1.msra.mxu0 0.0
  %2689 = vmatprep.subr.mxu0 0.0
  %2690 = vmatpush1.msra.mxu0 0.0
  %2691 = vmatprep.subr.mxu0 0.0
  %2692 = vmatpush1.msra.mxu0 0.0
  %2693 = vmatprep.subr.mxu0 0.0
  %2694 = vmatpush1.msra.mxu0 0.0
  %2695 = vmatprep.subr.mxu0 0.0
  %2696 = vmatpush1.msra.mxu0 0.0
  %2697 = vmatprep.subr.mxu0 0.0
  %2698 = vmatpush1.msra.mxu0 0.0
  %2699 = vmatprep.subr.mxu0 0.0
  %2700 = vmatpush1.msra.mxu0 0.0
  %2701 = vmatprep.subr.mxu0 0.0
  %2702 = vmatpush1.msra.mxu0 0.0
  %2703 = vmatprep.subr.mxu0 0.0
  %2704 = vmatpush1.msra.mxu0 0.0
  %2705 = vmatprep.subr.mxu0 0.0
  %2706 = vmatpush1.msra.mxu0 0.0
  %2707 = vmatprep.subr.mxu0 0.0
  %2708 = vmatpush1.msra.mxu0 0.0
  %2709 = vmatprep.subr.mxu0 0.0
  %2710 = vmatpush1.msra.mxu0 0.0
  %2711 = vmatprep.subr.mxu0 0.0
  %2712 = vmatpush1.msra.mxu0 0.0
  %2713 = vmatprep.mubr.f32.mxu0 0.0
  %2714 = vmatmul.mubr.f32.gmra.mrb[0].mxu0 %v1929
  %v2715 = vpop.f32.mrb[0].mxu0
  %v2716 = vadd.f32 0.0, %v2715
  %v2717 = vpop.f32.mrb[0].mxu0
  %v2718 = vadd.f32 0.0, %v2717
  %2719 = vdwg.mxu0
  %s2720 = scalar_lea.vmem %s7, 144
  %2721 = vst [vmem:[%s2720] sm:$0xff] %v2716
  %2722 = vst [vmem:[%s2720 + $0x8] sm:$0xff] %v2718
  %v2723 = vadd.f32 %v2716, %v2718
  %2724 = vadd.xlane.f32.xlu0 %v2723
  %v2725 = vpop.xlane.xlu0 %2724
  %v2726 = vadd.f32 %v2636, %v2725
  %v2727 = vmul.f32 %v2716, %v2716
  %v2728 = vmul.f32 %v2718, %v2718
  %v2729 = vadd.f32 %v2727, %v2728
  %2730 = vadd.xlane.f32.xlu0 %v2729
  %v2731 = vpop.xlane.xlu0 %2730
  %v2732 = vadd.f32 %v2642, %v2731
  %v2733 = vld [vmem:[%s1027] sm:$0xff]
  %v2734 = vld [vmem:[%s1027 + $0x8] sm:$0xff]
  %v2735 = vld [vmem:[%s1027 + $0x10] sm:$0xff]
  %v2736 = vld [vmem:[%s1027 + $0x18] sm:$0xff]
  %v2737 = vld [vmem:[%s1027 + $0x20] sm:$0xff]
  %v2738 = vld [vmem:[%s1027 + $0x28] sm:$0xff]
  %2739 = vmatprep.subr.mxu0 %v2734
  %2740 = vmatpush1.msra.mxu0 %v2733
  %2741 = vmatprep.subr.mxu0 %v2736
  %2742 = vmatpush1.msra.mxu0 %v2735
  %2743 = vmatprep.subr.mxu0 %v2738
  %2744 = vmatpush1.msra.mxu0 %v2737
  %2745 = vmatprep.subr.mxu0 0.0
  %2746 = vmatpush1.msra.mxu0 0.0
  %2747 = vmatprep.subr.mxu0 0.0
  %2748 = vmatpush1.msra.mxu0 0.0
  %2749 = vmatprep.subr.mxu0 0.0
  %2750 = vmatpush1.msra.mxu0 0.0
  %2751 = vmatprep.subr.mxu0 0.0
  %2752 = vmatpush1.msra.mxu0 0.0
  %2753 = vmatprep.subr.mxu0 0.0
  %2754 = vmatpush1.msra.mxu0 0.0
  %2755 = vmatprep.subr.mxu0 0.0
  %2756 = vmatpush1.msra.mxu0 0.0
  %2757 = vmatprep.subr.mxu0 0.0
  %2758 = vmatpush1.msra.mxu0 0.0
  %2759 = vmatprep.subr.mxu0 0.0
  %2760 = vmatpush1.msra.mxu0 0.0
  %2761 = vmatprep.subr.mxu0 0.0
  %2762 = vmatpush1.msra.mxu0 0.0
  %2763 = vmatprep.subr.mxu0 0.0
  %2764 = vmatpush1.msra.mxu0 0.0
  %2765 = vmatprep.subr.mxu0 0.0
  %2766 = vmatpush1.msra.mxu0 0.0
  %2767 = vmatprep.subr.mxu0 0.0
  %2768 = vmatpush1.msra.mxu0 0.0
  %2769 = vmatprep.subr.mxu0 0.0
  %2770 = vmatpush1.msra.mxu0 0.0
  %2771 = vmatprep.subr.mxu0 0.0
  %2772 = vmatpush1.msra.mxu0 0.0
  %2773 = vmatprep.subr.mxu0 0.0
  %2774 = vmatpush1.msra.mxu0 0.0
  %2775 = vmatprep.subr.mxu0 0.0
  %2776 = vmatpush1.msra.mxu0 0.0
  %2777 = vmatprep.subr.mxu0 0.0
  %2778 = vmatpush1.msra.mxu0 0.0
  %2779 = vmatprep.subr.mxu0 0.0
  %2780 = vmatpush1.msra.mxu0 0.0
  %2781 = vmatprep.subr.mxu0 0.0
  %2782 = vmatpush1.msra.mxu0 0.0
  %2783 = vmatprep.subr.mxu0 0.0
  %2784 = vmatpush1.msra.mxu0 0.0
  %2785 = vmatprep.subr.mxu0 0.0
  %2786 = vmatpush1.msra.mxu0 0.0
  %2787 = vmatprep.subr.mxu0 0.0
  %2788 = vmatpush1.msra.mxu0 0.0
  %2789 = vmatprep.subr.mxu0 0.0
  %2790 = vmatpush1.msra.mxu0 0.0
  %2791 = vmatprep.subr.mxu0 0.0
  %2792 = vmatpush1.msra.mxu0 0.0
  %2793 = vmatprep.subr.mxu0 0.0
  %2794 = vmatpush1.msra.mxu0 0.0
  %2795 = vmatprep.subr.mxu0 0.0
  %2796 = vmatpush1.msra.mxu0 0.0
  %2797 = vmatprep.subr.mxu0 0.0
  %2798 = vmatpush1.msra.mxu0 0.0
  %2799 = vmatprep.subr.mxu0 0.0
  %2800 = vmatpush1.msra.mxu0 0.0
  %2801 = vmatprep.subr.mxu0 0.0
  %2802 = vmatpush1.msra.mxu0 0.0
  %2803 = vmatprep.mubr.f32.mxu0 0.0
  %2804 = vmatmul.mubr.f32.gmra.mrb[0].mxu0 %v1929
  %v2805 = vpop.f32.mrb[0].mxu0
  %v2806 = vadd.f32 0.0, %v2805
  %v2807 = vpop.f32.mrb[0].mxu0
  %v2808 = vadd.f32 0.0, %v2807
  %2809 = vdwg.mxu0
  %s2810 = scalar_lea.vmem %s7, 160
  %2811 = vst [vmem:[%s2810] sm:$0xff] %v2806
  %2812 = vst [vmem:[%s2810 + $0x8] sm:$0xff] %v2808
  %v2813 = vadd.f32 %v2806, %v2808
  %2814 = vadd.xlane.f32.xlu0 %v2813
  %v2815 = vpop.xlane.xlu0 %2814
  %v2816 = vadd.f32 %v2726, %v2815
  %v2817 = vmul.f32 %v2806, %v2806
  %v2818 = vmul.f32 %v2808, %v2808
  %v2819 = vadd.f32 %v2817, %v2818
  %2820 = vadd.xlane.f32.xlu0 %v2819
  %v2821 = vpop.xlane.xlu0 %2820
  %v2822 = vadd.f32 %v2732, %v2821
  %v2823 = vld [vmem:[%s1128] sm:$0xff]
  %v2824 = vld [vmem:[%s1128 + $0x8] sm:$0xff]
  %v2825 = vld [vmem:[%s1128 + $0x10] sm:$0xff]
  %v2826 = vld [vmem:[%s1128 + $0x18] sm:$0xff]
  %v2827 = vld [vmem:[%s1128 + $0x20] sm:$0xff]
  %v2828 = vld [vmem:[%s1128 + $0x28] sm:$0xff]
  %2829 = vmatprep.subr.mxu0 %v2824
  %2830 = vmatpush1.msra.mxu0 %v2823
  %2831 = vmatprep.subr.mxu0 %v2826
  %2832 = vmatpush1.msra.mxu0 %v2825
  %2833 = vmatprep.subr.mxu0 %v2828
  %2834 = vmatpush1.msra.mxu0 %v2827
  %2835 = vmatprep.subr.mxu0 0.0
  %2836 = vmatpush1.msra.mxu0 0.0
  %2837 = vmatprep.subr.mxu0 0.0
  %2838 = vmatpush1.msra.mxu0 0.0
  %2839 = vmatprep.subr.mxu0 0.0
  %2840 = vmatpush1.msra.mxu0 0.0
  %2841 = vmatprep.subr.mxu0 0.0
  %2842 = vmatpush1.msra.mxu0 0.0
  %2843 = vmatprep.subr.mxu0 0.0
  %2844 = vmatpush1.msra.mxu0 0.0
  %2845 = vmatprep.subr.mxu0 0.0
  %2846 = vmatpush1.msra.mxu0 0.0
  %2847 = vmatprep.subr.mxu0 0.0
  %2848 = vmatpush1.msra.mxu0 0.0
  %2849 = vmatprep.subr.mxu0 0.0
  %2850 = vmatpush1.msra.mxu0 0.0
  %2851 = vmatprep.subr.mxu0 0.0
  %2852 = vmatpush1.msra.mxu0 0.0
  %2853 = vmatprep.subr.mxu0 0.0
  %2854 = vmatpush1.msra.mxu0 0.0
  %2855 = vmatprep.subr.mxu0 0.0
  %2856 = vmatpush1.msra.mxu0 0.0
  %2857 = vmatprep.subr.mxu0 0.0
  %2858 = vmatpush1.msra.mxu0 0.0
  %2859 = vmatprep.subr.mxu0 0.0
  %2860 = vmatpush1.msra.mxu0 0.0
  %2861 = vmatprep.subr.mxu0 0.0
  %2862 = vmatpush1.msra.mxu0 0.0
  %2863 = vmatprep.subr.mxu0 0.0
  %2864 = vmatpush1.msra.mxu0 0.0
  %2865 = vmatprep.subr.mxu0 0.0
  %2866 = vmatpush1.msra.mxu0 0.0
  %2867 = vmatprep.subr.mxu0 0.0
  %2868 = vmatpush1.msra.mxu0 0.0
  %2869 = vmatprep.subr.mxu0 0.0
  %2870 = vmatpush1.msra.mxu0 0.0
  %2871 = vmatprep.subr.mxu0 0.0
  %2872 = vmatpush1.msra.mxu0 0.0
  %2873 = vmatprep.subr.mxu0 0.0
  %2874 = vmatpush1.msra.mxu0 0.0
  %2875 = vmatprep.subr.mxu0 0.0
  %2876 = vmatpush1.msra.mxu0 0.0
  %2877 = vmatprep.subr.mxu0 0.0
  %2878 = vmatpush1.msra.mxu0 0.0
  %2879 = vmatprep.subr.mxu0 0.0
  %2880 = vmatpush1.msra.mxu0 0.0
  %2881 = vmatprep.subr.mxu0 0.0
  %2882 = vmatpush1.msra.mxu0 0.0
  %2883 = vmatprep.subr.mxu0 0.0
  %2884 = vmatpush1.msra.mxu0 0.0
  %2885 = vmatprep.subr.mxu0 0.0
  %2886 = vmatpush1.msra.mxu0 0.0
  %2887 = vmatprep.subr.mxu0 0.0
  %2888 = vmatpush1.msra.mxu0 0.0
  %2889 = vmatprep.subr.mxu0 0.0
  %2890 = vmatpush1.msra.mxu0 0.0
  %2891 = vmatprep.subr.mxu0 0.0
  %2892 = vmatpush1.msra.mxu0 0.0
  %2893 = vmatprep.mubr.f32.mxu0 0.0
  %2894 = vmatmul.mubr.f32.gmra.mrb[0].mxu0 %v1929
  %v2895 = vpop.f32.mrb[0].mxu0
  %v2896 = vadd.f32 0.0, %v2895
  %v2897 = vpop.f32.mrb[0].mxu0
  %v2898 = vadd.f32 0.0, %v2897
  %2899 = vdwg.mxu0
  %s2900 = scalar_lea.vmem %s7, 176
  %2901 = vst [vmem:[%s2900] sm:$0xff] %v2896
  %2902 = vst [vmem:[%s2900 + $0x8] sm:$0xff] %v2898
  %v2903 = vadd.f32 %v2896, %v2898
  %2904 = vadd.xlane.f32.xlu0 %v2903
  %v2905 = vpop.xlane.xlu0 %2904
  %v2906 = vadd.f32 %v2816, %v2905
  %v2907 = vmul.f32 %v2896, %v2896
  %v2908 = vmul.f32 %v2898, %v2898
  %v2909 = vadd.f32 %v2907, %v2908
  %2910 = vadd.xlane.f32.xlu0 %v2909
  %v2911 = vpop.xlane.xlu0 %2910
  %v2912 = vadd.f32 %v2822, %v2911
  %v2913 = vld [vmem:[%s1229] sm:$0xff]
  %v2914 = vld [vmem:[%s1229 + $0x8] sm:$0xff]
  %v2915 = vld [vmem:[%s1229 + $0x10] sm:$0xff]
  %v2916 = vld [vmem:[%s1229 + $0x18] sm:$0xff]
  %v2917 = vld [vmem:[%s1229 + $0x20] sm:$0xff]
  %v2918 = vld [vmem:[%s1229 + $0x28] sm:$0xff]
  %2919 = vmatprep.subr.mxu0 %v2914
  %2920 = vmatpush1.msra.mxu0 %v2913
  %2921 = vmatprep.subr.mxu0 %v2916
  %2922 = vmatpush1.msra.mxu0 %v2915
  %2923 = vmatprep.subr.mxu0 %v2918
  %2924 = vmatpush1.msra.mxu0 %v2917
  %2925 = vmatprep.subr.mxu0 0.0
  %2926 = vmatpush1.msra.mxu0 0.0
  %2927 = vmatprep.subr.mxu0 0.0
  %2928 = vmatpush1.msra.mxu0 0.0
  %2929 = vmatprep.subr.mxu0 0.0
  %2930 = vmatpush1.msra.mxu0 0.0
  %2931 = vmatprep.subr.mxu0 0.0
  %2932 = vmatpush1.msra.mxu0 0.0
  %2933 = vmatprep.subr.mxu0 0.0
  %2934 = vmatpush1.msra.mxu0 0.0
  %2935 = vmatprep.subr.mxu0 0.0
  %2936 = vmatpush1.msra.mxu0 0.0
  %2937 = vmatprep.subr.mxu0 0.0
  %2938 = vmatpush1.msra.mxu0 0.0
  %2939 = vmatprep.subr.mxu0 0.0
  %2940 = vmatpush1.msra.mxu0 0.0
  %2941 = vmatprep.subr.mxu0 0.0
  %2942 = vmatpush1.msra.mxu0 0.0
  %2943 = vmatprep.subr.mxu0 0.0
  %2944 = vmatpush1.msra.mxu0 0.0
  %2945 = vmatprep.subr.mxu0 0.0
  %2946 = vmatpush1.msra.mxu0 0.0
  %2947 = vmatprep.subr.mxu0 0.0
  %2948 = vmatpush1.msra.mxu0 0.0
  %2949 = vmatprep.subr.mxu0 0.0
  %2950 = vmatpush1.msra.mxu0 0.0
  %2951 = vmatprep.subr.mxu0 0.0
  %2952 = vmatpush1.msra.mxu0 0.0
  %2953 = vmatprep.subr.mxu0 0.0
  %2954 = vmatpush1.msra.mxu0 0.0
  %2955 = vmatprep.subr.mxu0 0.0
  %2956 = vmatpush1.msra.mxu0 0.0
  %2957 = vmatprep.subr.mxu0 0.0
  %2958 = vmatpush1.msra.mxu0 0.0
  %2959 = vmatprep.subr.mxu0 0.0
  %2960 = vmatpush1.msra.mxu0 0.0
  %2961 = vmatprep.subr.mxu0 0.0
  %2962 = vmatpush1.msra.mxu0 0.0
  %2963 = vmatprep.subr.mxu0 0.0
  %2964 = vmatpush1.msra.mxu0 0.0
  %2965 = vmatprep.subr.mxu0 0.0
  %2966 = vmatpush1.msra.mxu0 0.0
  %2967 = vmatprep.subr.mxu0 0.0
  %2968 = vmatpush1.msra.mxu0 0.0
  %2969 = vmatprep.subr.mxu0 0.0
  %2970 = vmatpush1.msra.mxu0 0.0
  %2971 = vmatprep.subr.mxu0 0.0
  %2972 = vmatpush1.msra.mxu0 0.0
  %2973 = vmatprep.subr.mxu0 0.0
  %2974 = vmatpush1.msra.mxu0 0.0
  %2975 = vmatprep.subr.mxu0 0.0
  %2976 = vmatpush1.msra.mxu0 0.0
  %2977 = vmatprep.subr.mxu0 0.0
  %2978 = vmatpush1.msra.mxu0 0.0
  %2979 = vmatprep.subr.mxu0 0.0
  %2980 = vmatpush1.msra.mxu0 0.0
  %2981 = vmatprep.subr.mxu0 0.0
  %2982 = vmatpush1.msra.mxu0 0.0
  %2983 = vmatprep.mubr.f32.mxu0 0.0
  %2984 = vmatmul.mubr.f32.gmra.mrb[0].mxu0 %v1929
  %v2985 = vpop.f32.mrb[0].mxu0
  %v2986 = vadd.f32 0.0, %v2985
  %v2987 = vpop.f32.mrb[0].mxu0
  %v2988 = vadd.f32 0.0, %v2987
  %2989 = vdwg.mxu0
  %s2990 = scalar_lea.vmem %s7, 192
  %2991 = vst [vmem:[%s2990] sm:$0xff] %v2986
  %2992 = vst [vmem:[%s2990 + $0x8] sm:$0xff] %v2988
  %v2993 = vadd.f32 %v2986, %v2988
  %2994 = vadd.xlane.f32.xlu0 %v2993
  %v2995 = vpop.xlane.xlu0 %2994
  %v2996 = vadd.f32 %v2906, %v2995
  %v2997 = vmul.f32 %v2986, %v2986
  %v2998 = vmul.f32 %v2988, %v2988
  %v2999 = vadd.f32 %v2997, %v2998
  %3000 = vadd.xlane.f32.xlu0 %v2999
  %v3001 = vpop.xlane.xlu0 %3000
  %v3002 = vadd.f32 %v2912, %v3001
  %v3003 = vld [vmem:[%s1330] sm:$0xff]
  %v3004 = vld [vmem:[%s1330 + $0x8] sm:$0xff]
  %v3005 = vld [vmem:[%s1330 + $0x10] sm:$0xff]
  %v3006 = vld [vmem:[%s1330 + $0x18] sm:$0xff]
  %v3007 = vld [vmem:[%s1330 + $0x20] sm:$0xff]
  %v3008 = vld [vmem:[%s1330 + $0x28] sm:$0xff]
  %3009 = vmatprep.subr.mxu0 %v3004
  %3010 = vmatpush1.msra.mxu0 %v3003
  %3011 = vmatprep.subr.mxu0 %v3006
  %3012 = vmatpush1.msra.mxu0 %v3005
  %3013 = vmatprep.subr.mxu0 %v3008
  %3014 = vmatpush1.msra.mxu0 %v3007
  %3015 = vmatprep.subr.mxu0 0.0
  %3016 = vmatpush1.msra.mxu0 0.0
  %3017 = vmatprep.subr.mxu0 0.0
  %3018 = vmatpush1.msra.mxu0 0.0
  %3019 = vmatprep.subr.mxu0 0.0
  %3020 = vmatpush1.msra.mxu0 0.0
  %3021 = vmatprep.subr.mxu0 0.0
  %3022 = vmatpush1.msra.mxu0 0.0
  %3023 = vmatprep.subr.mxu0 0.0
  %3024 = vmatpush1.msra.mxu0 0.0
  %3025 = vmatprep.subr.mxu0 0.0
  %3026 = vmatpush1.msra.mxu0 0.0
  %3027 = vmatprep.subr.mxu0 0.0
  %3028 = vmatpush1.msra.mxu0 0.0
  %3029 = vmatprep.subr.mxu0 0.0
  %3030 = vmatpush1.msra.mxu0 0.0
  %3031 = vmatprep.subr.mxu0 0.0
  %3032 = vmatpush1.msra.mxu0 0.0
  %3033 = vmatprep.subr.mxu0 0.0
  %3034 = vmatpush1.msra.mxu0 0.0
  %3035 = vmatprep.subr.mxu0 0.0
  %3036 = vmatpush1.msra.mxu0 0.0
  %3037 = vmatprep.subr.mxu0 0.0
  %3038 = vmatpush1.msra.mxu0 0.0
  %3039 = vmatprep.subr.mxu0 0.0
  %3040 = vmatpush1.msra.mxu0 0.0
  %3041 = vmatprep.subr.mxu0 0.0
  %3042 = vmatpush1.msra.mxu0 0.0
  %3043 = vmatprep.subr.mxu0 0.0
  %3044 = vmatpush1.msra.mxu0 0.0
  %3045 = vmatprep.subr.mxu0 0.0
  %3046 = vmatpush1.msra.mxu0 0.0
  %3047 = vmatprep.subr.mxu0 0.0
  %3048 = vmatpush1.msra.mxu0 0.0
  %3049 = vmatprep.subr.mxu0 0.0
  %3050 = vmatpush1.msra.mxu0 0.0
  %3051 = vmatprep.subr.mxu0 0.0
  %3052 = vmatpush1.msra.mxu0 0.0
  %3053 = vmatprep.subr.mxu0 0.0
  %3054 = vmatpush1.msra.mxu0 0.0
  %3055 = vmatprep.subr.mxu0 0.0
  %3056 = vmatpush1.msra.mxu0 0.0
  %3057 = vmatprep.subr.mxu0 0.0
  %3058 = vmatpush1.msra.mxu0 0.0
  %3059 = vmatprep.subr.mxu0 0.0
  %3060 = vmatpush1.msra.mxu0 0.0
  %3061 = vmatprep.subr.mxu0 0.0
  %3062 = vmatpush1.msra.mxu0 0.0
  %3063 = vmatprep.subr.mxu0 0.0
  %3064 = vmatpush1.msra.mxu0 0.0
  %3065 = vmatprep.subr.mxu0 0.0
  %3066 = vmatpush1.msra.mxu0 0.0
  %3067 = vmatprep.subr.mxu0 0.0
  %3068 = vmatpush1.msra.mxu0 0.0
  %3069 = vmatprep.subr.mxu0 0.0
  %3070 = vmatpush1.msra.mxu0 0.0
  %3071 = vmatprep.subr.mxu0 0.0
  %3072 = vmatpush1.msra.mxu0 0.0
  %3073 = vmatprep.mubr.f32.mxu0 0.0
  %3074 = vmatmul.mubr.f32.gmra.mrb[0].mxu0 %v1929
  %v3075 = vpop.f32.mrb[0].mxu0
  %v3076 = vadd.f32 0.0, %v3075
  %v3077 = vpop.f32.mrb[0].mxu0
  %v3078 = vadd.f32 0.0, %v3077
  %3079 = vdwg.mxu0
  %s3080 = scalar_lea.vmem %s7, 208
  %3081 = vst [vmem:[%s3080] sm:$0xff] %v3076
  %3082 = vst [vmem:[%s3080 + $0x8] sm:$0xff] %v3078
  %v3083 = vadd.f32 %v3076, %v3078
  %3084 = vadd.xlane.f32.xlu0 %v3083
  %v3085 = vpop.xlane.xlu0 %3084
  %v3086 = vadd.f32 %v2996, %v3085
  %v3087 = vmul.f32 %v3076, %v3076
  %v3088 = vmul.f32 %v3078, %v3078
  %v3089 = vadd.f32 %v3087, %v3088
  %3090 = vadd.xlane.f32.xlu0 %v3089
  %v3091 = vpop.xlane.xlu0 %3090
  %v3092 = vadd.f32 %v3002, %v3091
  %v3093 = vld [vmem:[%s1431] sm:$0xff]
  %v3094 = vld [vmem:[%s1431 + $0x8] sm:$0xff]
  %v3095 = vld [vmem:[%s1431 + $0x10] sm:$0xff]
  %v3096 = vld [vmem:[%s1431 + $0x18] sm:$0xff]
  %v3097 = vld [vmem:[%s1431 + $0x20] sm:$0xff]
  %v3098 = vld [vmem:[%s1431 + $0x28] sm:$0xff]
  %3099 = vmatprep.subr.mxu0 %v3094
  %3100 = vmatpush1.msra.mxu0 %v3093
  %3101 = vmatprep.subr.mxu0 %v3096
  %3102 = vmatpush1.msra.mxu0 %v3095
  %3103 = vmatprep.subr.mxu0 %v3098
  %3104 = vmatpush1.msra.mxu0 %v3097
  %3105 = vmatprep.subr.mxu0 0.0
  %3106 = vmatpush1.msra.mxu0 0.0
  %3107 = vmatprep.subr.mxu0 0.0
  %3108 = vmatpush1.msra.mxu0 0.0
  %3109 = vmatprep.subr.mxu0 0.0
  %3110 = vmatpush1.msra.mxu0 0.0
  %3111 = vmatprep.subr.mxu0 0.0
  %3112 = vmatpush1.msra.mxu0 0.0
  %3113 = vmatprep.subr.mxu0 0.0
  %3114 = vmatpush1.msra.mxu0 0.0
  %3115 = vmatprep.subr.mxu0 0.0
  %3116 = vmatpush1.msra.mxu0 0.0
  %3117 = vmatprep.subr.mxu0 0.0
  %3118 = vmatpush1.msra.mxu0 0.0
  %3119 = vmatprep.subr.mxu0 0.0
  %3120 = vmatpush1.msra.mxu0 0.0
  %3121 = vmatprep.subr.mxu0 0.0
  %3122 = vmatpush1.msra.mxu0 0.0
  %3123 = vmatprep.subr.mxu0 0.0
  %3124 = vmatpush1.msra.mxu0 0.0
  %3125 = vmatprep.subr.mxu0 0.0
  %3126 = vmatpush1.msra.mxu0 0.0
  %3127 = vmatprep.subr.mxu0 0.0
  %3128 = vmatpush1.msra.mxu0 0.0
  %3129 = vmatprep.subr.mxu0 0.0
  %3130 = vmatpush1.msra.mxu0 0.0
  %3131 = vmatprep.subr.mxu0 0.0
  %3132 = vmatpush1.msra.mxu0 0.0
  %3133 = vmatprep.subr.mxu0 0.0
  %3134 = vmatpush1.msra.mxu0 0.0
  %3135 = vmatprep.subr.mxu0 0.0
  %3136 = vmatpush1.msra.mxu0 0.0
  %3137 = vmatprep.subr.mxu0 0.0
  %3138 = vmatpush1.msra.mxu0 0.0
  %3139 = vmatprep.subr.mxu0 0.0
  %3140 = vmatpush1.msra.mxu0 0.0
  %3141 = vmatprep.subr.mxu0 0.0
  %3142 = vmatpush1.msra.mxu0 0.0
  %3143 = vmatprep.subr.mxu0 0.0
  %3144 = vmatpush1.msra.mxu0 0.0
  %3145 = vmatprep.subr.mxu0 0.0
  %3146 = vmatpush1.msra.mxu0 0.0
  %3147 = vmatprep.subr.mxu0 0.0
  %3148 = vmatpush1.msra.mxu0 0.0
  %3149 = vmatprep.subr.mxu0 0.0
  %3150 = vmatpush1.msra.mxu0 0.0
  %3151 = vmatprep.subr.mxu0 0.0
  %3152 = vmatpush1.msra.mxu0 0.0
  %3153 = vmatprep.subr.mxu0 0.0
  %3154 = vmatpush1.msra.mxu0 0.0
  %3155 = vmatprep.subr.mxu0 0.0
  %3156 = vmatpush1.msra.mxu0 0.0
  %3157 = vmatprep.subr.mxu0 0.0
  %3158 = vmatpush1.msra.mxu0 0.0
  %3159 = vmatprep.subr.mxu0 0.0
  %3160 = vmatpush1.msra.mxu0 0.0
  %3161 = vmatprep.subr.mxu0 0.0
  %3162 = vmatpush1.msra.mxu0 0.0
  %3163 = vmatprep.mubr.f32.mxu0 0.0
  %3164 = vmatmul.mubr.f32.gmra.mrb[0].mxu0 %v1929
  %v3165 = vpop.f32.mrb[0].mxu0
  %v3166 = vadd.f32 0.0, %v3165
  %v3167 = vpop.f32.mrb[0].mxu0
  %v3168 = vadd.f32 0.0, %v3167
  %3169 = vdwg.mxu0
  %s3170 = scalar_lea.vmem %s7, 224
  %3171 = vst [vmem:[%s3170] sm:$0xff] %v3166
  %3172 = vst [vmem:[%s3170 + $0x8] sm:$0xff] %v3168
  %v3173 = vadd.f32 %v3166, %v3168
  %3174 = vadd.xlane.f32.xlu0 %v3173
  %v3175 = vpop.xlane.xlu0 %3174
  %v3176 = vadd.f32 %v3086, %v3175
  %v3177 = vmul.f32 %v3166, %v3166
  %v3178 = vmul.f32 %v3168, %v3168
  %v3179 = vadd.f32 %v3177, %v3178
  %3180 = vadd.xlane.f32.xlu0 %v3179
  %v3181 = vpop.xlane.xlu0 %3180
  %v3182 = vadd.f32 %v3092, %v3181
  %v3183 = vld [vmem:[%s1532] sm:$0xff]
  %v3184 = vld [vmem:[%s1532 + $0x8] sm:$0xff]
  %v3185 = vld [vmem:[%s1532 + $0x10] sm:$0xff]
  %v3186 = vld [vmem:[%s1532 + $0x18] sm:$0xff]
  %3187 = vmatprep.subr.mxu0 %v3184
  %3188 = vmatpush1.msra.mxu0 %v3183
  %3189 = vmatprep.subr.mxu0 %v3186
  %3190 = vmatpush1.msra.mxu0 %v3185
  %3191 = vmatprep.subr.mxu0 0.0
  %3192 = vmatpush1.msra.mxu0 0.0
  %3193 = vmatprep.subr.mxu0 0.0
  %3194 = vmatpush1.msra.mxu0 0.0
  %3195 = vmatprep.subr.mxu0 0.0
  %3196 = vmatpush1.msra.mxu0 0.0
  %3197 = vmatprep.subr.mxu0 0.0
  %3198 = vmatpush1.msra.mxu0 0.0
  %3199 = vmatprep.subr.mxu0 0.0
  %3200 = vmatpush1.msra.mxu0 0.0
  %3201 = vmatprep.subr.mxu0 0.0
  %3202 = vmatpush1.msra.mxu0 0.0
  %3203 = vmatprep.subr.mxu0 0.0
  %3204 = vmatpush1.msra.mxu0 0.0
  %3205 = vmatprep.subr.mxu0 0.0
  %3206 = vmatpush1.msra.mxu0 0.0
  %3207 = vmatprep.subr.mxu0 0.0
  %3208 = vmatpush1.msra.mxu0 0.0
  %3209 = vmatprep.subr.mxu0 0.0
  %3210 = vmatpush1.msra.mxu0 0.0
  %3211 = vmatprep.subr.mxu0 0.0
  %3212 = vmatpush1.msra.mxu0 0.0
  %3213 = vmatprep.subr.mxu0 0.0
  %3214 = vmatpush1.msra.mxu0 0.0
  %3215 = vmatprep.subr.mxu0 0.0
  %3216 = vmatpush1.msra.mxu0 0.0
  %3217 = vmatprep.subr.mxu0 0.0
  %3218 = vmatpush1.msra.mxu0 0.0
  %3219 = vmatprep.subr.mxu0 0.0
  %3220 = vmatpush1.msra.mxu0 0.0
  %3221 = vmatprep.subr.mxu0 0.0
  %3222 = vmatpush1.msra.mxu0 0.0
  %3223 = vmatprep.subr.mxu0 0.0
  %3224 = vmatpush1.msra.mxu0 0.0
  %3225 = vmatprep.subr.mxu0 0.0
  %3226 = vmatpush1.msra.mxu0 0.0
  %3227 = vmatprep.subr.mxu0 0.0
  %3228 = vmatpush1.msra.mxu0 0.0
  %3229 = vmatprep.subr.mxu0 0.0
  %3230 = vmatpush1.msra.mxu0 0.0
  %3231 = vmatprep.subr.mxu0 0.0
  %3232 = vmatpush1.msra.mxu0 0.0
  %3233 = vmatprep.subr.mxu0 0.0
  %3234 = vmatpush1.msra.mxu0 0.0
  %3235 = vmatprep.subr.mxu0 0.0
  %3236 = vmatpush1.msra.mxu0 0.0
  %3237 = vmatprep.subr.mxu0 0.0
  %3238 = vmatpush1.msra.mxu0 0.0
  %3239 = vmatprep.subr.mxu0 0.0
  %3240 = vmatpush1.msra.mxu0 0.0
  %3241 = vmatprep.subr.mxu0 0.0
  %3242 = vmatpush1.msra.mxu0 0.0
  %3243 = vmatprep.subr.mxu0 0.0
  %3244 = vmatpush1.msra.mxu0 0.0
  %3245 = vmatprep.subr.mxu0 0.0
  %3246 = vmatpush1.msra.mxu0 0.0
  %3247 = vmatprep.subr.mxu0 0.0
  %3248 = vmatpush1.msra.mxu0 0.0
  %3249 = vmatprep.subr.mxu0 0.0
  %3250 = vmatpush1.msra.mxu0 0.0
  %3251 = vmatprep.mubr.f32.mxu0 0.0
  %3252 = vmatmul.mubr.f32.gmra.mrb[0].mxu0 %v2469
  %v3253 = vpop.f32.mrb[0].mxu0
  %v3254 = vadd.f32 0.0, %v3253
  %v3255 = vpop.f32.mrb[0].mxu0
  %v3256 = vadd.f32 0.0, %v3255
  %3257 = vdwg.mxu0
  %s3258 = scalar_lea.vmem %s7, 240
  %3259 = vst [vmem:[%s3258] sm:$0xff] %v3254
  %3260 = vst [vmem:[%s3258 + $0x8] sm:$0xff] %v3256
  %v3261 = vadd.f32 %v3254, %v3256
  %3262 = vadd.xlane.f32.xlu0 %v3261
  %v3263 = vpop.xlane.xlu0 %3262
  %v3264 = vadd.f32 %v3176, %v3263
  %v3265 = vmul.f32 %v3254, %v3254
  %v3266 = vmul.f32 %v3256, %v3256
  %v3267 = vadd.f32 %v3265, %v3266
  %3268 = vadd.xlane.f32.xlu0 %v3267
  %v3269 = vpop.xlane.xlu0 %3268
  %v3270 = vadd.f32 %v3182, %v3269
  %v3271 = vmul.f32 %v3264, 0.00024414063
  %v3272 = vmul.f32 %v3270, 0.00024414063
  %v3273 = vmul.f32 %v3271, %v3271
  %v3274 = vsub.f32 %v3272, %v3273
  %v3275 = vmax.f32 %v3274, 0.0
  %v3276 = vld [vmem:[%s5] sm:$0xff]
  %v3277 = vadd.f32 %v3275, 1e-05
  %v3278 = vrsqrt.pop %v3277
  %v3279 = vmul.f32 %v3276, %v3278
  %v3280 = vld [vmem:[%s6] sm:$0xff]
  %v3281 = vmul.f32 %v3271, %v3279
  %v3282 = vsub.f32 %v3280, %v3281
  %v3283 = vld [vmem:[%s7] sm:$0xff]
  %v3284 = vld [vmem:[%s7 + $0x8] sm:$0xff]
  %v3285 = vld [vmem:[%s7 + $0x10] sm:$0xff]
  %v3286 = vld [vmem:[%s7 + $0x18] sm:$0xff]
  %v3287 = vld [vmem:[%s7 + $0x20] sm:$0xff]
  %v3288 = vld [vmem:[%s7 + $0x28] sm:$0xff]
  %v3289 = vld [vmem:[%s7 + $0x30] sm:$0xff]
  %v3290 = vld [vmem:[%s7 + $0x38] sm:$0xff]
  %v3291 = vld [vmem:[%s7 + $0x40] sm:$0xff]
  %v3292 = vld [vmem:[%s7 + $0x48] sm:$0xff]
  %v3293 = vld [vmem:[%s7 + $0x50] sm:$0xff]
  %v3294 = vld [vmem:[%s7 + $0x58] sm:$0xff]
  %v3295 = vld [vmem:[%s7 + $0x60] sm:$0xff]
  %v3296 = vld [vmem:[%s7 + $0x68] sm:$0xff]
  %v3297 = vld [vmem:[%s7 + $0x70] sm:$0xff]
  %v3298 = vld [vmem:[%s7 + $0x78] sm:$0xff]
  %v3299 = vld [vmem:[%s7 + $0x80] sm:$0xff]
  %v3300 = vld [vmem:[%s7 + $0x88] sm:$0xff]
  %v3301 = vld [vmem:[%s7 + $0x90] sm:$0xff]
  %v3302 = vld [vmem:[%s7 + $0x98] sm:$0xff]
  %v3303 = vld [vmem:[%s7 + $0xa0] sm:$0xff]
  %v3304 = vld [vmem:[%s7 + $0xa8] sm:$0xff]
  %v3305 = vld [vmem:[%s7 + $0xb0] sm:$0xff]
  %v3306 = vld [vmem:[%s7 + $0xb8] sm:$0xff]
  %v3307 = vld [vmem:[%s7 + $0xc0] sm:$0xff]
  %v3308 = vld [vmem:[%s7 + $0xc8] sm:$0xff]
  %v3309 = vld [vmem:[%s7 + $0xd0] sm:$0xff]
  %v3310 = vld [vmem:[%s7 + $0xd8] sm:$0xff]
  %v3311 = vld [vmem:[%s7 + $0xe0] sm:$0xff]
  %v3312 = vld [vmem:[%s7 + $0xe8] sm:$0xff]
  %v3313 = vld [vmem:[%s7 + $0xf0] sm:$0xff]
  %v3314 = vld [vmem:[%s7 + $0xf8] sm:$0xff]
  %3316 = vset.pattern.permute.xlu0 0
  %3317 = vperm.xlu0 %3316, %v3279
  %v3318 = vpop.permute.xlu0 %3317
  %v3320 = vmul.f32 %v3283, %v3318
  %v3321 = vmul.f32 %v3284, %v3318
  %v3322 = vmul.f32 %v3285, %v3318
  %v3323 = vmul.f32 %v3286, %v3318
  %v3324 = vmul.f32 %v3287, %v3318
  %v3325 = vmul.f32 %v3288, %v3318
  %v3326 = vmul.f32 %v3289, %v3318
  %v3327 = vmul.f32 %v3290, %v3318
  %v3328 = vmul.f32 %v3291, %v3318
  %v3329 = vmul.f32 %v3292, %v3318
  %v3330 = vmul.f32 %v3293, %v3318
  %v3331 = vmul.f32 %v3294, %v3318
  %v3332 = vmul.f32 %v3295, %v3318
  %v3333 = vmul.f32 %v3296, %v3318
  %v3334 = vmul.f32 %v3297, %v3318
  %v3335 = vmul.f32 %v3298, %v3318
  %v3336 = vmul.f32 %v3299, %v3318
  %v3337 = vmul.f32 %v3300, %v3318
  %v3338 = vmul.f32 %v3301, %v3318
  %v3339 = vmul.f32 %v3302, %v3318
  %v3340 = vmul.f32 %v3303, %v3318
  %v3341 = vmul.f32 %v3304, %v3318
  %v3342 = vmul.f32 %v3305, %v3318
  %v3343 = vmul.f32 %v3306, %v3318
  %v3344 = vmul.f32 %v3307, %v3318
  %v3345 = vmul.f32 %v3308, %v3318
  %v3346 = vmul.f32 %v3309, %v3318
  %v3347 = vmul.f32 %v3310, %v3318
  %v3348 = vmul.f32 %v3311, %v3318
  %v3349 = vmul.f32 %v3312, %v3318
  %v3350 = vmul.f32 %v3313, %v3318
  %v3351 = vmul.f32 %v3314, %v3318
  %3353 = vset.pattern.permute.xlu0 0
  %3354 = vperm.xlu0 %3353, %v3282
  %v3355 = vpop.permute.xlu0 %3354
  %v3357 = vadd.f32 %v3320, %v3355
  %v3358 = vadd.f32 %v3321, %v3355
  %v3359 = vadd.f32 %v3322, %v3355
  %v3360 = vadd.f32 %v3323, %v3355
  %v3361 = vadd.f32 %v3324, %v3355
  %v3362 = vadd.f32 %v3325, %v3355
  %v3363 = vadd.f32 %v3326, %v3355
  %v3364 = vadd.f32 %v3327, %v3355
  %v3365 = vadd.f32 %v3328, %v3355
  %v3366 = vadd.f32 %v3329, %v3355
  %v3367 = vadd.f32 %v3330, %v3355
  %v3368 = vadd.f32 %v3331, %v3355
  %v3369 = vadd.f32 %v3332, %v3355
  %v3370 = vadd.f32 %v3333, %v3355
  %v3371 = vadd.f32 %v3334, %v3355
  %v3372 = vadd.f32 %v3335, %v3355
  %v3373 = vadd.f32 %v3336, %v3355
  %v3374 = vadd.f32 %v3337, %v3355
  %v3375 = vadd.f32 %v3338, %v3355
  %v3376 = vadd.f32 %v3339, %v3355
  %v3377 = vadd.f32 %v3340, %v3355
  %v3378 = vadd.f32 %v3341, %v3355
  %v3379 = vadd.f32 %v3342, %v3355
  %v3380 = vadd.f32 %v3343, %v3355
  %v3381 = vadd.f32 %v3344, %v3355
  %v3382 = vadd.f32 %v3345, %v3355
  %v3383 = vadd.f32 %v3346, %v3355
  %v3384 = vadd.f32 %v3347, %v3355
  %v3385 = vadd.f32 %v3348, %v3355
  %v3386 = vadd.f32 %v3349, %v3355
  %v3387 = vadd.f32 %v3350, %v3355
  %v3388 = vadd.f32 %v3351, %v3355
  %v3389 = vmax.f32 %v3357, 0.0
  %v3390 = vmax.f32 %v3358, 0.0
  %v3391 = vmax.f32 %v3359, 0.0
  %v3392 = vmax.f32 %v3360, 0.0
  %v3393 = vmax.f32 %v3361, 0.0
  %v3394 = vmax.f32 %v3362, 0.0
  %v3395 = vmax.f32 %v3363, 0.0
  %v3396 = vmax.f32 %v3364, 0.0
  %v3397 = vmax.f32 %v3365, 0.0
  %v3398 = vmax.f32 %v3366, 0.0
  %v3399 = vmax.f32 %v3367, 0.0
  %v3400 = vmax.f32 %v3368, 0.0
  %v3401 = vmax.f32 %v3369, 0.0
  %v3402 = vmax.f32 %v3370, 0.0
  %v3403 = vmax.f32 %v3371, 0.0
  %v3404 = vmax.f32 %v3372, 0.0
  %v3405 = vmax.f32 %v3373, 0.0
  %v3406 = vmax.f32 %v3374, 0.0
  %v3407 = vmax.f32 %v3375, 0.0
  %v3408 = vmax.f32 %v3376, 0.0
  %v3409 = vmax.f32 %v3377, 0.0
  %v3410 = vmax.f32 %v3378, 0.0
  %v3411 = vmax.f32 %v3379, 0.0
  %v3412 = vmax.f32 %v3380, 0.0
  %v3413 = vmax.f32 %v3381, 0.0
  %v3414 = vmax.f32 %v3382, 0.0
  %v3415 = vmax.f32 %v3383, 0.0
  %v3416 = vmax.f32 %v3384, 0.0
  %v3417 = vmax.f32 %v3385, 0.0
  %v3418 = vmax.f32 %v3386, 0.0
  %v3419 = vmax.f32 %v3387, 0.0
  %v3420 = vmax.f32 %v3388, 0.0
  %3421 = vst [vmem:[%s7] sm:$0xff] %v3389
  %3422 = vst [vmem:[%s7 + $0x8] sm:$0xff] %v3390
  %3423 = vst [vmem:[%s7 + $0x10] sm:$0xff] %v3391
  %3424 = vst [vmem:[%s7 + $0x18] sm:$0xff] %v3392
  %3425 = vst [vmem:[%s7 + $0x20] sm:$0xff] %v3393
  %3426 = vst [vmem:[%s7 + $0x28] sm:$0xff] %v3394
  %3427 = vst [vmem:[%s7 + $0x30] sm:$0xff] %v3395
  %3428 = vst [vmem:[%s7 + $0x38] sm:$0xff] %v3396
  %3429 = vst [vmem:[%s7 + $0x40] sm:$0xff] %v3397
  %3430 = vst [vmem:[%s7 + $0x48] sm:$0xff] %v3398
  %3431 = vst [vmem:[%s7 + $0x50] sm:$0xff] %v3399
  %3432 = vst [vmem:[%s7 + $0x58] sm:$0xff] %v3400
  %3433 = vst [vmem:[%s7 + $0x60] sm:$0xff] %v3401
  %3434 = vst [vmem:[%s7 + $0x68] sm:$0xff] %v3402
  %3435 = vst [vmem:[%s7 + $0x70] sm:$0xff] %v3403
  %3436 = vst [vmem:[%s7 + $0x78] sm:$0xff] %v3404
  %3437 = vst [vmem:[%s7 + $0x80] sm:$0xff] %v3405
  %3438 = vst [vmem:[%s7 + $0x88] sm:$0xff] %v3406
  %3439 = vst [vmem:[%s7 + $0x90] sm:$0xff] %v3407
  %3440 = vst [vmem:[%s7 + $0x98] sm:$0xff] %v3408
  %3441 = vst [vmem:[%s7 + $0xa0] sm:$0xff] %v3409
  %3442 = vst [vmem:[%s7 + $0xa8] sm:$0xff] %v3410
  %3443 = vst [vmem:[%s7 + $0xb0] sm:$0xff] %v3411
  %3444 = vst [vmem:[%s7 + $0xb8] sm:$0xff] %v3412
  %3445 = vst [vmem:[%s7 + $0xc0] sm:$0xff] %v3413
  %3446 = vst [vmem:[%s7 + $0xc8] sm:$0xff] %v3414
  %3447 = vst [vmem:[%s7 + $0xd0] sm:$0xff] %v3415
  %3448 = vst [vmem:[%s7 + $0xd8] sm:$0xff] %v3416
  %3449 = vst [vmem:[%s7 + $0xe0] sm:$0xff] %v3417
  %3450 = vst [vmem:[%s7 + $0xe8] sm:$0xff] %v3418
  %3451 = vst [vmem:[%s7 + $0xf0] sm:$0xff] %v3419
  %3452 = vst [vmem:[%s7 + $0xf8] sm:$0xff] %v3420
  // Predicated region
  $region30: #{r2plus1d_forward.1} parent=0 // pred_check
    _
  $region31: #{r2plus1d_forward.1} parent=0 // pred_check_branch
    %3454 = sbr.rel (0) target = $region33
  $region32: #{r2plus1d_forward.1} parent=0 // pred_region
    _
  $region33: #{r2plus1d_forward.1} parent=0 // pred_fallthru
    _
  // Predicated region
  $region34: #{r2plus1d_forward.1} parent=0 // pred_check
    _
  $region35: #{r2plus1d_forward.1} parent=0 // pred_check_branch
    %3456 = sbr.rel (0) target = $region37
  $region36: #{r2plus1d_forward.1} parent=0 // pred_region
    _
  $region37: #{r2plus1d_forward.1} parent=0 // pred_fallthru
    _

</llo_original>
